<compile_context>
chip_gen: v6e
topology: v6e:2x2x1
jax: 0.10.0
libtpu: 0.0.40
codegen_flags: <defaults>
</compile_context>

<pallas_src>
import math

import jax
import jax.numpy as jnp
from jax.experimental import pallas as pl
from jax.experimental.pallas import tpu as pltpu


def _lstm_token_embedder_kernel(word_ref, char_ref, wih_ref, whh_ref, b_ref,
                                wpw_ref, wpf_ref, wpb_ref, bp_ref,
                                out_ref, pre_ref):
    """One token tile: bidirectional char-LSTM final states + projection.

    Hidden-major layout: tokens live on the 128-lane axis, hidden/gate dims
    on sublanes.
    """
    T, tN, _ = char_ref.shape
    H8 = wih_ref.shape[0]              # 8H  (4 gates x 2 directions)
    H = H8 // 8
    H2, H4 = 2 * H, 4 * H

    # "x @ W.T" with PyTorch (out, in) weights, no transposes materialized.
    dn_tt = (((1,), (1,)), ((), ()))   # contract dim1(A) with dim1(B)
    dn_mm = (((1,), (0,)), ((), ()))   # plain matmul

    wih = wih_ref[...]                 # (8H, Cd) bf16  [W_ih_fwd ; W_ih_bwd]
    whh = whh_ref[...]                 # (8H, 2H) bf16  block-diag [Whh_f 0; 0 Whh_b]
    b = b_ref[...]                     # (8H, 1)  f32   combined b_ih + b_hh

    # ---- Hoisted input->hidden projection (outside the recurrence). ----
    # pre_ref[t, :4H]  = W_ih_f @ x_t^T          (forward, time t)
    # pre_ref[t, 4H:]  = W_ih_b @ x_{T-1-t}^T    (backward, already reversed)
    for t in range(T):                 # static, tiny trip count
        p = jax.lax.dot_general(wih, char_ref[t], dn_tt,
                                preferred_element_type=jnp.float32)  # (8H, tN)
        pre_ref[t, 0:H4, :] = p[0:H4]
        pre_ref[T - 1 - t, H4:H8, :] = p[H4:H8]

    # ---- Fused bidirectional recurrence: one MXU call per step drives both
    # directions' dependency chains. ----
    h0 = jnp.zeros((H2, tN), jnp.float32)      # [h_fwd ; h_bwd]
    c0 = jnp.zeros((H2, tN), jnp.float32)

    def step(t, carry):
        h, c = carry
        g = (pre_ref[t]
             + jax.lax.dot_general(whh, h.astype(whh.dtype), dn_mm,
                                   preferred_element_type=jnp.float32)
             + b)                                                   # (8H, tN)
        i_f = jax.nn.sigmoid(g[0 * H:1 * H])
        f_f = jax.nn.sigmoid(g[1 * H:2 * H])
        g_f = jnp.tanh(g[2 * H:3 * H])
        o_f = jax.nn.sigmoid(g[3 * H:4 * H])
        i_b = jax.nn.sigmoid(g[4 * H:5 * H])
        f_b = jax.nn.sigmoid(g[5 * H:6 * H])
        g_b = jnp.tanh(g[6 * H:7 * H])
        o_b = jax.nn.sigmoid(g[7 * H:8 * H])
        c_f = f_f * c[0:H] + i_f * g_f
        c_b = f_b * c[H:H2] + i_b * g_b
        h_f = o_f * jnp.tanh(c_f)
        h_b = o_b * jnp.tanh(c_b)
        return (jnp.concatenate([h_f, h_b], axis=0),
                jnp.concatenate([c_f, c_b], axis=0))

    h_fin, _ = jax.lax.fori_loop(0, T, step, (h0, c0), unroll=True)

    # ---- Projection: three partial matmuls (no lane-axis concat), summed. ----
    mxu = wpw_ref.dtype
    out = (jax.lax.dot_general(wpw_ref[...], word_ref[...], dn_tt,
                               preferred_element_type=jnp.float32)
           + jax.lax.dot_general(wpf_ref[...], h_fin[0:H].astype(mxu), dn_mm,
                                 preferred_element_type=jnp.float32)
           + jax.lax.dot_general(wpb_ref[...], h_fin[H:H2].astype(mxu), dn_mm,
                                 preferred_element_type=jnp.float32)
           + bp_ref[...])                                           # (Dout, tN)
    out_ref[...] = out.astype(out_ref.dtype)


def lstm_token_embedder(word_inp, chars_inp, word_table, char_table,
                        w_ih_f, w_hh_f, b_ih_f, b_hh_f,
                        w_ih_b, w_hh_b, b_ih_b, b_hh_b,
                        w_proj, b_proj, *, token_tile=128,
                        mxu_dtype=jnp.bfloat16):
    """word_inp: (B,S) int32; chars_inp: (B,S,T) int32; tables: (V, dim);
    LSTM weights in PyTorch layout (4H, in)/(4H, H), gate order (i,f,g,o);
    projection weight (Dout, Dw+2H)."""
    B, S = word_inp.shape
    N = B * S
    T = chars_inp.shape[-1]
    Dw = word_table.shape[1]
    Cd = char_table.shape[1]
    H = w_hh_f.shape[1]
    Dout, Demb = w_proj.shape
    assert Demb == Dw + 2 * H
    assert token_tile % 128 == 0, "keep the token tile lane-dense"

    # Pad token count up to a tile multiple (padded rows are sliced off).
    Np = ((N + token_tile - 1) // token_tile) * token_tile
    pad = Np - N

    # Plain-JAX glue: embedding gathers. Chars gathered with transposed
    # indices so the time-major (T, N, Cd) layout comes out of the gather.
    word_emb = word_table[word_inp.reshape(N)].astype(mxu_dtype)            # (N, Dw)
    char_emb_t = char_table[chars_inp.reshape(N, T).T].astype(mxu_dtype)    # (T, N, Cd)
    if pad:
        word_emb = jnp.pad(word_emb, ((0, pad), (0, 0)))
        char_emb_t = jnp.pad(char_emb_t, ((0, 0), (0, pad), (0, 0)))

    # Fused weights: stacked input projection (one matmul feeds both
    # directions) and block-diagonal recurrent weight (one matmul per step).
    w_ih_cat = jnp.concatenate([w_ih_f, w_ih_b], axis=0).astype(mxu_dtype)  # (8H, Cd)
    zeros = jnp.zeros((4 * H, H), jnp.float32)
    w_hh_blk = jnp.concatenate(
        [jnp.concatenate([w_hh_f, zeros], axis=1),
         jnp.concatenate([zeros, w_hh_b], axis=1)],
        axis=0).astype(mxu_dtype)                                           # (8H, 2H)
    b_cat = jnp.concatenate([b_ih_f + b_hh_f, b_ih_b + b_hh_b]
                            ).reshape(8 * H, 1).astype(jnp.float32)

    # Projection weight split into [word | h_fwd | h_bwd] column groups so the
    # kernel never does a lane-axis feature concat.
    wp_w = w_proj[:, :Dw].astype(mxu_dtype)
    wp_f = w_proj[:, Dw:Dw + H].astype(mxu_dtype)
    wp_b = w_proj[:, Dw + H:].astype(mxu_dtype)
    b_p = b_proj.reshape(Dout, 1).astype(jnp.float32)

    args = (word_emb, char_emb_t, w_ih_cat, w_hh_blk, b_cat,
            wp_w, wp_f, wp_b, b_p)

    flops = Np * (2 * T * Cd * 8 * H + 2 * T * 2 * H * 8 * H
                  + 2 * Demb * Dout)
    transcendentals = Np * T * 10 * H
    bytes_accessed = (sum(int(a.size) * a.dtype.itemsize for a in args)
                      + Np * Dout * 4)

    out = pl.pallas_call(
        _lstm_token_embedder_kernel,
        out_shape=jax.ShapeDtypeStruct((Dout, Np), jnp.float32),
        grid_spec=pltpu.PrefetchScalarGridSpec(
            num_scalar_prefetch=0,
            grid=(Np // token_tile,),
            in_specs=[
                pl.BlockSpec((token_tile, Dw), lambda i: (i, 0)),
                pl.BlockSpec((T, token_tile, Cd), lambda i: (0, i, 0)),
                # Weights/biases (tiny at this size; if scaled up, consider
                # pipeline_mode=pl.Buffered(1) or a higher vmem_limit_bytes).
                pl.BlockSpec((8 * H, Cd), lambda i: (0, 0)),
                pl.BlockSpec((8 * H, 2 * H), lambda i: (0, 0)),
                pl.BlockSpec((8 * H, 1), lambda i: (0, 0)),
                pl.BlockSpec((Dout, Dw), lambda i: (0, 0)),
                pl.BlockSpec((Dout, H), lambda i: (0, 0)),
                pl.BlockSpec((Dout, H), lambda i: (0, 0)),
                pl.BlockSpec((Dout, 1), lambda i: (0, 0)),
            ],
            out_specs=pl.BlockSpec((Dout, token_tile), lambda i: (0, i)),
            scratch_shapes=[
                pltpu.VMEM((T, 8 * H, token_tile), jnp.float32),
            ],
        ),
        compiler_params=pltpu.CompilerParams(
            dimension_semantics=("parallel",)),
        cost_estimate=pl.CostEstimate(
            flops=flops, transcendentals=transcendentals,
            bytes_accessed=bytes_accessed),
    )(*args)

    # Lane-dense (Dout, N) kernel output -> (B, S, Dout).
    return out[:, :N].T.reshape(B, S, Dout)


def _reference_forward(word_inp, chars_inp, word_table, char_table,
                       w_ih_f, w_hh_f, b_ih_f, b_hh_f,
                       w_ih_b, w_hh_b, b_ih_b, b_hh_b,
                       w_proj, b_proj):
    B, S = word_inp.shape
    N = B * S
    hp = jax.lax.Precision.HIGHEST
    H = w_hh_f.shape[1]

    word_emb = word_table[word_inp.reshape(N)]
    char_emb = char_table[chars_inp.reshape(N, -1)]          # (N, T, Cd)
    xs = jnp.transpose(char_emb, (1, 0, 2))                  # (T, N, Cd)

    def run(seq, w_ih, w_hh, b_ih, b_hh):
        def step(carry, x_t):
            h, c = carry
            gates = (jnp.dot(x_t, w_ih.T, precision=hp)
                     + jnp.dot(h, w_hh.T, precision=hp) + b_ih + b_hh)
            i, f, g, o = jnp.split(gates, 4, axis=-1)
            c = jax.nn.sigmoid(f) * c + jax.nn.sigmoid(i) * jnp.tanh(g)
            h = jax.nn.sigmoid(o) * jnp.tanh(c)
            return (h, c), None
        init = (jnp.zeros((seq.shape[1], H), jnp.float32),
                jnp.zeros((seq.shape[1], H), jnp.float32))
        (h, _), _ = jax.lax.scan(step, init, seq)
        return h

    h_f = run(xs, w_ih_f, w_hh_f, b_ih_f, b_hh_f)
    h_b = run(xs[::-1], w_ih_b, w_hh_b, b_ih_b, b_hh_b)
    feats = jnp.concatenate([word_emb, h_f, h_b], axis=-1)
    out = jnp.dot(feats, w_proj.T, precision=hp) + b_proj
    return out.reshape(B, S, -1)


if __name__ == "__main__":
    # Small shapes consistent with the module: projection_dim=32, char_dim=16,
    # word n_d=16, batch=2, seq=8, max chars per token=7.
    B, S, T = 2, 8, 7
    Dw, Cd, Dout = 16, 16, 32
    H = Cd
    Demb = Dw + 2 * H
    word_vocab, char_vocab = 50, 30

    key = jax.random.PRNGKey(0)
    ks = jax.random.split(key, 16)

    word_inp = jax.random.randint(ks[0], (B, S), 0, word_vocab, dtype=jnp.int32)
    chars_inp = jax.random.randint(ks[1], (B, S, T), 0, char_vocab, dtype=jnp.int32)
    word_table = 0.1 * jax.random.normal(ks[2], (word_vocab, Dw), jnp.float32)
    char_table = 0.1 * jax.random.normal(ks[3], (char_vocab, Cd), jnp.float32)

    stdv = 1.0 / math.sqrt(H)
    u = lambda k, shape: jax.random.uniform(k, shape, jnp.float32, -stdv, stdv)
    w_ih_f = u(ks[4], (4 * H, Cd)); w_hh_f = u(ks[5], (4 * H, H))
    b_ih_f = u(ks[6], (4 * H,));    b_hh_f = u(ks[7], (4 * H,))
    w_ih_b = u(ks[8], (4 * H, Cd)); w_hh_b = u(ks[9], (4 * H, H))
    b_ih_b = u(ks[10], (4 * H,));   b_hh_b = u(ks[11], (4 * H,))

    stdp = 1.0 / math.sqrt(Demb)
    w_proj = jax.random.uniform(ks[12], (Dout, Demb), jnp.float32, -stdp, stdp)
    b_proj = jax.random.uniform(ks[13], (Dout,), jnp.float32, -stdp, stdp)

    out = lstm_token_embedder(word_inp, chars_inp, word_table, char_table,
                              w_ih_f, w_hh_f, b_ih_f, b_hh_f,
                              w_ih_b, w_hh_b, b_ih_b, b_hh_b,
                              w_proj, b_proj, token_tile=128)
    out = jax.block_until_ready(out)
    assert out.shape == (B, S, Dout)

    ref = _reference_forward(word_inp, chars_inp, word_table, char_table,
                             w_ih_f, w_hh_f, b_ih_f, b_hh_f,
                             w_ih_b, w_hh_b, b_ih_b, b_hh_b,
                             w_proj, b_proj)
    # bf16 MXU operands (f32 accumulation / gate math) -> loosened tolerance.
    max_err = float(jnp.max(jnp.abs(out - ref)))
    assert jnp.allclose(out, ref, rtol=2e-2, atol=2e-2), max_err

    print("KERNEL_OK")
</pallas_src>

<mosaic_0001>
module attributes {stable_mosaic.version = 11 : i64} {
  func.func @_lstm_token_embedder_kernel(%arg0: i32, %arg1: memref<128x16xbf16, #tpu.memory_space<vmem>>, %arg2: memref<7x128x16xbf16, #tpu.memory_space<vmem>>, %arg3: memref<128x16xbf16, #tpu.memory_space<vmem>>, %arg4: memref<128x32xbf16, #tpu.memory_space<vmem>>, %arg5: memref<128x1xf32, #tpu.memory_space<vmem>>, %arg6: memref<32x16xbf16, #tpu.memory_space<vmem>>, %arg7: memref<32x16xbf16, #tpu.memory_space<vmem>>, %arg8: memref<32x16xbf16, #tpu.memory_space<vmem>>, %arg9: memref<32x1xf32, #tpu.memory_space<vmem>>, %arg10: memref<32x128xf32, #tpu.memory_space<vmem>>, %arg11: memref<7x128x128xf32, #tpu.memory_space<vmem>>) attributes {dimension_semantics = [#tpu.dimension_semantics<parallel>], iteration_bounds = array<i64: 1>, scalar_prefetch = 0 : i64, scratch_operands = 1 : i64, tpu.core_type = #tpu.core_type<tc>, window_params = [{transform_indices = @transform_0, window_bounds = array<i64: 128, 16>}, {transform_indices = @transform_1, window_bounds = array<i64: 7, 128, 16>}, {pipeline_mode = #tpu.pipeline_mode<synchronous>, transform_indices = @transform_2, window_bounds = array<i64: 128, 16>}, {pipeline_mode = #tpu.pipeline_mode<synchronous>, transform_indices = @transform_3, window_bounds = array<i64: 128, 32>}, {pipeline_mode = #tpu.pipeline_mode<synchronous>, transform_indices = @transform_4, window_bounds = array<i64: 128, 1>}, {pipeline_mode = #tpu.pipeline_mode<synchronous>, transform_indices = @transform_5, window_bounds = array<i64: 32, 16>}, {pipeline_mode = #tpu.pipeline_mode<synchronous>, transform_indices = @transform_6, window_bounds = array<i64: 32, 16>}, {pipeline_mode = #tpu.pipeline_mode<synchronous>, transform_indices = @transform_7, window_bounds = array<i64: 32, 16>}, {pipeline_mode = #tpu.pipeline_mode<synchronous>, transform_indices = @transform_8, window_bounds = array<i64: 32, 1>}, {transform_indices = @transform_9, window_bounds = array<i64: 32, 128>}]} {
    %c0 = arith.constant 0 : index
    %c0_0 = arith.constant 0 : index
    %0 = vector.load %arg3[%c0, %c0_0] : memref<128x16xbf16, #tpu.memory_space<vmem>>, vector<128x16xbf16>
    %c0_1 = arith.constant 0 : index
    %c0_2 = arith.constant 0 : index
    %1 = vector.load %arg4[%c0_1, %c0_2] : memref<128x32xbf16, #tpu.memory_space<vmem>>, vector<128x32xbf16>
    %c0_3 = arith.constant 0 : index
    %c0_4 = arith.constant 0 : index
    %2 = vector.load %arg5[%c0_3, %c0_4] : memref<128x1xf32, #tpu.memory_space<vmem>>, vector<128x1xf32>
    %c0_5 = arith.constant 0 : index
    %c0_6 = arith.constant 0 : index
    %c0_7 = arith.constant 0 : index
    %3 = vector.load %arg2[%c0_5, %c0_6, %c0_7] : memref<7x128x16xbf16, #tpu.memory_space<vmem>>, vector<1x128x16xbf16>
    %4 = vector.shape_cast %3 : vector<1x128x16xbf16> to vector<128x16xbf16>
    %cst = arith.constant dense<0.000000e+00> : vector<128x128xf32>
    %5 = tpu.matmul %0, %4, %cst {dimension_numbers = #tpu.dot_dimension_numbers<[1], [1], [0], [0], [0, 0, 1, 0], [], []>} : vector<128x16xbf16>, vector<128x16xbf16>, vector<128x128xf32> -> vector<128x128xf32>
    %6 = vector.extract_strided_slice %5 {offsets = [0, 0], sizes = [64, 128], strides = [1, 1]} : vector<128x128xf32> to vector<64x128xf32>
    %c0_8 = arith.constant 0 : index
    %c0_9 = arith.constant 0 : index
    %c0_10 = arith.constant 0 : index
    %7 = vector.load %arg11[%c0_8, %c0_9, %c0_10] : memref<7x128x128xf32, #tpu.memory_space<vmem>>, vector<1x64x128xf32>
    %8 = vector.shape_cast %7 : vector<1x64x128xf32> to vector<64x128xf32>
    %9 = vector.shape_cast %6 : vector<64x128xf32> to vector<1x64x128xf32>
    tpu.vector_store %arg11[%c0_8, %c0_9, %c0_10], %9 {strides = array<i32>} : memref<7x128x128xf32, #tpu.memory_space<vmem>>, vector<1x64x128xf32>,
    %10 = vector.extract_strided_slice %5 {offsets = [64, 0], sizes = [64, 128], strides = [1, 1]} : vector<128x128xf32> to vector<64x128xf32>
    %c6 = arith.constant 6 : index
    %c64 = arith.constant 64 : index
    %c0_11 = arith.constant 0 : index
    %11 = vector.load %arg11[%c6, %c64, %c0_11] : memref<7x128x128xf32, #tpu.memory_space<vmem>>, vector<1x64x128xf32>
    %12 = vector.shape_cast %11 : vector<1x64x128xf32> to vector<64x128xf32>
    %13 = vector.shape_cast %10 : vector<64x128xf32> to vector<1x64x128xf32>
    tpu.vector_store %arg11[%c6, %c64, %c0_11], %13 {strides = array<i32>} : memref<7x128x128xf32, #tpu.memory_space<vmem>>, vector<1x64x128xf32>,
    %c1 = arith.constant 1 : index
    %c0_12 = arith.constant 0 : index
    %c0_13 = arith.constant 0 : index
    %14 = vector.load %arg2[%c1, %c0_12, %c0_13] : memref<7x128x16xbf16, #tpu.memory_space<vmem>>, vector<1x128x16xbf16>
    %15 = vector.shape_cast %14 : vector<1x128x16xbf16> to vector<128x16xbf16>
    %cst_14 = arith.constant dense<0.000000e+00> : vector<128x128xf32>
    %16 = tpu.matmul %0, %15, %cst_14 {dimension_numbers = #tpu.dot_dimension_numbers<[1], [1], [0], [0], [0, 0, 1, 0], [], []>} : vector<128x16xbf16>, vector<128x16xbf16>, vector<128x128xf32> -> vector<128x128xf32>
    %17 = vector.extract_strided_slice %16 {offsets = [0, 0], sizes = [64, 128], strides = [1, 1]} : vector<128x128xf32> to vector<64x128xf32>
    %c1_15 = arith.constant 1 : index
    %c0_16 = arith.constant 0 : index
    %c0_17 = arith.constant 0 : index
    %18 = vector.load %arg11[%c1_15, %c0_16, %c0_17] : memref<7x128x128xf32, #tpu.memory_space<vmem>>, vector<1x64x128xf32>
    %19 = vector.shape_cast %18 : vector<1x64x128xf32> to vector<64x128xf32>
    %20 = vector.shape_cast %17 : vector<64x128xf32> to vector<1x64x128xf32>
    tpu.vector_store %arg11[%c1_15, %c0_16, %c0_17], %20 {strides = array<i32>} : memref<7x128x128xf32, #tpu.memory_space<vmem>>, vector<1x64x128xf32>,
    %21 = vector.extract_strided_slice %16 {offsets = [64, 0], sizes = [64, 128], strides = [1, 1]} : vector<128x128xf32> to vector<64x128xf32>
    %c5 = arith.constant 5 : index
    %c64_18 = arith.constant 64 : index
    %c0_19 = arith.constant 0 : index
    %22 = vector.load %arg11[%c5, %c64_18, %c0_19] : memref<7x128x128xf32, #tpu.memory_space<vmem>>, vector<1x64x128xf32>
    %23 = vector.shape_cast %22 : vector<1x64x128xf32> to vector<64x128xf32>
    %24 = vector.shape_cast %21 : vector<64x128xf32> to vector<1x64x128xf32>
    tpu.vector_store %arg11[%c5, %c64_18, %c0_19], %24 {strides = array<i32>} : memref<7x128x128xf32, #tpu.memory_space<vmem>>, vector<1x64x128xf32>,
    %c2 = arith.constant 2 : index
    %c0_20 = arith.constant 0 : index
    %c0_21 = arith.constant 0 : index
    %25 = vector.load %arg2[%c2, %c0_20, %c0_21] : memref<7x128x16xbf16, #tpu.memory_space<vmem>>, vector<1x128x16xbf16>
    %26 = vector.shape_cast %25 : vector<1x128x16xbf16> to vector<128x16xbf16>
    %cst_22 = arith.constant dense<0.000000e+00> : vector<128x128xf32>
    %27 = tpu.matmul %0, %26, %cst_22 {dimension_numbers = #tpu.dot_dimension_numbers<[1], [1], [0], [0], [0, 0, 1, 0], [], []>} : vector<128x16xbf16>, vector<128x16xbf16>, vector<128x128xf32> -> vector<128x128xf32>
    %28 = vector.extract_strided_slice %27 {offsets = [0, 0], sizes = [64, 128], strides = [1, 1]} : vector<128x128xf32> to vector<64x128xf32>
    %c2_23 = arith.constant 2 : index
    %c0_24 = arith.constant 0 : index
    %c0_25 = arith.constant 0 : index
    %29 = vector.load %arg11[%c2_23, %c0_24, %c0_25] : memref<7x128x128xf32, #tpu.memory_space<vmem>>, vector<1x64x128xf32>
    %30 = vector.shape_cast %29 : vector<1x64x128xf32> to vector<64x128xf32>
    %31 = vector.shape_cast %28 : vector<64x128xf32> to vector<1x64x128xf32>
    tpu.vector_store %arg11[%c2_23, %c0_24, %c0_25], %31 {strides = array<i32>} : memref<7x128x128xf32, #tpu.memory_space<vmem>>, vector<1x64x128xf32>,
    %32 = vector.extract_strided_slice %27 {offsets = [64, 0], sizes = [64, 128], strides = [1, 1]} : vector<128x128xf32> to vector<64x128xf32>
    %c4 = arith.constant 4 : index
    %c64_26 = arith.constant 64 : index
    %c0_27 = arith.constant 0 : index
    %33 = vector.load %arg11[%c4, %c64_26, %c0_27] : memref<7x128x128xf32, #tpu.memory_space<vmem>>, vector<1x64x128xf32>
    %34 = vector.shape_cast %33 : vector<1x64x128xf32> to vector<64x128xf32>
    %35 = vector.shape_cast %32 : vector<64x128xf32> to vector<1x64x128xf32>
    tpu.vector_store %arg11[%c4, %c64_26, %c0_27], %35 {strides = array<i32>} : memref<7x128x128xf32, #tpu.memory_space<vmem>>, vector<1x64x128xf32>,
    %c3 = arith.constant 3 : index
    %c0_28 = arith.constant 0 : index
    %c0_29 = arith.constant 0 : index
    %36 = vector.load %arg2[%c3, %c0_28, %c0_29] : memref<7x128x16xbf16, #tpu.memory_space<vmem>>, vector<1x128x16xbf16>
    %37 = vector.shape_cast %36 : vector<1x128x16xbf16> to vector<128x16xbf16>
    %cst_30 = arith.constant dense<0.000000e+00> : vector<128x128xf32>
    %38 = tpu.matmul %0, %37, %cst_30 {dimension_numbers = #tpu.dot_dimension_numbers<[1], [1], [0], [0], [0, 0, 1, 0], [], []>} : vector<128x16xbf16>, vector<128x16xbf16>, vector<128x128xf32> -> vector<128x128xf32>
    %39 = vector.extract_strided_slice %38 {offsets = [0, 0], sizes = [64, 128], strides = [1, 1]} : vector<128x128xf32> to vector<64x128xf32>
    %c3_31 = arith.constant 3 : index
    %c0_32 = arith.constant 0 : index
    %c0_33 = arith.constant 0 : index
    %40 = vector.load %arg11[%c3_31, %c0_32, %c0_33] : memref<7x128x128xf32, #tpu.memory_space<vmem>>, vector<1x64x128xf32>
    %41 = vector.shape_cast %40 : vector<1x64x128xf32> to vector<64x128xf32>
    %42 = vector.shape_cast %39 : vector<64x128xf32> to vector<1x64x128xf32>
    tpu.vector_store %arg11[%c3_31, %c0_32, %c0_33], %42 {strides = array<i32>} : memref<7x128x128xf32, #tpu.memory_space<vmem>>, vector<1x64x128xf32>,
    %43 = vector.extract_strided_slice %38 {offsets = [64, 0], sizes = [64, 128], strides = [1, 1]} : vector<128x128xf32> to vector<64x128xf32>
    %c3_34 = arith.constant 3 : index
    %c64_35 = arith.constant 64 : index
    %c0_36 = arith.constant 0 : index
    %44 = vector.load %arg11[%c3_34, %c64_35, %c0_36] : memref<7x128x128xf32, #tpu.memory_space<vmem>>, vector<1x64x128xf32>
    %45 = vector.shape_cast %44 : vector<1x64x128xf32> to vector<64x128xf32>
    %46 = vector.shape_cast %43 : vector<64x128xf32> to vector<1x64x128xf32>
    tpu.vector_store %arg11[%c3_34, %c64_35, %c0_36], %46 {strides = array<i32>} : memref<7x128x128xf32, #tpu.memory_space<vmem>>, vector<1x64x128xf32>,
    %c4_37 = arith.constant 4 : index
    %c0_38 = arith.constant 0 : index
    %c0_39 = arith.constant 0 : index
    %47 = vector.load %arg2[%c4_37, %c0_38, %c0_39] : memref<7x128x16xbf16, #tpu.memory_space<vmem>>, vector<1x128x16xbf16>
    %48 = vector.shape_cast %47 : vector<1x128x16xbf16> to vector<128x16xbf16>
    %cst_40 = arith.constant dense<0.000000e+00> : vector<128x128xf32>
    %49 = tpu.matmul %0, %48, %cst_40 {dimension_numbers = #tpu.dot_dimension_numbers<[1], [1], [0], [0], [0, 0, 1, 0], [], []>} : vector<128x16xbf16>, vector<128x16xbf16>, vector<128x128xf32> -> vector<128x128xf32>
    %50 = vector.extract_strided_slice %49 {offsets = [0, 0], sizes = [64, 128], strides = [1, 1]} : vector<128x128xf32> to vector<64x128xf32>
    %c4_41 = arith.constant 4 : index
    %c0_42 = arith.constant 0 : index
    %c0_43 = arith.constant 0 : index
    %51 = vector.load %arg11[%c4_41, %c0_42, %c0_43] : memref<7x128x128xf32, #tpu.memory_space<vmem>>, vector<1x64x128xf32>
    %52 = vector.shape_cast %51 : vector<1x64x128xf32> to vector<64x128xf32>
    %53 = vector.shape_cast %50 : vector<64x128xf32> to vector<1x64x128xf32>
    tpu.vector_store %arg11[%c4_41, %c0_42, %c0_43], %53 {strides = array<i32>} : memref<7x128x128xf32, #tpu.memory_space<vmem>>, vector<1x64x128xf32>,
    %54 = vector.extract_strided_slice %49 {offsets = [64, 0], sizes = [64, 128], strides = [1, 1]} : vector<128x128xf32> to vector<64x128xf32>
    %c2_44 = arith.constant 2 : index
    %c64_45 = arith.constant 64 : index
    %c0_46 = arith.constant 0 : index
    %55 = vector.load %arg11[%c2_44, %c64_45, %c0_46] : memref<7x128x128xf32, #tpu.memory_space<vmem>>, vector<1x64x128xf32>
    %56 = vector.shape_cast %55 : vector<1x64x128xf32> to vector<64x128xf32>
    %57 = vector.shape_cast %54 : vector<64x128xf32> to vector<1x64x128xf32>
    tpu.vector_store %arg11[%c2_44, %c64_45, %c0_46], %57 {strides = array<i32>} : memref<7x128x128xf32, #tpu.memory_space<vmem>>, vector<1x64x128xf32>,
    %c5_47 = arith.constant 5 : index
    %c0_48 = arith.constant 0 : index
    %c0_49 = arith.constant 0 : index
    %58 = vector.load %arg2[%c5_47, %c0_48, %c0_49] : memref<7x128x16xbf16, #tpu.memory_space<vmem>>, vector<1x128x16xbf16>
    %59 = vector.shape_cast %58 : vector<1x128x16xbf16> to vector<128x16xbf16>
    %cst_50 = arith.constant dense<0.000000e+00> : vector<128x128xf32>
    %60 = tpu.matmul %0, %59, %cst_50 {dimension_numbers = #tpu.dot_dimension_numbers<[1], [1], [0], [0], [0, 0, 1, 0], [], []>} : vector<128x16xbf16>, vector<128x16xbf16>, vector<128x128xf32> -> vector<128x128xf32>
    %61 = vector.extract_strided_slice %60 {offsets = [0, 0], sizes = [64, 128], strides = [1, 1]} : vector<128x128xf32> to vector<64x128xf32>
    %c5_51 = arith.constant 5 : index
    %c0_52 = arith.constant 0 : index
    %c0_53 = arith.constant 0 : index
    %62 = vector.load %arg11[%c5_51, %c0_52, %c0_53] : memref<7x128x128xf32, #tpu.memory_space<vmem>>, vector<1x64x128xf32>
    %63 = vector.shape_cast %62 : vector<1x64x128xf32> to vector<64x128xf32>
    %64 = vector.shape_cast %61 : vector<64x128xf32> to vector<1x64x128xf32>
    tpu.vector_store %arg11[%c5_51, %c0_52, %c0_53], %64 {strides = array<i32>} : memref<7x128x128xf32, #tpu.memory_space<vmem>>, vector<1x64x128xf32>,
    %65 = vector.extract_strided_slice %60 {offsets = [64, 0], sizes = [64, 128], strides = [1, 1]} : vector<128x128xf32> to vector<64x128xf32>
    %c1_54 = arith.constant 1 : index
    %c64_55 = arith.constant 64 : index
    %c0_56 = arith.constant 0 : index
    %66 = vector.load %arg11[%c1_54, %c64_55, %c0_56] : memref<7x128x128xf32, #tpu.memory_space<vmem>>, vector<1x64x128xf32>
    %67 = vector.shape_cast %66 : vector<1x64x128xf32> to vector<64x128xf32>
    %68 = vector.shape_cast %65 : vector<64x128xf32> to vector<1x64x128xf32>
    tpu.vector_store %arg11[%c1_54, %c64_55, %c0_56], %68 {strides = array<i32>} : memref<7x128x128xf32, #tpu.memory_space<vmem>>, vector<1x64x128xf32>,
    %c6_57 = arith.constant 6 : index
    %c0_58 = arith.constant 0 : index
    %c0_59 = arith.constant 0 : index
    %69 = vector.load %arg2[%c6_57, %c0_58, %c0_59] : memref<7x128x16xbf16, #tpu.memory_space<vmem>>, vector<1x128x16xbf16>
    %70 = vector.shape_cast %69 : vector<1x128x16xbf16> to vector<128x16xbf16>
    %cst_60 = arith.constant dense<0.000000e+00> : vector<128x128xf32>
    %71 = tpu.matmul %0, %70, %cst_60 {dimension_numbers = #tpu.dot_dimension_numbers<[1], [1], [0], [0], [0, 0, 1, 0], [], []>} : vector<128x16xbf16>, vector<128x16xbf16>, vector<128x128xf32> -> vector<128x128xf32>
    %72 = vector.extract_strided_slice %71 {offsets = [0, 0], sizes = [64, 128], strides = [1, 1]} : vector<128x128xf32> to vector<64x128xf32>
    %c6_61 = arith.constant 6 : index
    %c0_62 = arith.constant 0 : index
    %c0_63 = arith.constant 0 : index
    %73 = vector.load %arg11[%c6_61, %c0_62, %c0_63] : memref<7x128x128xf32, #tpu.memory_space<vmem>>, vector<1x64x128xf32>
    %74 = vector.shape_cast %73 : vector<1x64x128xf32> to vector<64x128xf32>
    %75 = vector.shape_cast %72 : vector<64x128xf32> to vector<1x64x128xf32>
    tpu.vector_store %arg11[%c6_61, %c0_62, %c0_63], %75 {strides = array<i32>} : memref<7x128x128xf32, #tpu.memory_space<vmem>>, vector<1x64x128xf32>,
    %76 = vector.extract_strided_slice %71 {offsets = [64, 0], sizes = [64, 128], strides = [1, 1]} : vector<128x128xf32> to vector<64x128xf32>
    %c0_64 = arith.constant 0 : index
    %c64_65 = arith.constant 64 : index
    %c0_66 = arith.constant 0 : index
    %77 = vector.load %arg11[%c0_64, %c64_65, %c0_66] : memref<7x128x128xf32, #tpu.memory_space<vmem>>, vector<1x64x128xf32>
    %78 = vector.shape_cast %77 : vector<1x64x128xf32> to vector<64x128xf32>
    %79 = vector.shape_cast %76 : vector<64x128xf32> to vector<1x64x128xf32>
    tpu.vector_store %arg11[%c0_64, %c64_65, %c0_66], %79 {strides = array<i32>} : memref<7x128x128xf32, #tpu.memory_space<vmem>>, vector<1x64x128xf32>,
    %cst_67 = arith.constant 0.000000e+00 : f32
    %80 = vector.broadcast %cst_67 : f32 to vector<32x128xf32>
    %cst_68 = arith.constant 0.000000e+00 : f32
    %81 = vector.broadcast %cst_68 : f32 to vector<32x128xf32>
    %c0_i32 = arith.constant 0 : i32
    %82 = arith.index_cast %c0_i32 : i32 to index
    %c0_69 = arith.constant 0 : index
    %c0_70 = arith.constant 0 : index
    %83 = vector.load %arg11[%82, %c0_69, %c0_70] : memref<7x128x128xf32, #tpu.memory_space<vmem>>, vector<1x128x128xf32>
    %84 = vector.shape_cast %83 : vector<1x128x128xf32> to vector<128x128xf32>
    %85 = arith.truncf %80 : vector<32x128xf32> to vector<32x128xbf16>
    %cst_71 = arith.constant dense<0.000000e+00> : vector<128x128xf32>
    %86 = tpu.matmul %1, %85, %cst_71 {dimension_numbers = #tpu.dot_dimension_numbers<[1], [0], [0], [1], [0, 0, 1, 1], [], []>} : vector<128x32xbf16>, vector<32x128xbf16>, vector<128x128xf32> -> vector<128x128xf32>
    %87 = arith.addf %84, %86 : vector<128x128xf32>
    %88 = vector.broadcast %2 : vector<128x1xf32> to vector<128x128xf32>
    %89 = arith.addf %87, %88 : vector<128x128xf32>
    %90 = vector.extract_strided_slice %89 {offsets = [0, 0], sizes = [16, 128], strides = [1, 1]} : vector<128x128xf32> to vector<16x128xf32>
    %91 = arith.negf %90 : vector<16x128xf32>
    %92 = math.exp %91 : vector<16x128xf32>
    %cst_72 = arith.constant 1.000000e+00 : f32
    %93 = vector.broadcast %cst_72 : f32 to vector<16x128xf32>
    %94 = arith.addf %93, %92 : vector<16x128xf32>
    %95 = arith.divf %93, %94 : vector<16x128xf32>
    %96 = vector.extract_strided_slice %89 {offsets = [16, 0], sizes = [16, 128], strides = [1, 1]} : vector<128x128xf32> to vector<16x128xf32>
    %97 = arith.negf %96 : vector<16x128xf32>
    %98 = math.exp %97 : vector<16x128xf32>
    %cst_73 = arith.constant 1.000000e+00 : f32
    %99 = vector.broadcast %cst_73 : f32 to vector<16x128xf32>
    %100 = arith.addf %99, %98 : vector<16x128xf32>
    %101 = arith.divf %99, %100 : vector<16x128xf32>
    %102 = vector.extract_strided_slice %89 {offsets = [32, 0], sizes = [16, 128], strides = [1, 1]} : vector<128x128xf32> to vector<16x128xf32>
    %103 = math.tanh %102 : vector<16x128xf32>
    %104 = vector.extract_strided_slice %89 {offsets = [48, 0], sizes = [16, 128], strides = [1, 1]} : vector<128x128xf32> to vector<16x128xf32>
    %105 = arith.negf %104 : vector<16x128xf32>
    %106 = math.exp %105 : vector<16x128xf32>
    %cst_74 = arith.constant 1.000000e+00 : f32
    %107 = vector.broadcast %cst_74 : f32 to vector<16x128xf32>
    %108 = arith.addf %107, %106 : vector<16x128xf32>
    %109 = arith.divf %107, %108 : vector<16x128xf32>
    %110 = vector.extract_strided_slice %89 {offsets = [64, 0], sizes = [16, 128], strides = [1, 1]} : vector<128x128xf32> to vector<16x128xf32>
    %111 = arith.negf %110 : vector<16x128xf32>
    %112 = math.exp %111 : vector<16x128xf32>
    %cst_75 = arith.constant 1.000000e+00 : f32
    %113 = vector.broadcast %cst_75 : f32 to vector<16x128xf32>
    %114 = arith.addf %113, %112 : vector<16x128xf32>
    %115 = arith.divf %113, %114 : vector<16x128xf32>
    %116 = vector.extract_strided_slice %89 {offsets = [80, 0], sizes = [16, 128], strides = [1, 1]} : vector<128x128xf32> to vector<16x128xf32>
    %117 = arith.negf %116 : vector<16x128xf32>
    %118 = math.exp %117 : vector<16x128xf32>
    %cst_76 = arith.constant 1.000000e+00 : f32
    %119 = vector.broadcast %cst_76 : f32 to vector<16x128xf32>
    %120 = arith.addf %119, %118 : vector<16x128xf32>
    %121 = arith.divf %119, %120 : vector<16x128xf32>
    %122 = vector.extract_strided_slice %89 {offsets = [96, 0], sizes = [16, 128], strides = [1, 1]} : vector<128x128xf32> to vector<16x128xf32>
    %123 = math.tanh %122 : vector<16x128xf32>
    %124 = vector.extract_strided_slice %89 {offsets = [112, 0], sizes = [16, 128], strides = [1, 1]} : vector<128x128xf32> to vector<16x128xf32>
    %125 = arith.negf %124 : vector<16x128xf32>
    %126 = math.exp %125 : vector<16x128xf32>
    %cst_77 = arith.constant 1.000000e+00 : f32
    %127 = vector.broadcast %cst_77 : f32 to vector<16x128xf32>
    %128 = arith.addf %127, %126 : vector<16x128xf32>
    %129 = arith.divf %127, %128 : vector<16x128xf32>
    %130 = vector.extract_strided_slice %81 {offsets = [0, 0], sizes = [16, 128], strides = [1, 1]} : vector<32x128xf32> to vector<16x128xf32>
    %131 = arith.mulf %101, %130 : vector<16x128xf32>
    %132 = arith.mulf %95, %103 : vector<16x128xf32>
    %133 = arith.addf %131, %132 : vector<16x128xf32>
    %134 = vector.extract_strided_slice %81 {offsets = [16, 0], sizes = [16, 128], strides = [1, 1]} : vector<32x128xf32> to vector<16x128xf32>
    %135 = arith.mulf %121, %134 : vector<16x128xf32>
    %136 = arith.mulf %115, %123 : vector<16x128xf32>
    %137 = arith.addf %135, %136 : vector<16x128xf32>
    %138 = math.tanh %133 : vector<16x128xf32>
    %139 = arith.mulf %109, %138 : vector<16x128xf32>
    %140 = math.tanh %137 : vector<16x128xf32>
    %141 = arith.mulf %129, %140 : vector<16x128xf32>
    %142 = tpu.concatenate %139, %141 in 0 : vector<16x128xf32>, vector<16x128xf32> -> vector<32x128xf32>
    %143 = tpu.concatenate %133, %137 in 0 : vector<16x128xf32>, vector<16x128xf32> -> vector<32x128xf32>
    %c1_i32 = arith.constant 1 : i32
    %144 = arith.index_cast %c1_i32 : i32 to index
    %c0_78 = arith.constant 0 : index
    %c0_79 = arith.constant 0 : index
    %145 = vector.load %arg11[%144, %c0_78, %c0_79] : memref<7x128x128xf32, #tpu.memory_space<vmem>>, vector<1x128x128xf32>
    %146 = vector.shape_cast %145 : vector<1x128x128xf32> to vector<128x128xf32>
    %147 = arith.truncf %142 : vector<32x128xf32> to vector<32x128xbf16>
    %cst_80 = arith.constant dense<0.000000e+00> : vector<128x128xf32>
    %148 = tpu.matmul %1, %147, %cst_80 {dimension_numbers = #tpu.dot_dimension_numbers<[1], [0], [0], [1], [0, 0, 1, 1], [], []>} : vector<128x32xbf16>, vector<32x128xbf16>, vector<128x128xf32> -> vector<128x128xf32>
    %149 = arith.addf %146, %148 : vector<128x128xf32>
    %150 = vector.broadcast %2 : vector<128x1xf32> to vector<128x128xf32>
    %151 = arith.addf %149, %150 : vector<128x128xf32>
    %152 = vector.extract_strided_slice %151 {offsets = [0, 0], sizes = [16, 128], strides = [1, 1]} : vector<128x128xf32> to vector<16x128xf32>
    %153 = arith.negf %152 : vector<16x128xf32>
    %154 = math.exp %153 : vector<16x128xf32>
    %cst_81 = arith.constant 1.000000e+00 : f32
    %155 = vector.broadcast %cst_81 : f32 to vector<16x128xf32>
    %156 = arith.addf %155, %154 : vector<16x128xf32>
    %157 = arith.divf %155, %156 : vector<16x128xf32>
    %158 = vector.extract_strided_slice %151 {offsets = [16, 0], sizes = [16, 128], strides = [1, 1]} : vector<128x128xf32> to vector<16x128xf32>
    %159 = arith.negf %158 : vector<16x128xf32>
    %160 = math.exp %159 : vector<16x128xf32>
    %cst_82 = arith.constant 1.000000e+00 : f32
    %161 = vector.broadcast %cst_82 : f32 to vector<16x128xf32>
    %162 = arith.addf %161, %160 : vector<16x128xf32>
    %163 = arith.divf %161, %162 : vector<16x128xf32>
    %164 = vector.extract_strided_slice %151 {offsets = [32, 0], sizes = [16, 128], strides = [1, 1]} : vector<128x128xf32> to vector<16x128xf32>
    %165 = math.tanh %164 : vector<16x128xf32>
    %166 = vector.extract_strided_slice %151 {offsets = [48, 0], sizes = [16, 128], strides = [1, 1]} : vector<128x128xf32> to vector<16x128xf32>
    %167 = arith.negf %166 : vector<16x128xf32>
    %168 = math.exp %167 : vector<16x128xf32>
    %cst_83 = arith.constant 1.000000e+00 : f32
    %169 = vector.broadcast %cst_83 : f32 to vector<16x128xf32>
    %170 = arith.addf %169, %168 : vector<16x128xf32>
    %171 = arith.divf %169, %170 : vector<16x128xf32>
    %172 = vector.extract_strided_slice %151 {offsets = [64, 0], sizes = [16, 128], strides = [1, 1]} : vector<128x128xf32> to vector<16x128xf32>
    %173 = arith.negf %172 : vector<16x128xf32>
    %174 = math.exp %173 : vector<16x128xf32>
    %cst_84 = arith.constant 1.000000e+00 : f32
    %175 = vector.broadcast %cst_84 : f32 to vector<16x128xf32>
    %176 = arith.addf %175, %174 : vector<16x128xf32>
    %177 = arith.divf %175, %176 : vector<16x128xf32>
    %178 = vector.extract_strided_slice %151 {offsets = [80, 0], sizes = [16, 128], strides = [1, 1]} : vector<128x128xf32> to vector<16x128xf32>
    %179 = arith.negf %178 : vector<16x128xf32>
    %180 = math.exp %179 : vector<16x128xf32>
    %cst_85 = arith.constant 1.000000e+00 : f32
    %181 = vector.broadcast %cst_85 : f32 to vector<16x128xf32>
    %182 = arith.addf %181, %180 : vector<16x128xf32>
    %183 = arith.divf %181, %182 : vector<16x128xf32>
    %184 = vector.extract_strided_slice %151 {offsets = [96, 0], sizes = [16, 128], strides = [1, 1]} : vector<128x128xf32> to vector<16x128xf32>
    %185 = math.tanh %184 : vector<16x128xf32>
    %186 = vector.extract_strided_slice %151 {offsets = [112, 0], sizes = [16, 128], strides = [1, 1]} : vector<128x128xf32> to vector<16x128xf32>
    %187 = arith.negf %186 : vector<16x128xf32>
    %188 = math.exp %187 : vector<16x128xf32>
    %cst_86 = arith.constant 1.000000e+00 : f32
    %189 = vector.broadcast %cst_86 : f32 to vector<16x128xf32>
    %190 = arith.addf %189, %188 : vector<16x128xf32>
    %191 = arith.divf %189, %190 : vector<16x128xf32>
    %192 = vector.extract_strided_slice %143 {offsets = [0, 0], sizes = [16, 128], strides = [1, 1]} : vector<32x128xf32> to vector<16x128xf32>
    %193 = arith.mulf %163, %192 : vector<16x128xf32>
    %194 = arith.mulf %157, %165 : vector<16x128xf32>
    %195 = arith.addf %193, %194 : vector<16x128xf32>
    %196 = vector.extract_strided_slice %143 {offsets = [16, 0], sizes = [16, 128], strides = [1, 1]} : vector<32x128xf32> to vector<16x128xf32>
    %197 = arith.mulf %183, %196 : vector<16x128xf32>
    %198 = arith.mulf %177, %185 : vector<16x128xf32>
    %199 = arith.addf %197, %198 : vector<16x128xf32>
    %200 = math.tanh %195 : vector<16x128xf32>
    %201 = arith.mulf %171, %200 : vector<16x128xf32>
    %202 = math.tanh %199 : vector<16x128xf32>
    %203 = arith.mulf %191, %202 : vector<16x128xf32>
    %204 = tpu.concatenate %201, %203 in 0 : vector<16x128xf32>, vector<16x128xf32> -> vector<32x128xf32>
    %205 = tpu.concatenate %195, %199 in 0 : vector<16x128xf32>, vector<16x128xf32> -> vector<32x128xf32>
    %c2_i32 = arith.constant 2 : i32
    %206 = arith.index_cast %c2_i32 : i32 to index
    %c0_87 = arith.constant 0 : index
    %c0_88 = arith.constant 0 : index
    %207 = vector.load %arg11[%206, %c0_87, %c0_88] : memref<7x128x128xf32, #tpu.memory_space<vmem>>, vector<1x128x128xf32>
    %208 = vector.shape_cast %207 : vector<1x128x128xf32> to vector<128x128xf32>
    %209 = arith.truncf %204 : vector<32x128xf32> to vector<32x128xbf16>
    %cst_89 = arith.constant dense<0.000000e+00> : vector<128x128xf32>
    %210 = tpu.matmul %1, %209, %cst_89 {dimension_numbers = #tpu.dot_dimension_numbers<[1], [0], [0], [1], [0, 0, 1, 1], [], []>} : vector<128x32xbf16>, vector<32x128xbf16>, vector<128x128xf32> -> vector<128x128xf32>
    %211 = arith.addf %208, %210 : vector<128x128xf32>
    %212 = vector.broadcast %2 : vector<128x1xf32> to vector<128x128xf32>
    %213 = arith.addf %211, %212 : vector<128x128xf32>
    %214 = vector.extract_strided_slice %213 {offsets = [0, 0], sizes = [16, 128], strides = [1, 1]} : vector<128x128xf32> to vector<16x128xf32>
    %215 = arith.negf %214 : vector<16x128xf32>
    %216 = math.exp %215 : vector<16x128xf32>
    %cst_90 = arith.constant 1.000000e+00 : f32
    %217 = vector.broadcast %cst_90 : f32 to vector<16x128xf32>
    %218 = arith.addf %217, %216 : vector<16x128xf32>
    %219 = arith.divf %217, %218 : vector<16x128xf32>
    %220 = vector.extract_strided_slice %213 {offsets = [16, 0], sizes = [16, 128], strides = [1, 1]} : vector<128x128xf32> to vector<16x128xf32>
    %221 = arith.negf %220 : vector<16x128xf32>
    %222 = math.exp %221 : vector<16x128xf32>
    %cst_91 = arith.constant 1.000000e+00 : f32
    %223 = vector.broadcast %cst_91 : f32 to vector<16x128xf32>
    %224 = arith.addf %223, %222 : vector<16x128xf32>
    %225 = arith.divf %223, %224 : vector<16x128xf32>
    %226 = vector.extract_strided_slice %213 {offsets = [32, 0], sizes = [16, 128], strides = [1, 1]} : vector<128x128xf32> to vector<16x128xf32>
    %227 = math.tanh %226 : vector<16x128xf32>
    %228 = vector.extract_strided_slice %213 {offsets = [48, 0], sizes = [16, 128], strides = [1, 1]} : vector<128x128xf32> to vector<16x128xf32>
    %229 = arith.negf %228 : vector<16x128xf32>
    %230 = math.exp %229 : vector<16x128xf32>
    %cst_92 = arith.constant 1.000000e+00 : f32
    %231 = vector.broadcast %cst_92 : f32 to vector<16x128xf32>
    %232 = arith.addf %231, %230 : vector<16x128xf32>
    %233 = arith.divf %231, %232 : vector<16x128xf32>
    %234 = vector.extract_strided_slice %213 {offsets = [64, 0], sizes = [16, 128], strides = [1, 1]} : vector<128x128xf32> to vector<16x128xf32>
    %235 = arith.negf %234 : vector<16x128xf32>
    %236 = math.exp %235 : vector<16x128xf32>
    %cst_93 = arith.constant 1.000000e+00 : f32
    %237 = vector.broadcast %cst_93 : f32 to vector<16x128xf32>
    %238 = arith.addf %237, %236 : vector<16x128xf32>
    %239 = arith.divf %237, %238 : vector<16x128xf32>
    %240 = vector.extract_strided_slice %213 {offsets = [80, 0], sizes = [16, 128], strides = [1, 1]} : vector<128x128xf32> to vector<16x128xf32>
    %241 = arith.negf %240 : vector<16x128xf32>
    %242 = math.exp %241 : vector<16x128xf32>
    %cst_94 = arith.constant 1.000000e+00 : f32
    %243 = vector.broadcast %cst_94 : f32 to vector<16x128xf32>
    %244 = arith.addf %243, %242 : vector<16x128xf32>
    %245 = arith.divf %243, %244 : vector<16x128xf32>
    %246 = vector.extract_strided_slice %213 {offsets = [96, 0], sizes = [16, 128], strides = [1, 1]} : vector<128x128xf32> to vector<16x128xf32>
    %247 = math.tanh %246 : vector<16x128xf32>
    %248 = vector.extract_strided_slice %213 {offsets = [112, 0], sizes = [16, 128], strides = [1, 1]} : vector<128x128xf32> to vector<16x128xf32>
    %249 = arith.negf %248 : vector<16x128xf32>
    %250 = math.exp %249 : vector<16x128xf32>
    %cst_95 = arith.constant 1.000000e+00 : f32
    %251 = vector.broadcast %cst_95 : f32 to vector<16x128xf32>
    %252 = arith.addf %251, %250 : vector<16x128xf32>
    %253 = arith.divf %251, %252 : vector<16x128xf32>
    %254 = vector.extract_strided_slice %205 {offsets = [0, 0], sizes = [16, 128], strides = [1, 1]} : vector<32x128xf32> to vector<16x128xf32>
    %255 = arith.mulf %225, %254 : vector<16x128xf32>
    %256 = arith.mulf %219, %227 : vector<16x128xf32>
    %257 = arith.addf %255, %256 : vector<16x128xf32>
    %258 = vector.extract_strided_slice %205 {offsets = [16, 0], sizes = [16, 128], strides = [1, 1]} : vector<32x128xf32> to vector<16x128xf32>
    %259 = arith.mulf %245, %258 : vector<16x128xf32>
    %260 = arith.mulf %239, %247 : vector<16x128xf32>
    %261 = arith.addf %259, %260 : vector<16x128xf32>
    %262 = math.tanh %257 : vector<16x128xf32>
    %263 = arith.mulf %233, %262 : vector<16x128xf32>
    %264 = math.tanh %261 : vector<16x128xf32>
    %265 = arith.mulf %253, %264 : vector<16x128xf32>
    %266 = tpu.concatenate %263, %265 in 0 : vector<16x128xf32>, vector<16x128xf32> -> vector<32x128xf32>
    %267 = tpu.concatenate %257, %261 in 0 : vector<16x128xf32>, vector<16x128xf32> -> vector<32x128xf32>
    %c3_i32 = arith.constant 3 : i32
    %268 = arith.index_cast %c3_i32 : i32 to index
    %c0_96 = arith.constant 0 : index
    %c0_97 = arith.constant 0 : index
    %269 = vector.load %arg11[%268, %c0_96, %c0_97] : memref<7x128x128xf32, #tpu.memory_space<vmem>>, vector<1x128x128xf32>
    %270 = vector.shape_cast %269 : vector<1x128x128xf32> to vector<128x128xf32>
    %271 = arith.truncf %266 : vector<32x128xf32> to vector<32x128xbf16>
    %cst_98 = arith.constant dense<0.000000e+00> : vector<128x128xf32>
    %272 = tpu.matmul %1, %271, %cst_98 {dimension_numbers = #tpu.dot_dimension_numbers<[1], [0], [0], [1], [0, 0, 1, 1], [], []>} : vector<128x32xbf16>, vector<32x128xbf16>, vector<128x128xf32> -> vector<128x128xf32>
    %273 = arith.addf %270, %272 : vector<128x128xf32>
    %274 = vector.broadcast %2 : vector<128x1xf32> to vector<128x128xf32>
    %275 = arith.addf %273, %274 : vector<128x128xf32>
    %276 = vector.extract_strided_slice %275 {offsets = [0, 0], sizes = [16, 128], strides = [1, 1]} : vector<128x128xf32> to vector<16x128xf32>
    %277 = arith.negf %276 : vector<16x128xf32>
    %278 = math.exp %277 : vector<16x128xf32>
    %cst_99 = arith.constant 1.000000e+00 : f32
    %279 = vector.broadcast %cst_99 : f32 to vector<16x128xf32>
    %280 = arith.addf %279, %278 : vector<16x128xf32>
    %281 = arith.divf %279, %280 : vector<16x128xf32>
    %282 = vector.extract_strided_slice %275 {offsets = [16, 0], sizes = [16, 128], strides = [1, 1]} : vector<128x128xf32> to vector<16x128xf32>
    %283 = arith.negf %282 : vector<16x128xf32>
    %284 = math.exp %283 : vector<16x128xf32>
    %cst_100 = arith.constant 1.000000e+00 : f32
    %285 = vector.broadcast %cst_100 : f32 to vector<16x128xf32>
    %286 = arith.addf %285, %284 : vector<16x128xf32>
    %287 = arith.divf %285, %286 : vector<16x128xf32>
    %288 = vector.extract_strided_slice %275 {offsets = [32, 0], sizes = [16, 128], strides = [1, 1]} : vector<128x128xf32> to vector<16x128xf32>
    %289 = math.tanh %288 : vector<16x128xf32>
    %290 = vector.extract_strided_slice %275 {offsets = [48, 0], sizes = [16, 128], strides = [1, 1]} : vector<128x128xf32> to vector<16x128xf32>
    %291 = arith.negf %290 : vector<16x128xf32>
    %292 = math.exp %291 : vector<16x128xf32>
    %cst_101 = arith.constant 1.000000e+00 : f32
    %293 = vector.broadcast %cst_101 : f32 to vector<16x128xf32>
    %294 = arith.addf %293, %292 : vector<16x128xf32>
    %295 = arith.divf %293, %294 : vector<16x128xf32>
    %296 = vector.extract_strided_slice %275 {offsets = [64, 0], sizes = [16, 128], strides = [1, 1]} : vector<128x128xf32> to vector<16x128xf32>
    %297 = arith.negf %296 : vector<16x128xf32>
    %298 = math.exp %297 : vector<16x128xf32>
    %cst_102 = arith.constant 1.000000e+00 : f32
    %299 = vector.broadcast %cst_102 : f32 to vector<16x128xf32>
    %300 = arith.addf %299, %298 : vector<16x128xf32>
    %301 = arith.divf %299, %300 : vector<16x128xf32>
    %302 = vector.extract_strided_slice %275 {offsets = [80, 0], sizes = [16, 128], strides = [1, 1]} : vector<128x128xf32> to vector<16x128xf32>
    %303 = arith.negf %302 : vector<16x128xf32>
    %304 = math.exp %303 : vector<16x128xf32>
    %cst_103 = arith.constant 1.000000e+00 : f32
    %305 = vector.broadcast %cst_103 : f32 to vector<16x128xf32>
    %306 = arith.addf %305, %304 : vector<16x128xf32>
    %307 = arith.divf %305, %306 : vector<16x128xf32>
    %308 = vector.extract_strided_slice %275 {offsets = [96, 0], sizes = [16, 128], strides = [1, 1]} : vector<128x128xf32> to vector<16x128xf32>
    %309 = math.tanh %308 : vector<16x128xf32>
    %310 = vector.extract_strided_slice %275 {offsets = [112, 0], sizes = [16, 128], strides = [1, 1]} : vector<128x128xf32> to vector<16x128xf32>
    %311 = arith.negf %310 : vector<16x128xf32>
    %312 = math.exp %311 : vector<16x128xf32>
    %cst_104 = arith.constant 1.000000e+00 : f32
    %313 = vector.broadcast %cst_104 : f32 to vector<16x128xf32>
    %314 = arith.addf %313, %312 : vector<16x128xf32>
    %315 = arith.divf %313, %314 : vector<16x128xf32>
    %316 = vector.extract_strided_slice %267 {offsets = [0, 0], sizes = [16, 128], strides = [1, 1]} : vector<32x128xf32> to vector<16x128xf32>
    %317 = arith.mulf %287, %316 : vector<16x128xf32>
    %318 = arith.mulf %281, %289 : vector<16x128xf32>
    %319 = arith.addf %317, %318 : vector<16x128xf32>
    %320 = vector.extract_strided_slice %267 {offsets = [16, 0], sizes = [16, 128], strides = [1, 1]} : vector<32x128xf32> to vector<16x128xf32>
    %321 = arith.mulf %307, %320 : vector<16x128xf32>
    %322 = arith.mulf %301, %309 : vector<16x128xf32>
    %323 = arith.addf %321, %322 : vector<16x128xf32>
    %324 = math.tanh %319 : vector<16x128xf32>
    %325 = arith.mulf %295, %324 : vector<16x128xf32>
    %326 = math.tanh %323 : vector<16x128xf32>
    %327 = arith.mulf %315, %326 : vector<16x128xf32>
    %328 = tpu.concatenate %325, %327 in 0 : vector<16x128xf32>, vector<16x128xf32> -> vector<32x128xf32>
    %329 = tpu.concatenate %319, %323 in 0 : vector<16x128xf32>, vector<16x128xf32> -> vector<32x128xf32>
    %c4_i32 = arith.constant 4 : i32
    %330 = arith.index_cast %c4_i32 : i32 to index
    %c0_105 = arith.constant 0 : index
    %c0_106 = arith.constant 0 : index
    %331 = vector.load %arg11[%330, %c0_105, %c0_106] : memref<7x128x128xf32, #tpu.memory_space<vmem>>, vector<1x128x128xf32>
    %332 = vector.shape_cast %331 : vector<1x128x128xf32> to vector<128x128xf32>
    %333 = arith.truncf %328 : vector<32x128xf32> to vector<32x128xbf16>
    %cst_107 = arith.constant dense<0.000000e+00> : vector<128x128xf32>
    %334 = tpu.matmul %1, %333, %cst_107 {dimension_numbers = #tpu.dot_dimension_numbers<[1], [0], [0], [1], [0, 0, 1, 1], [], []>} : vector<128x32xbf16>, vector<32x128xbf16>, vector<128x128xf32> -> vector<128x128xf32>
    %335 = arith.addf %332, %334 : vector<128x128xf32>
    %336 = vector.broadcast %2 : vector<128x1xf32> to vector<128x128xf32>
    %337 = arith.addf %335, %336 : vector<128x128xf32>
    %338 = vector.extract_strided_slice %337 {offsets = [0, 0], sizes = [16, 128], strides = [1, 1]} : vector<128x128xf32> to vector<16x128xf32>
    %339 = arith.negf %338 : vector<16x128xf32>
    %340 = math.exp %339 : vector<16x128xf32>
    %cst_108 = arith.constant 1.000000e+00 : f32
    %341 = vector.broadcast %cst_108 : f32 to vector<16x128xf32>
    %342 = arith.addf %341, %340 : vector<16x128xf32>
    %343 = arith.divf %341, %342 : vector<16x128xf32>
    %344 = vector.extract_strided_slice %337 {offsets = [16, 0], sizes = [16, 128], strides = [1, 1]} : vector<128x128xf32> to vector<16x128xf32>
    %345 = arith.negf %344 : vector<16x128xf32>
    %346 = math.exp %345 : vector<16x128xf32>
    %cst_109 = arith.constant 1.000000e+00 : f32
    %347 = vector.broadcast %cst_109 : f32 to vector<16x128xf32>
    %348 = arith.addf %347, %346 : vector<16x128xf32>
    %349 = arith.divf %347, %348 : vector<16x128xf32>
    %350 = vector.extract_strided_slice %337 {offsets = [32, 0], sizes = [16, 128], strides = [1, 1]} : vector<128x128xf32> to vector<16x128xf32>
    %351 = math.tanh %350 : vector<16x128xf32>
    %352 = vector.extract_strided_slice %337 {offsets = [48, 0], sizes = [16, 128], strides = [1, 1]} : vector<128x128xf32> to vector<16x128xf32>
    %353 = arith.negf %352 : vector<16x128xf32>
    %354 = math.exp %353 : vector<16x128xf32>
    %cst_110 = arith.constant 1.000000e+00 : f32
    %355 = vector.broadcast %cst_110 : f32 to vector<16x128xf32>
    %356 = arith.addf %355, %354 : vector<16x128xf32>
    %357 = arith.divf %355, %356 : vector<16x128xf32>
    %358 = vector.extract_strided_slice %337 {offsets = [64, 0], sizes = [16, 128], strides = [1, 1]} : vector<128x128xf32> to vector<16x128xf32>
    %359 = arith.negf %358 : vector<16x128xf32>
    %360 = math.exp %359 : vector<16x128xf32>
    %cst_111 = arith.constant 1.000000e+00 : f32
    %361 = vector.broadcast %cst_111 : f32 to vector<16x128xf32>
    %362 = arith.addf %361, %360 : vector<16x128xf32>
    %363 = arith.divf %361, %362 : vector<16x128xf32>
    %364 = vector.extract_strided_slice %337 {offsets = [80, 0], sizes = [16, 128], strides = [1, 1]} : vector<128x128xf32> to vector<16x128xf32>
    %365 = arith.negf %364 : vector<16x128xf32>
    %366 = math.exp %365 : vector<16x128xf32>
    %cst_112 = arith.constant 1.000000e+00 : f32
    %367 = vector.broadcast %cst_112 : f32 to vector<16x128xf32>
    %368 = arith.addf %367, %366 : vector<16x128xf32>
    %369 = arith.divf %367, %368 : vector<16x128xf32>
    %370 = vector.extract_strided_slice %337 {offsets = [96, 0], sizes = [16, 128], strides = [1, 1]} : vector<128x128xf32> to vector<16x128xf32>
    %371 = math.tanh %370 : vector<16x128xf32>
    %372 = vector.extract_strided_slice %337 {offsets = [112, 0], sizes = [16, 128], strides = [1, 1]} : vector<128x128xf32> to vector<16x128xf32>
    %373 = arith.negf %372 : vector<16x128xf32>
    %374 = math.exp %373 : vector<16x128xf32>
    %cst_113 = arith.constant 1.000000e+00 : f32
    %375 = vector.broadcast %cst_113 : f32 to vector<16x128xf32>
    %376 = arith.addf %375, %374 : vector<16x128xf32>
    %377 = arith.divf %375, %376 : vector<16x128xf32>
    %378 = vector.extract_strided_slice %329 {offsets = [0, 0], sizes = [16, 128], strides = [1, 1]} : vector<32x128xf32> to vector<16x128xf32>
    %379 = arith.mulf %349, %378 : vector<16x128xf32>
    %380 = arith.mulf %343, %351 : vector<16x128xf32>
    %381 = arith.addf %379, %380 : vector<16x128xf32>
    %382 = vector.extract_strided_slice %329 {offsets = [16, 0], sizes = [16, 128], strides = [1, 1]} : vector<32x128xf32> to vector<16x128xf32>
    %383 = arith.mulf %369, %382 : vector<16x128xf32>
    %384 = arith.mulf %363, %371 : vector<16x128xf32>
    %385 = arith.addf %383, %384 : vector<16x128xf32>
    %386 = math.tanh %381 : vector<16x128xf32>
    %387 = arith.mulf %357, %386 : vector<16x128xf32>
    %388 = math.tanh %385 : vector<16x128xf32>
    %389 = arith.mulf %377, %388 : vector<16x128xf32>
    %390 = tpu.concatenate %387, %389 in 0 : vector<16x128xf32>, vector<16x128xf32> -> vector<32x128xf32>
    %391 = tpu.concatenate %381, %385 in 0 : vector<16x128xf32>, vector<16x128xf32> -> vector<32x128xf32>
    %c5_i32 = arith.constant 5 : i32
    %392 = arith.index_cast %c5_i32 : i32 to index
    %c0_114 = arith.constant 0 : index
    %c0_115 = arith.constant 0 : index
    %393 = vector.load %arg11[%392, %c0_114, %c0_115] : memref<7x128x128xf32, #tpu.memory_space<vmem>>, vector<1x128x128xf32>
    %394 = vector.shape_cast %393 : vector<1x128x128xf32> to vector<128x128xf32>
    %395 = arith.truncf %390 : vector<32x128xf32> to vector<32x128xbf16>
    %cst_116 = arith.constant dense<0.000000e+00> : vector<128x128xf32>
    %396 = tpu.matmul %1, %395, %cst_116 {dimension_numbers = #tpu.dot_dimension_numbers<[1], [0], [0], [1], [0, 0, 1, 1], [], []>} : vector<128x32xbf16>, vector<32x128xbf16>, vector<128x128xf32> -> vector<128x128xf32>
    %397 = arith.addf %394, %396 : vector<128x128xf32>
    %398 = vector.broadcast %2 : vector<128x1xf32> to vector<128x128xf32>
    %399 = arith.addf %397, %398 : vector<128x128xf32>
    %400 = vector.extract_strided_slice %399 {offsets = [0, 0], sizes = [16, 128], strides = [1, 1]} : vector<128x128xf32> to vector<16x128xf32>
    %401 = arith.negf %400 : vector<16x128xf32>
    %402 = math.exp %401 : vector<16x128xf32>
    %cst_117 = arith.constant 1.000000e+00 : f32
    %403 = vector.broadcast %cst_117 : f32 to vector<16x128xf32>
    %404 = arith.addf %403, %402 : vector<16x128xf32>
    %405 = arith.divf %403, %404 : vector<16x128xf32>
    %406 = vector.extract_strided_slice %399 {offsets = [16, 0], sizes = [16, 128], strides = [1, 1]} : vector<128x128xf32> to vector<16x128xf32>
    %407 = arith.negf %406 : vector<16x128xf32>
    %408 = math.exp %407 : vector<16x128xf32>
    %cst_118 = arith.constant 1.000000e+00 : f32
    %409 = vector.broadcast %cst_118 : f32 to vector<16x128xf32>
    %410 = arith.addf %409, %408 : vector<16x128xf32>
    %411 = arith.divf %409, %410 : vector<16x128xf32>
    %412 = vector.extract_strided_slice %399 {offsets = [32, 0], sizes = [16, 128], strides = [1, 1]} : vector<128x128xf32> to vector<16x128xf32>
    %413 = math.tanh %412 : vector<16x128xf32>
    %414 = vector.extract_strided_slice %399 {offsets = [48, 0], sizes = [16, 128], strides = [1, 1]} : vector<128x128xf32> to vector<16x128xf32>
    %415 = arith.negf %414 : vector<16x128xf32>
    %416 = math.exp %415 : vector<16x128xf32>
    %cst_119 = arith.constant 1.000000e+00 : f32
    %417 = vector.broadcast %cst_119 : f32 to vector<16x128xf32>
    %418 = arith.addf %417, %416 : vector<16x128xf32>
    %419 = arith.divf %417, %418 : vector<16x128xf32>
    %420 = vector.extract_strided_slice %399 {offsets = [64, 0], sizes = [16, 128], strides = [1, 1]} : vector<128x128xf32> to vector<16x128xf32>
    %421 = arith.negf %420 : vector<16x128xf32>
    %422 = math.exp %421 : vector<16x128xf32>
    %cst_120 = arith.constant 1.000000e+00 : f32
    %423 = vector.broadcast %cst_120 : f32 to vector<16x128xf32>
    %424 = arith.addf %423, %422 : vector<16x128xf32>
    %425 = arith.divf %423, %424 : vector<16x128xf32>
    %426 = vector.extract_strided_slice %399 {offsets = [80, 0], sizes = [16, 128], strides = [1, 1]} : vector<128x128xf32> to vector<16x128xf32>
    %427 = arith.negf %426 : vector<16x128xf32>
    %428 = math.exp %427 : vector<16x128xf32>
    %cst_121 = arith.constant 1.000000e+00 : f32
    %429 = vector.broadcast %cst_121 : f32 to vector<16x128xf32>
    %430 = arith.addf %429, %428 : vector<16x128xf32>
    %431 = arith.divf %429, %430 : vector<16x128xf32>
    %432 = vector.extract_strided_slice %399 {offsets = [96, 0], sizes = [16, 128], strides = [1, 1]} : vector<128x128xf32> to vector<16x128xf32>
    %433 = math.tanh %432 : vector<16x128xf32>
    %434 = vector.extract_strided_slice %399 {offsets = [112, 0], sizes = [16, 128], strides = [1, 1]} : vector<128x128xf32> to vector<16x128xf32>
    %435 = arith.negf %434 : vector<16x128xf32>
    %436 = math.exp %435 : vector<16x128xf32>
    %cst_122 = arith.constant 1.000000e+00 : f32
    %437 = vector.broadcast %cst_122 : f32 to vector<16x128xf32>
    %438 = arith.addf %437, %436 : vector<16x128xf32>
    %439 = arith.divf %437, %438 : vector<16x128xf32>
    %440 = vector.extract_strided_slice %391 {offsets = [0, 0], sizes = [16, 128], strides = [1, 1]} : vector<32x128xf32> to vector<16x128xf32>
    %441 = arith.mulf %411, %440 : vector<16x128xf32>
    %442 = arith.mulf %405, %413 : vector<16x128xf32>
    %443 = arith.addf %441, %442 : vector<16x128xf32>
    %444 = vector.extract_strided_slice %391 {offsets = [16, 0], sizes = [16, 128], strides = [1, 1]} : vector<32x128xf32> to vector<16x128xf32>
    %445 = arith.mulf %431, %444 : vector<16x128xf32>
    %446 = arith.mulf %425, %433 : vector<16x128xf32>
    %447 = arith.addf %445, %446 : vector<16x128xf32>
    %448 = math.tanh %443 : vector<16x128xf32>
    %449 = arith.mulf %419, %448 : vector<16x128xf32>
    %450 = math.tanh %447 : vector<16x128xf32>
    %451 = arith.mulf %439, %450 : vector<16x128xf32>
    %452 = tpu.concatenate %449, %451 in 0 : vector<16x128xf32>, vector<16x128xf32> -> vector<32x128xf32>
    %453 = tpu.concatenate %443, %447 in 0 : vector<16x128xf32>, vector<16x128xf32> -> vector<32x128xf32>
    %c6_i32 = arith.constant 6 : i32
    %454 = arith.index_cast %c6_i32 : i32 to index
    %c0_123 = arith.constant 0 : index
    %c0_124 = arith.constant 0 : index
    %455 = vector.load %arg11[%454, %c0_123, %c0_124] : memref<7x128x128xf32, #tpu.memory_space<vmem>>, vector<1x128x128xf32>
    %456 = vector.shape_cast %455 : vector<1x128x128xf32> to vector<128x128xf32>
    %457 = arith.truncf %452 : vector<32x128xf32> to vector<32x128xbf16>
    %cst_125 = arith.constant dense<0.000000e+00> : vector<128x128xf32>
    %458 = tpu.matmul %1, %457, %cst_125 {dimension_numbers = #tpu.dot_dimension_numbers<[1], [0], [0], [1], [0, 0, 1, 1], [], []>} : vector<128x32xbf16>, vector<32x128xbf16>, vector<128x128xf32> -> vector<128x128xf32>
    %459 = arith.addf %456, %458 : vector<128x128xf32>
    %460 = vector.broadcast %2 : vector<128x1xf32> to vector<128x128xf32>
    %461 = arith.addf %459, %460 : vector<128x128xf32>
    %462 = vector.extract_strided_slice %461 {offsets = [0, 0], sizes = [16, 128], strides = [1, 1]} : vector<128x128xf32> to vector<16x128xf32>
    %463 = arith.negf %462 : vector<16x128xf32>
    %464 = math.exp %463 : vector<16x128xf32>
    %cst_126 = arith.constant 1.000000e+00 : f32
    %465 = vector.broadcast %cst_126 : f32 to vector<16x128xf32>
    %466 = arith.addf %465, %464 : vector<16x128xf32>
    %467 = arith.divf %465, %466 : vector<16x128xf32>
    %468 = vector.extract_strided_slice %461 {offsets = [16, 0], sizes = [16, 128], strides = [1, 1]} : vector<128x128xf32> to vector<16x128xf32>
    %469 = arith.negf %468 : vector<16x128xf32>
    %470 = math.exp %469 : vector<16x128xf32>
    %cst_127 = arith.constant 1.000000e+00 : f32
    %471 = vector.broadcast %cst_127 : f32 to vector<16x128xf32>
    %472 = arith.addf %471, %470 : vector<16x128xf32>
    %473 = arith.divf %471, %472 : vector<16x128xf32>
    %474 = vector.extract_strided_slice %461 {offsets = [32, 0], sizes = [16, 128], strides = [1, 1]} : vector<128x128xf32> to vector<16x128xf32>
    %475 = math.tanh %474 : vector<16x128xf32>
    %476 = vector.extract_strided_slice %461 {offsets = [48, 0], sizes = [16, 128], strides = [1, 1]} : vector<128x128xf32> to vector<16x128xf32>
    %477 = arith.negf %476 : vector<16x128xf32>
    %478 = math.exp %477 : vector<16x128xf32>
    %cst_128 = arith.constant 1.000000e+00 : f32
    %479 = vector.broadcast %cst_128 : f32 to vector<16x128xf32>
    %480 = arith.addf %479, %478 : vector<16x128xf32>
    %481 = arith.divf %479, %480 : vector<16x128xf32>
    %482 = vector.extract_strided_slice %461 {offsets = [64, 0], sizes = [16, 128], strides = [1, 1]} : vector<128x128xf32> to vector<16x128xf32>
    %483 = arith.negf %482 : vector<16x128xf32>
    %484 = math.exp %483 : vector<16x128xf32>
    %cst_129 = arith.constant 1.000000e+00 : f32
    %485 = vector.broadcast %cst_129 : f32 to vector<16x128xf32>
    %486 = arith.addf %485, %484 : vector<16x128xf32>
    %487 = arith.divf %485, %486 : vector<16x128xf32>
    %488 = vector.extract_strided_slice %461 {offsets = [80, 0], sizes = [16, 128], strides = [1, 1]} : vector<128x128xf32> to vector<16x128xf32>
    %489 = arith.negf %488 : vector<16x128xf32>
    %490 = math.exp %489 : vector<16x128xf32>
    %cst_130 = arith.constant 1.000000e+00 : f32
    %491 = vector.broadcast %cst_130 : f32 to vector<16x128xf32>
    %492 = arith.addf %491, %490 : vector<16x128xf32>
    %493 = arith.divf %491, %492 : vector<16x128xf32>
    %494 = vector.extract_strided_slice %461 {offsets = [96, 0], sizes = [16, 128], strides = [1, 1]} : vector<128x128xf32> to vector<16x128xf32>
    %495 = math.tanh %494 : vector<16x128xf32>
    %496 = vector.extract_strided_slice %461 {offsets = [112, 0], sizes = [16, 128], strides = [1, 1]} : vector<128x128xf32> to vector<16x128xf32>
    %497 = arith.negf %496 : vector<16x128xf32>
    %498 = math.exp %497 : vector<16x128xf32>
    %cst_131 = arith.constant 1.000000e+00 : f32
    %499 = vector.broadcast %cst_131 : f32 to vector<16x128xf32>
    %500 = arith.addf %499, %498 : vector<16x128xf32>
    %501 = arith.divf %499, %500 : vector<16x128xf32>
    %502 = vector.extract_strided_slice %453 {offsets = [0, 0], sizes = [16, 128], strides = [1, 1]} : vector<32x128xf32> to vector<16x128xf32>
    %503 = arith.mulf %473, %502 : vector<16x128xf32>
    %504 = arith.mulf %467, %475 : vector<16x128xf32>
    %505 = arith.addf %503, %504 : vector<16x128xf32>
    %506 = vector.extract_strided_slice %453 {offsets = [16, 0], sizes = [16, 128], strides = [1, 1]} : vector<32x128xf32> to vector<16x128xf32>
    %507 = arith.mulf %493, %506 : vector<16x128xf32>
    %508 = arith.mulf %487, %495 : vector<16x128xf32>
    %509 = arith.addf %507, %508 : vector<16x128xf32>
    %510 = math.tanh %505 : vector<16x128xf32>
    %511 = arith.mulf %481, %510 : vector<16x128xf32>
    %512 = math.tanh %509 : vector<16x128xf32>
    %513 = arith.mulf %501, %512 : vector<16x128xf32>
    %514 = tpu.concatenate %511, %513 in 0 : vector<16x128xf32>, vector<16x128xf32> -> vector<32x128xf32>
    %515 = tpu.concatenate %505, %509 in 0 : vector<16x128xf32>, vector<16x128xf32> -> vector<32x128xf32>
    %c7_i32 = arith.constant 7 : i32
    %c0_132 = arith.constant 0 : index
    %c0_133 = arith.constant 0 : index
    %516 = vector.load %arg6[%c0_132, %c0_133] : memref<32x16xbf16, #tpu.memory_space<vmem>>, vector<32x16xbf16>
    %c0_134 = arith.constant 0 : index
    %c0_135 = arith.constant 0 : index
    %517 = vector.load %arg1[%c0_134, %c0_135] : memref<128x16xbf16, #tpu.memory_space<vmem>>, vector<128x16xbf16>
    %cst_136 = arith.constant dense<0.000000e+00> : vector<32x128xf32>
    %518 = tpu.matmul %516, %517, %cst_136 {dimension_numbers = #tpu.dot_dimension_numbers<[1], [1], [0], [0], [0, 0, 1, 0], [], []>} : vector<32x16xbf16>, vector<128x16xbf16>, vector<32x128xf32> -> vector<32x128xf32>
    %c0_137 = arith.constant 0 : index
    %c0_138 = arith.constant 0 : index
    %519 = vector.load %arg7[%c0_137, %c0_138] : memref<32x16xbf16, #tpu.memory_space<vmem>>, vector<32x16xbf16>
    %520 = vector.extract_strided_slice %514 {offsets = [0, 0], sizes = [16, 128], strides = [1, 1]} : vector<32x128xf32> to vector<16x128xf32>
    %521 = arith.truncf %520 : vector<16x128xf32> to vector<16x128xbf16>
    %cst_139 = arith.constant dense<0.000000e+00> : vector<32x128xf32>
    %522 = tpu.matmul %519, %521, %cst_139 {dimension_numbers = #tpu.dot_dimension_numbers<[1], [0], [0], [1], [0, 0, 1, 1], [], []>} : vector<32x16xbf16>, vector<16x128xbf16>, vector<32x128xf32> -> vector<32x128xf32>
    %523 = arith.addf %518, %522 : vector<32x128xf32>
    %c0_140 = arith.constant 0 : index
    %c0_141 = arith.constant 0 : index
    %524 = vector.load %arg8[%c0_140, %c0_141] : memref<32x16xbf16, #tpu.memory_space<vmem>>, vector<32x16xbf16>
    %525 = vector.extract_strided_slice %514 {offsets = [16, 0], sizes = [16, 128], strides = [1, 1]} : vector<32x128xf32> to vector<16x128xf32>
    %526 = arith.truncf %525 : vector<16x128xf32> to vector<16x128xbf16>
    %cst_142 = arith.constant dense<0.000000e+00> : vector<32x128xf32>
    %527 = tpu.matmul %524, %526, %cst_142 {dimension_numbers = #tpu.dot_dimension_numbers<[1], [0], [0], [1], [0, 0, 1, 1], [], []>} : vector<32x16xbf16>, vector<16x128xbf16>, vector<32x128xf32> -> vector<32x128xf32>
    %528 = arith.addf %523, %527 : vector<32x128xf32>
    %c0_143 = arith.constant 0 : index
    %c0_144 = arith.constant 0 : index
    %529 = vector.load %arg9[%c0_143, %c0_144] : memref<32x1xf32, #tpu.memory_space<vmem>>, vector<32x1xf32>
    %530 = vector.broadcast %529 : vector<32x1xf32> to vector<32x128xf32>
    %531 = arith.addf %528, %530 : vector<32x128xf32>
    %c0_145 = arith.constant 0 : index
    %c0_146 = arith.constant 0 : index
    %532 = vector.load %arg10[%c0_145, %c0_146] : memref<32x128xf32, #tpu.memory_space<vmem>>, vector<32x128xf32>
    tpu.vector_store %arg10[%c0_145, %c0_146], %531 {strides = array<i32>} : memref<32x128xf32, #tpu.memory_space<vmem>>, vector<32x128xf32>,
    return
  }
  func.func @transform_0(%arg0: i32) -> (i32, i32) {
    %c0_i32 = arith.constant 0 : i32
    %c0_i32_0 = arith.constant 0 : i32
    return %arg0, %c0_i32 : i32, i32
  }
  func.func @transform_1(%arg0: i32) -> (i32, i32, i32) {
    %c0_i32 = arith.constant 0 : i32
    %c0_i32_0 = arith.constant 0 : i32
    %c0_i32_1 = arith.constant 0 : i32
    return %c0_i32, %arg0, %c0_i32_0 : i32, i32, i32
  }
  func.func @transform_2(%arg0: i32) -> (i32, i32) {
    %c0_i32 = arith.constant 0 : i32
    %c0_i32_0 = arith.constant 0 : i32
    %c0_i32_1 = arith.constant 0 : i32
    return %c0_i32, %c0_i32_0 : i32, i32
  }
  func.func @transform_3(%arg0: i32) -> (i32, i32) {
    %c0_i32 = arith.constant 0 : i32
    %c0_i32_0 = arith.constant 0 : i32
    %c0_i32_1 = arith.constant 0 : i32
    return %c0_i32, %c0_i32_0 : i32, i32
  }
  func.func @transform_4(%arg0: i32) -> (i32, i32) {
    %c0_i32 = arith.constant 0 : i32
    %c0_i32_0 = arith.constant 0 : i32
    %c0_i32_1 = arith.constant 0 : i32
    return %c0_i32, %c0_i32_0 : i32, i32
  }
  func.func @transform_5(%arg0: i32) -> (i32, i32) {
    %c0_i32 = arith.constant 0 : i32
    %c0_i32_0 = arith.constant 0 : i32
    %c0_i32_1 = arith.constant 0 : i32
    return %c0_i32, %c0_i32_0 : i32, i32
  }
  func.func @transform_6(%arg0: i32) -> (i32, i32) {
    %c0_i32 = arith.constant 0 : i32
    %c0_i32_0 = arith.constant 0 : i32
    %c0_i32_1 = arith.constant 0 : i32
    return %c0_i32, %c0_i32_0 : i32, i32
  }
  func.func @transform_7(%arg0: i32) -> (i32, i32) {
    %c0_i32 = arith.constant 0 : i32
    %c0_i32_0 = arith.constant 0 : i32
    %c0_i32_1 = arith.constant 0 : i32
    return %c0_i32, %c0_i32_0 : i32, i32
  }
  func.func @transform_8(%arg0: i32) -> (i32, i32) {
    %c0_i32 = arith.constant 0 : i32
    %c0_i32_0 = arith.constant 0 : i32
    %c0_i32_1 = arith.constant 0 : i32
    return %c0_i32, %c0_i32_0 : i32, i32
  }
  func.func @transform_9(%arg0: i32) -> (i32, i32) {
    %c0_i32 = arith.constant 0 : i32
    %c0_i32_0 = arith.constant 0 : i32
    return %c0_i32, %arg0 : i32, i32
  }
}

</mosaic_0001>

<llo_original>
// kernel: tpu_custom_call.1
$region0: #{tpu_custom_call.1}
  #allocation0 [shape = 'u32[]', space=smem, size = 0x4, offset = 0x4, fixed_abs, tag = 'smem constant byte address 0x4 - core index']
  #allocation1 [shape = 'u32[144,128]{1,0:T(1,128)}', space=vmem, size = 0x12000, scoped, tag = 'internal scratch']
  #allocation2 [shape = 'f32[7,128,128]{2,1,0:T(8,128)}', space=vmem, size = 0x70000, scoped, tag = 'scratch operand']
  %s0 = inlined_call_operand.vmem [shape: bf16[128,16], index: 0, kind: input, shape index: {}]
  %s1 = inlined_call_operand.vmem [shape: bf16[7,128,16], index: 1, kind: input, shape index: {}]
  %s2 = inlined_call_operand.vmem [shape: bf16[128,16], index: 2, kind: input, shape index: {}]
  %s3 = inlined_call_operand.vmem [shape: bf16[128,32], index: 3, kind: input, shape index: {}]
  %s4 = inlined_call_operand.vmem [shape: f32[128,1], index: 4, kind: input, shape index: {}]
  %s5 = inlined_call_operand.vmem [shape: bf16[32,16], index: 5, kind: input, shape index: {}]
  %s6 = inlined_call_operand.vmem [shape: bf16[32,16], index: 6, kind: input, shape index: {}]
  %s7 = inlined_call_operand.vmem [shape: bf16[32,16], index: 7, kind: input, shape index: {}]
  %s8 = inlined_call_operand.vmem [shape: f32[32,1], index: 8, kind: input, shape index: {}]
  %s9 = inlined_call_operand.hbm [shape: f32[32,128], index: 9, kind: output, shape index: {}]
  %s10 = sld [smem:[#allocation0]]
  $region46: #{tpu_custom_call.1} parent=0
    _
  %s12 = ssub.s32 1, %s10
  %s13 = scalar_select 0, %s12, %s10
  $region1: #{tpu_custom_call.1} parent=0
    #allocation3 [shape = 'u8[16384]{0}', space=vmem, size = 0x4000, scoped, tag = 'output window, operand 0, single buffered']
    #allocation4 [shape = 's32[1]{0}', space=sflag, size = 0x4, scoped, tag = 'scoped memory for tpu_custom_call.1']
    %14 = vsyncpa [#allocation4], 0
    // Predicated region
    $region2: #{tpu_custom_call.1} parent=1 // pred_check
      _
    $region3: #{tpu_custom_call.1} parent=1 // pred_check_branch
      %16 = sbr.rel (0) target = $region5
    $region4: #{tpu_custom_call.1} parent=1 // pred_region
      _
    $region5: #{tpu_custom_call.1} parent=1 // pred_fallthru
      _
    // Predicated region
    $region6: #{tpu_custom_call.1} parent=1 // pred_check
      _
    $region7: #{tpu_custom_call.1} parent=1 // pred_check_branch
      %18 = sbr.rel (0) target = $region9
    $region8: #{tpu_custom_call.1} parent=1 // pred_region
      _
    $region9: #{tpu_custom_call.1} parent=1 // pred_fallthru
      _
    // Predicated region
    $region10: #{tpu_custom_call.1} parent=1 // pred_check
      _
    $region11: #{tpu_custom_call.1} parent=1 // pred_check_branch
      %20 = sbr.rel (0) target = $region13
    $region12: #{tpu_custom_call.1} parent=1 // pred_region
      _
    $region13: #{tpu_custom_call.1} parent=1 // pred_fallthru
      _
    // Predicated region
    $region14: #{tpu_custom_call.1} parent=1 // pred_check
      _
    $region15: #{tpu_custom_call.1} parent=1 // pred_check_branch
      %22 = sbr.rel (0) target = $region17
    $region16: #{tpu_custom_call.1} parent=1 // pred_region
      _
    $region17: #{tpu_custom_call.1} parent=1 // pred_fallthru
      _
    // Predicated region
    $region18: #{tpu_custom_call.1} parent=1 // pred_check
      _
    $region19: #{tpu_custom_call.1} parent=1 // pred_check_branch
      %24 = sbr.rel (0) target = $region21
    $region20: #{tpu_custom_call.1} parent=1 // pred_region
      _
    $region21: #{tpu_custom_call.1} parent=1 // pred_fallthru
      _
    // Predicated region
    $region22: #{tpu_custom_call.1} parent=1 // pred_check
      _
    $region23: #{tpu_custom_call.1} parent=1 // pred_check_branch
      %26 = sbr.rel (0) target = $region25
    $region24: #{tpu_custom_call.1} parent=1 // pred_region
      _
    $region25: #{tpu_custom_call.1} parent=1 // pred_fallthru
      _
    // Predicated region
    $region26: #{tpu_custom_call.1} parent=1 // pred_check
      _
    $region27: #{tpu_custom_call.1} parent=1 // pred_check_branch
      %28 = sbr.rel (0) target = $region29
    $region28: #{tpu_custom_call.1} parent=1 // pred_region
      _
    $region29: #{tpu_custom_call.1} parent=1 // pred_fallthru
      _
    // Predicated region
    $region30: #{tpu_custom_call.1} parent=1 // pred_check
      _
    $region31: #{tpu_custom_call.1} parent=1 // pred_check_branch
      %30 = sbr.rel (0) target = $region33
    $region32: #{tpu_custom_call.1} parent=1 // pred_region
      _
    $region33: #{tpu_custom_call.1} parent=1 // pred_fallthru
      _
    // Predicated region
    $region34: #{tpu_custom_call.1} parent=1 // pred_check
      _
    $region35: #{tpu_custom_call.1} parent=1 // pred_check_branch
      %32 = sbr.rel (0) target = $region37
    $region36: #{tpu_custom_call.1} parent=1 // pred_region
      _
    $region37: #{tpu_custom_call.1} parent=1 // pred_fallthru
      _
    %v34 = vld [vmem:[%s2] sm:$0xf]
    %v35 = vld [vmem:[%s2 + $0x4] sm:$0xf]
    %v36 = vld [vmem:[%s2 + $0x8] sm:$0xf]
    %v37 = vld [vmem:[%s2 + $0xc] sm:$0xf]
    %v38 = vld [vmem:[%s2 + $0x10] sm:$0xf]
    %v39 = vld [vmem:[%s2 + $0x14] sm:$0xf]
    %v40 = vld [vmem:[%s2 + $0x18] sm:$0xf]
    %v41 = vld [vmem:[%s2 + $0x1c] sm:$0xf]
    %v42 = vld [vmem:[%s2 + $0x20] sm:$0xf]
    %v43 = vld [vmem:[%s2 + $0x24] sm:$0xf]
    %v44 = vld [vmem:[%s2 + $0x28] sm:$0xf]
    %v45 = vld [vmem:[%s2 + $0x2c] sm:$0xf]
    %v46 = vld [vmem:[%s2 + $0x30] sm:$0xf]
    %v47 = vld [vmem:[%s2 + $0x34] sm:$0xf]
    %v48 = vld [vmem:[%s2 + $0x38] sm:$0xf]
    %v49 = vld [vmem:[%s2 + $0x3c] sm:$0xf]
    %v50 = vld [vmem:[%s3] sm:$0xf]
    %v51 = vld [vmem:[%s3 + $0x4] sm:$0xf]
    %v52 = vld [vmem:[%s3 + $0x8] sm:$0xf]
    %v53 = vld [vmem:[%s3 + $0xc] sm:$0xf]
    %v54 = vld [vmem:[%s3 + $0x10] sm:$0xf]
    %v55 = vld [vmem:[%s3 + $0x14] sm:$0xf]
    %v56 = vld [vmem:[%s3 + $0x18] sm:$0xf]
    %v57 = vld [vmem:[%s3 + $0x1c] sm:$0xf]
    %v58 = vld [vmem:[%s3 + $0x20] sm:$0xf]
    %v59 = vld [vmem:[%s3 + $0x24] sm:$0xf]
    %v60 = vld [vmem:[%s3 + $0x28] sm:$0xf]
    %v61 = vld [vmem:[%s3 + $0x2c] sm:$0xf]
    %v62 = vld [vmem:[%s3 + $0x30] sm:$0xf]
    %v63 = vld [vmem:[%s3 + $0x34] sm:$0xf]
    %v64 = vld [vmem:[%s3 + $0x38] sm:$0xf]
    %v65 = vld [vmem:[%s3 + $0x3c] sm:$0xf]
    %v66 = vld [vmem:[%s4] sm:$0xff]
    %v67 = vld [vmem:[%s4 + $0x8] sm:$0xff]
    %v68 = vld [vmem:[%s4 + $0x10] sm:$0xff]
    %v69 = vld [vmem:[%s4 + $0x18] sm:$0xff]
    %v70 = vld [vmem:[%s4 + $0x20] sm:$0xff]
    %v71 = vld [vmem:[%s4 + $0x28] sm:$0xff]
    %v72 = vld [vmem:[%s4 + $0x30] sm:$0xff]
    %v73 = vld [vmem:[%s4 + $0x38] sm:$0xff]
    %v74 = vld [vmem:[%s4 + $0x40] sm:$0xff]
    %v75 = vld [vmem:[%s4 + $0x48] sm:$0xff]
    %v76 = vld [vmem:[%s4 + $0x50] sm:$0xff]
    %v77 = vld [vmem:[%s4 + $0x58] sm:$0xff]
    %v78 = vld [vmem:[%s4 + $0x60] sm:$0xff]
    %v79 = vld [vmem:[%s4 + $0x68] sm:$0xff]
    %v80 = vld [vmem:[%s4 + $0x70] sm:$0xff]
    %v81 = vld [vmem:[%s4 + $0x78] sm:$0xff]
    %v82 = vld [vmem:[%s1] sm:$0xf]
    %v83 = vld [vmem:[%s1 + $0x4] sm:$0xf]
    %v84 = vld [vmem:[%s1 + $0x8] sm:$0xf]
    %v85 = vld [vmem:[%s1 + $0xc] sm:$0xf]
    %v86 = vld [vmem:[%s1 + $0x10] sm:$0xf]
    %v87 = vld [vmem:[%s1 + $0x14] sm:$0xf]
    %v88 = vld [vmem:[%s1 + $0x18] sm:$0xf]
    %v89 = vld [vmem:[%s1 + $0x1c] sm:$0xf]
    %v90 = vld [vmem:[%s1 + $0x20] sm:$0xf]
    %v91 = vld [vmem:[%s1 + $0x24] sm:$0xf]
    %v92 = vld [vmem:[%s1 + $0x28] sm:$0xf]
    %v93 = vld [vmem:[%s1 + $0x2c] sm:$0xf]
    %v94 = vld [vmem:[%s1 + $0x30] sm:$0xf]
    %v95 = vld [vmem:[%s1 + $0x34] sm:$0xf]
    %v96 = vld [vmem:[%s1 + $0x38] sm:$0xf]
    %v97 = vld [vmem:[%s1 + $0x3c] sm:$0xf]
    %v114 = vunpack.c.l.b16 %v34
    %v115 = vunpack.c.l.b16 %v35
    %v116 = vunpack.c.l.b16 %v36
    %v117 = vunpack.c.l.b16 %v37
    %v118 = vunpack.c.l.b16 %v38
    %v119 = vunpack.c.l.b16 %v39
    %v120 = vunpack.c.l.b16 %v40
    %v121 = vunpack.c.l.b16 %v41
    %v122 = vunpack.c.l.b16 %v42
    %v123 = vunpack.c.l.b16 %v43
    %v124 = vunpack.c.l.b16 %v44
    %v125 = vunpack.c.l.b16 %v45
    %v126 = vunpack.c.l.b16 %v46
    %v127 = vunpack.c.l.b16 %v47
    %v128 = vunpack.c.l.b16 %v48
    %v129 = vunpack.c.l.b16 %v49
    %v130 = vpack.c.b16 %v115, %v114
    %v131 = vpack.c.b16 %v117, %v116
    %v132 = vpack.c.b16 %v119, %v118
    %v133 = vpack.c.b16 %v121, %v120
    %v134 = vpack.c.b16 %v123, %v122
    %v135 = vpack.c.b16 %v125, %v124
    %v136 = vpack.c.b16 %v127, %v126
    %v137 = vpack.c.b16 %v129, %v128
    %v154 = vunpack.c.l.b16 %v82
    %v155 = vunpack.c.l.b16 %v83
    %v156 = vunpack.c.l.b16 %v84
    %v157 = vunpack.c.l.b16 %v85
    %v158 = vunpack.c.l.b16 %v86
    %v159 = vunpack.c.l.b16 %v87
    %v160 = vunpack.c.l.b16 %v88
    %v161 = vunpack.c.l.b16 %v89
    %v162 = vunpack.c.l.b16 %v90
    %v163 = vunpack.c.l.b16 %v91
    %v164 = vunpack.c.l.b16 %v92
    %v165 = vunpack.c.l.b16 %v93
    %v166 = vunpack.c.l.b16 %v94
    %v167 = vunpack.c.l.b16 %v95
    %v168 = vunpack.c.l.b16 %v96
    %v169 = vunpack.c.l.b16 %v97
    %v170 = vpack.c.b16 %v155, %v154
    %v171 = vpack.c.b16 %v157, %v156
    %v172 = vpack.c.b16 %v159, %v158
    %v173 = vpack.c.b16 %v161, %v160
    %v174 = vpack.c.b16 %v163, %v162
    %v175 = vpack.c.b16 %v165, %v164
    %v176 = vpack.c.b16 %v167, %v166
    %v177 = vpack.c.b16 %v169, %v168
    %vm178 = vcmask 130048
    %v180 = vsel %vm178, %v130, 0
    %v183 = vsel %vm178, %v131, 0
    %v186 = vsel %vm178, %v132, 0
    %v189 = vsel %vm178, %v133, 0
    %v192 = vsel %vm178, %v134, 0
    %v195 = vsel %vm178, %v135, 0
    %v198 = vsel %vm178, %v136, 0
    %v201 = vsel %vm178, %v137, 0
    %v204 = vsel %vm178, %v170, 0
    %v207 = vsel %vm178, %v171, 0
    %v210 = vsel %vm178, %v172, 0
    %v213 = vsel %vm178, %v173, 0
    %v216 = vsel %vm178, %v174, 0
    %v219 = vsel %vm178, %v175, 0
    %v222 = vsel %vm178, %v176, 0
    %v225 = vsel %vm178, %v177, 0
    %227 = vmatprep.subr.bf16.mxu0 0
    %228 = vmatpush1.bf16.xpose.msra.mxu0 %v225
    %229 = vmatprep.subr.bf16.mxu0 0
    %230 = vmatpush1.bf16.xpose.msra.mxu0 %v222
    %231 = vmatprep.subr.bf16.mxu0 0
    %232 = vmatpush1.bf16.xpose.msra.mxu0 %v219
    %233 = vmatprep.subr.bf16.mxu0 0
    %234 = vmatpush1.bf16.xpose.msra.mxu0 %v216
    %235 = vmatprep.subr.bf16.mxu0 0
    %236 = vmatpush1.bf16.xpose.msra.mxu0 %v213
    %237 = vmatprep.subr.bf16.mxu0 0
    %238 = vmatpush1.bf16.xpose.msra.mxu0 %v210
    %239 = vmatprep.subr.bf16.mxu0 0
    %240 = vmatpush1.bf16.xpose.msra.mxu0 %v207
    %241 = vmatprep.subr.bf16.mxu0 0
    %242 = vmatpush1.bf16.xpose.msra.mxu0 %v204
    %243 = vmatprep.subr.bf16.mxu0 0
    %244 = vmatpush2.bf16.xpose.msra.mxu0 0
    %245 = vmatprep.subr.bf16.mxu0 0
    %246 = vmatpush2.bf16.xpose.msra.mxu0 0
    %247 = vmatprep.subr.bf16.mxu0 0
    %248 = vmatpush2.bf16.xpose.msra.mxu0 0
    %249 = vmatprep.subr.bf16.mxu0 0
    %250 = vmatpush2.bf16.xpose.msra.mxu0 0
    %251 = vmatprep.subr.bf16.mxu0 0
    %252 = vmatpush2.bf16.xpose.msra.mxu0 0
    %253 = vmatprep.subr.bf16.mxu0 0
    %254 = vmatpush2.bf16.xpose.msra.mxu0 0
    %255 = vmatprep.subr.bf16.mxu0 0
    %256 = vmatpush2.bf16.xpose.msra.mxu0 0
    %257 = vmatprep.subr.bf16.mxu0 0
    %258 = vmatpush2.bf16.xpose.msra.mxu0 0
    %259 = vmatprep.mubr.bf16.mxu0 0
    %260 = vmatmul.mubr.bf16.gmra.mxu0 %v180
    %v261 = vpop.f32.mrf.mxu0
    %v262 = vadd.f32 0.0, %v261
    %v263 = vpop.f32.mrf.mxu0
    %v264 = vpop.f32.mrf.mxu0
    %v265 = vadd.f32 0.0, %v264
    %v266 = vpop.f32.mrf.mxu0
    %267 = vmatprep.mubr.bf16.mxu0 0
    %268 = vmatmul.mubr.bf16.gmra.mxu0 %v183
    %v269 = vpop.f32.mrf.mxu0
    %v270 = vadd.f32 0.0, %v269
    %v271 = vpop.f32.mrf.mxu0
    %v272 = vpop.f32.mrf.mxu0
    %v273 = vadd.f32 0.0, %v272
    %v274 = vpop.f32.mrf.mxu0
    %275 = vmatprep.mubr.bf16.mxu0 0
    %276 = vmatmul.mubr.bf16.gmra.mxu0 %v186
    %v277 = vpop.f32.mrf.mxu0
    %v278 = vadd.f32 0.0, %v277
    %v279 = vpop.f32.mrf.mxu0
    %v280 = vpop.f32.mrf.mxu0
    %v281 = vadd.f32 0.0, %v280
    %v282 = vpop.f32.mrf.mxu0
    %283 = vmatprep.mubr.bf16.mxu0 0
    %284 = vmatmul.mubr.bf16.gmra.mxu0 %v189
    %v285 = vpop.f32.mrf.mxu0
    %v286 = vadd.f32 0.0, %v285
    %v287 = vpop.f32.mrf.mxu0
    %v288 = vpop.f32.mrf.mxu0
    %v289 = vadd.f32 0.0, %v288
    %v290 = vpop.f32.mrf.mxu0
    %291 = vmatprep.mubr.bf16.mxu0 0
    %292 = vmatmul.mubr.bf16.gmra.mxu0 %v192
    %v293 = vpop.f32.mrf.mxu0
    %v294 = vadd.f32 0.0, %v293
    %v295 = vpop.f32.mrf.mxu0
    %v296 = vpop.f32.mrf.mxu0
    %v297 = vadd.f32 0.0, %v296
    %v298 = vpop.f32.mrf.mxu0
    %299 = vmatprep.mubr.bf16.mxu0 0
    %300 = vmatmul.mubr.bf16.gmra.mxu0 %v195
    %v301 = vpop.f32.mrf.mxu0
    %v302 = vadd.f32 0.0, %v301
    %v303 = vpop.f32.mrf.mxu0
    %v304 = vpop.f32.mrf.mxu0
    %v305 = vadd.f32 0.0, %v304
    %v306 = vpop.f32.mrf.mxu0
    %307 = vmatprep.mubr.bf16.mxu0 0
    %308 = vmatmul.mubr.bf16.gmra.mxu0 %v198
    %v309 = vpop.f32.mrf.mxu0
    %v310 = vadd.f32 0.0, %v309
    %v311 = vpop.f32.mrf.mxu0
    %v312 = vpop.f32.mrf.mxu0
    %v313 = vadd.f32 0.0, %v312
    %v314 = vpop.f32.mrf.mxu0
    %315 = vmatprep.mubr.bf16.mxu0 0
    %316 = vmatmul.mubr.bf16.gmra.mxu0 %v201
    %v317 = vpop.f32.mrf.mxu0
    %v318 = vadd.f32 0.0, %v317
    %v319 = vpop.f32.mrf.mxu0
    %v320 = vpop.f32.mrf.mxu0
    %v321 = vadd.f32 0.0, %v320
    %v322 = vpop.f32.mrf.mxu0
    %323 = vdwg.mxu0
    %324 = vst [vmem:[#allocation2] sm:$0xff] %v262
    %325 = vst [vmem:[#allocation2 + $0x8] sm:$0xff] %v265
    %326 = vst [vmem:[#allocation2 + $0x10] sm:$0xff] %v270
    %327 = vst [vmem:[#allocation2 + $0x18] sm:$0xff] %v273
    %328 = vst [vmem:[#allocation2 + $0x20] sm:$0xff] %v278
    %329 = vst [vmem:[#allocation2 + $0x28] sm:$0xff] %v281
    %330 = vst [vmem:[#allocation2 + $0x30] sm:$0xff] %v286
    %331 = vst [vmem:[#allocation2 + $0x38] sm:$0xff] %v289
    %s332 = scalar_lea.vmem [#allocation2], 768
    %333 = vst [vmem:[%s332 + $0x40] sm:$0xff] %v294
    %334 = vst [vmem:[%s332 + $0x48] sm:$0xff] %v297
    %335 = vst [vmem:[%s332 + $0x50] sm:$0xff] %v302
    %336 = vst [vmem:[%s332 + $0x58] sm:$0xff] %v305
    %337 = vst [vmem:[%s332 + $0x60] sm:$0xff] %v310
    %338 = vst [vmem:[%s332 + $0x68] sm:$0xff] %v313
    %339 = vst [vmem:[%s332 + $0x70] sm:$0xff] %v318
    %340 = vst [vmem:[%s332 + $0x78] sm:$0xff] %v321
    %s341 = scalar_lea.vmem %s1, 64
    %v342 = vld [vmem:[%s341] sm:$0xf]
    %v343 = vld [vmem:[%s341 + $0x4] sm:$0xf]
    %v344 = vld [vmem:[%s341 + $0x8] sm:$0xf]
    %v345 = vld [vmem:[%s341 + $0xc] sm:$0xf]
    %v346 = vld [vmem:[%s341 + $0x10] sm:$0xf]
    %v347 = vld [vmem:[%s341 + $0x14] sm:$0xf]
    %v348 = vld [vmem:[%s341 + $0x18] sm:$0xf]
    %v349 = vld [vmem:[%s341 + $0x1c] sm:$0xf]
    %v350 = vld [vmem:[%s341 + $0x20] sm:$0xf]
    %v351 = vld [vmem:[%s341 + $0x24] sm:$0xf]
    %v352 = vld [vmem:[%s341 + $0x28] sm:$0xf]
    %v353 = vld [vmem:[%s341 + $0x2c] sm:$0xf]
    %v354 = vld [vmem:[%s341 + $0x30] sm:$0xf]
    %v355 = vld [vmem:[%s341 + $0x34] sm:$0xf]
    %v356 = vld [vmem:[%s341 + $0x38] sm:$0xf]
    %v357 = vld [vmem:[%s341 + $0x3c] sm:$0xf]
    %v374 = vunpack.c.l.b16 %v342
    %v375 = vunpack.c.l.b16 %v343
    %v376 = vunpack.c.l.b16 %v344
    %v377 = vunpack.c.l.b16 %v345
    %v378 = vunpack.c.l.b16 %v346
    %v379 = vunpack.c.l.b16 %v347
    %v380 = vunpack.c.l.b16 %v348
    %v381 = vunpack.c.l.b16 %v349
    %v382 = vunpack.c.l.b16 %v350
    %v383 = vunpack.c.l.b16 %v351
    %v384 = vunpack.c.l.b16 %v352
    %v385 = vunpack.c.l.b16 %v353
    %v386 = vunpack.c.l.b16 %v354
    %v387 = vunpack.c.l.b16 %v355
    %v388 = vunpack.c.l.b16 %v356
    %v389 = vunpack.c.l.b16 %v357
    %v390 = vpack.c.b16 %v375, %v374
    %v391 = vpack.c.b16 %v377, %v376
    %v392 = vpack.c.b16 %v379, %v378
    %v393 = vpack.c.b16 %v381, %v380
    %v394 = vpack.c.b16 %v383, %v382
    %v395 = vpack.c.b16 %v385, %v384
    %v396 = vpack.c.b16 %v387, %v386
    %v397 = vpack.c.b16 %v389, %v388
    %v399 = vsel %vm178, %v390, 0
    %v402 = vsel %vm178, %v391, 0
    %v405 = vsel %vm178, %v392, 0
    %v408 = vsel %vm178, %v393, 0
    %v411 = vsel %vm178, %v394, 0
    %v414 = vsel %vm178, %v395, 0
    %v417 = vsel %vm178, %v396, 0
    %v420 = vsel %vm178, %v397, 0
    %422 = vmatprep.subr.bf16.mxu0 0
    %423 = vmatpush1.bf16.xpose.msra.mxu0 %v420
    %424 = vmatprep.subr.bf16.mxu0 0
    %425 = vmatpush1.bf16.xpose.msra.mxu0 %v417
    %426 = vmatprep.subr.bf16.mxu0 0
    %427 = vmatpush1.bf16.xpose.msra.mxu0 %v414
    %428 = vmatprep.subr.bf16.mxu0 0
    %429 = vmatpush1.bf16.xpose.msra.mxu0 %v411
    %430 = vmatprep.subr.bf16.mxu0 0
    %431 = vmatpush1.bf16.xpose.msra.mxu0 %v408
    %432 = vmatprep.subr.bf16.mxu0 0
    %433 = vmatpush1.bf16.xpose.msra.mxu0 %v405
    %434 = vmatprep.subr.bf16.mxu0 0
    %435 = vmatpush1.bf16.xpose.msra.mxu0 %v402
    %436 = vmatprep.subr.bf16.mxu0 0
    %437 = vmatpush1.bf16.xpose.msra.mxu0 %v399
    %438 = vmatprep.subr.bf16.mxu0 0
    %439 = vmatpush2.bf16.xpose.msra.mxu0 0
    %440 = vmatprep.subr.bf16.mxu0 0
    %441 = vmatpush2.bf16.xpose.msra.mxu0 0
    %442 = vmatprep.subr.bf16.mxu0 0
    %443 = vmatpush2.bf16.xpose.msra.mxu0 0
    %444 = vmatprep.subr.bf16.mxu0 0
    %445 = vmatpush2.bf16.xpose.msra.mxu0 0
    %446 = vmatprep.subr.bf16.mxu0 0
    %447 = vmatpush2.bf16.xpose.msra.mxu0 0
    %448 = vmatprep.subr.bf16.mxu0 0
    %449 = vmatpush2.bf16.xpose.msra.mxu0 0
    %450 = vmatprep.subr.bf16.mxu0 0
    %451 = vmatpush2.bf16.xpose.msra.mxu0 0
    %452 = vmatprep.subr.bf16.mxu0 0
    %453 = vmatpush2.bf16.xpose.msra.mxu0 0
    %454 = vmatprep.mubr.bf16.mxu0 0
    %455 = vmatmul.mubr.bf16.gmra.mxu0 %v180
    %v456 = vpop.f32.mrf.mxu0
    %v457 = vadd.f32 0.0, %v456
    %v458 = vpop.f32.mrf.mxu0
    %v459 = vpop.f32.mrf.mxu0
    %v460 = vadd.f32 0.0, %v459
    %v461 = vpop.f32.mrf.mxu0
    %462 = vmatprep.mubr.bf16.mxu0 0
    %463 = vmatmul.mubr.bf16.gmra.mxu0 %v183
    %v464 = vpop.f32.mrf.mxu0
    %v465 = vadd.f32 0.0, %v464
    %v466 = vpop.f32.mrf.mxu0
    %v467 = vpop.f32.mrf.mxu0
    %v468 = vadd.f32 0.0, %v467
    %v469 = vpop.f32.mrf.mxu0
    %470 = vmatprep.mubr.bf16.mxu0 0
    %471 = vmatmul.mubr.bf16.gmra.mxu0 %v186
    %v472 = vpop.f32.mrf.mxu0
    %v473 = vadd.f32 0.0, %v472
    %v474 = vpop.f32.mrf.mxu0
    %v475 = vpop.f32.mrf.mxu0
    %v476 = vadd.f32 0.0, %v475
    %v477 = vpop.f32.mrf.mxu0
    %478 = vmatprep.mubr.bf16.mxu0 0
    %479 = vmatmul.mubr.bf16.gmra.mxu0 %v189
    %v480 = vpop.f32.mrf.mxu0
    %v481 = vadd.f32 0.0, %v480
    %v482 = vpop.f32.mrf.mxu0
    %v483 = vpop.f32.mrf.mxu0
    %v484 = vadd.f32 0.0, %v483
    %v485 = vpop.f32.mrf.mxu0
    %486 = vmatprep.mubr.bf16.mxu0 0
    %487 = vmatmul.mubr.bf16.gmra.mxu0 %v192
    %v488 = vpop.f32.mrf.mxu0
    %v489 = vadd.f32 0.0, %v488
    %v490 = vpop.f32.mrf.mxu0
    %v491 = vpop.f32.mrf.mxu0
    %v492 = vadd.f32 0.0, %v491
    %v493 = vpop.f32.mrf.mxu0
    %494 = vmatprep.mubr.bf16.mxu0 0
    %495 = vmatmul.mubr.bf16.gmra.mxu0 %v195
    %v496 = vpop.f32.mrf.mxu0
    %v497 = vadd.f32 0.0, %v496
    %v498 = vpop.f32.mrf.mxu0
    %v499 = vpop.f32.mrf.mxu0
    %v500 = vadd.f32 0.0, %v499
    %v501 = vpop.f32.mrf.mxu0
    %502 = vmatprep.mubr.bf16.mxu0 0
    %503 = vmatmul.mubr.bf16.gmra.mxu0 %v198
    %v504 = vpop.f32.mrf.mxu0
    %v505 = vadd.f32 0.0, %v504
    %v506 = vpop.f32.mrf.mxu0
    %v507 = vpop.f32.mrf.mxu0
    %v508 = vadd.f32 0.0, %v507
    %v509 = vpop.f32.mrf.mxu0
    %510 = vmatprep.mubr.bf16.mxu0 0
    %511 = vmatmul.mubr.bf16.gmra.mxu0 %v201
    %v512 = vpop.f32.mrf.mxu0
    %v513 = vadd.f32 0.0, %v512
    %v514 = vpop.f32.mrf.mxu0
    %v515 = vpop.f32.mrf.mxu0
    %v516 = vadd.f32 0.0, %v515
    %v517 = vpop.f32.mrf.mxu0
    %518 = vdwg.mxu0
    %s519 = scalar_lea.vmem [#allocation2], 128
    %520 = vst [vmem:[%s519] sm:$0xff] %v457
    %521 = vst [vmem:[%s519 + $0x8] sm:$0xff] %v460
    %522 = vst [vmem:[%s519 + $0x10] sm:$0xff] %v465
    %523 = vst [vmem:[%s519 + $0x18] sm:$0xff] %v468
    %524 = vst [vmem:[%s519 + $0x20] sm:$0xff] %v473
    %525 = vst [vmem:[%s519 + $0x28] sm:$0xff] %v476
    %526 = vst [vmem:[%s519 + $0x30] sm:$0xff] %v481
    %527 = vst [vmem:[%s519 + $0x38] sm:$0xff] %v484
    %s528 = scalar_lea.vmem [#allocation2], 640
    %529 = vst [vmem:[%s528 + $0x40] sm:$0xff] %v489
    %530 = vst [vmem:[%s528 + $0x48] sm:$0xff] %v492
    %531 = vst [vmem:[%s528 + $0x50] sm:$0xff] %v497
    %532 = vst [vmem:[%s528 + $0x58] sm:$0xff] %v500
    %533 = vst [vmem:[%s528 + $0x60] sm:$0xff] %v505
    %534 = vst [vmem:[%s528 + $0x68] sm:$0xff] %v508
    %535 = vst [vmem:[%s528 + $0x70] sm:$0xff] %v513
    %536 = vst [vmem:[%s528 + $0x78] sm:$0xff] %v516
    %s537 = scalar_lea.vmem %s1, 128
    %v538 = vld [vmem:[%s537] sm:$0xf]
    %v539 = vld [vmem:[%s537 + $0x4] sm:$0xf]
    %v540 = vld [vmem:[%s537 + $0x8] sm:$0xf]
    %v541 = vld [vmem:[%s537 + $0xc] sm:$0xf]
    %v542 = vld [vmem:[%s537 + $0x10] sm:$0xf]
    %v543 = vld [vmem:[%s537 + $0x14] sm:$0xf]
    %v544 = vld [vmem:[%s537 + $0x18] sm:$0xf]
    %v545 = vld [vmem:[%s537 + $0x1c] sm:$0xf]
    %v546 = vld [vmem:[%s537 + $0x20] sm:$0xf]
    %v547 = vld [vmem:[%s537 + $0x24] sm:$0xf]
    %v548 = vld [vmem:[%s537 + $0x28] sm:$0xf]
    %v549 = vld [vmem:[%s537 + $0x2c] sm:$0xf]
    %v550 = vld [vmem:[%s537 + $0x30] sm:$0xf]
    %v551 = vld [vmem:[%s537 + $0x34] sm:$0xf]
    %v552 = vld [vmem:[%s537 + $0x38] sm:$0xf]
    %v553 = vld [vmem:[%s537 + $0x3c] sm:$0xf]
    %v570 = vunpack.c.l.b16 %v538
    %v571 = vunpack.c.l.b16 %v539
    %v572 = vunpack.c.l.b16 %v540
    %v573 = vunpack.c.l.b16 %v541
    %v574 = vunpack.c.l.b16 %v542
    %v575 = vunpack.c.l.b16 %v543
    %v576 = vunpack.c.l.b16 %v544
    %v577 = vunpack.c.l.b16 %v545
    %v578 = vunpack.c.l.b16 %v546
    %v579 = vunpack.c.l.b16 %v547
    %v580 = vunpack.c.l.b16 %v548
    %v581 = vunpack.c.l.b16 %v549
    %v582 = vunpack.c.l.b16 %v550
    %v583 = vunpack.c.l.b16 %v551
    %v584 = vunpack.c.l.b16 %v552
    %v585 = vunpack.c.l.b16 %v553
    %v586 = vpack.c.b16 %v571, %v570
    %v587 = vpack.c.b16 %v573, %v572
    %v588 = vpack.c.b16 %v575, %v574
    %v589 = vpack.c.b16 %v577, %v576
    %v590 = vpack.c.b16 %v579, %v578
    %v591 = vpack.c.b16 %v581, %v580
    %v592 = vpack.c.b16 %v583, %v582
    %v593 = vpack.c.b16 %v585, %v584
    %v595 = vsel %vm178, %v586, 0
    %v598 = vsel %vm178, %v587, 0
    %v601 = vsel %vm178, %v588, 0
    %v604 = vsel %vm178, %v589, 0
    %v607 = vsel %vm178, %v590, 0
    %v610 = vsel %vm178, %v591, 0
    %v613 = vsel %vm178, %v592, 0
    %v616 = vsel %vm178, %v593, 0
    %618 = vmatprep.subr.bf16.mxu0 0
    %619 = vmatpush1.bf16.xpose.msra.mxu0 %v616
    %620 = vmatprep.subr.bf16.mxu0 0
    %621 = vmatpush1.bf16.xpose.msra.mxu0 %v613
    %622 = vmatprep.subr.bf16.mxu0 0
    %623 = vmatpush1.bf16.xpose.msra.mxu0 %v610
    %624 = vmatprep.subr.bf16.mxu0 0
    %625 = vmatpush1.bf16.xpose.msra.mxu0 %v607
    %626 = vmatprep.subr.bf16.mxu0 0
    %627 = vmatpush1.bf16.xpose.msra.mxu0 %v604
    %628 = vmatprep.subr.bf16.mxu0 0
    %629 = vmatpush1.bf16.xpose.msra.mxu0 %v601
    %630 = vmatprep.subr.bf16.mxu0 0
    %631 = vmatpush1.bf16.xpose.msra.mxu0 %v598
    %632 = vmatprep.subr.bf16.mxu0 0
    %633 = vmatpush1.bf16.xpose.msra.mxu0 %v595
    %634 = vmatprep.subr.bf16.mxu0 0
    %635 = vmatpush2.bf16.xpose.msra.mxu0 0
    %636 = vmatprep.subr.bf16.mxu0 0
    %637 = vmatpush2.bf16.xpose.msra.mxu0 0
    %638 = vmatprep.subr.bf16.mxu0 0
    %639 = vmatpush2.bf16.xpose.msra.mxu0 0
    %640 = vmatprep.subr.bf16.mxu0 0
    %641 = vmatpush2.bf16.xpose.msra.mxu0 0
    %642 = vmatprep.subr.bf16.mxu0 0
    %643 = vmatpush2.bf16.xpose.msra.mxu0 0
    %644 = vmatprep.subr.bf16.mxu0 0
    %645 = vmatpush2.bf16.xpose.msra.mxu0 0
    %646 = vmatprep.subr.bf16.mxu0 0
    %647 = vmatpush2.bf16.xpose.msra.mxu0 0
    %648 = vmatprep.subr.bf16.mxu0 0
    %649 = vmatpush2.bf16.xpose.msra.mxu0 0
    %650 = vmatprep.mubr.bf16.mxu0 0
    %651 = vmatmul.mubr.bf16.gmra.mxu0 %v180
    %v652 = vpop.f32.mrf.mxu0
    %v653 = vadd.f32 0.0, %v652
    %v654 = vpop.f32.mrf.mxu0
    %v655 = vpop.f32.mrf.mxu0
    %v656 = vadd.f32 0.0, %v655
    %v657 = vpop.f32.mrf.mxu0
    %658 = vmatprep.mubr.bf16.mxu0 0
    %659 = vmatmul.mubr.bf16.gmra.mxu0 %v183
    %v660 = vpop.f32.mrf.mxu0
    %v661 = vadd.f32 0.0, %v660
    %v662 = vpop.f32.mrf.mxu0
    %v663 = vpop.f32.mrf.mxu0
    %v664 = vadd.f32 0.0, %v663
    %v665 = vpop.f32.mrf.mxu0
    %666 = vmatprep.mubr.bf16.mxu0 0
    %667 = vmatmul.mubr.bf16.gmra.mxu0 %v186
    %v668 = vpop.f32.mrf.mxu0
    %v669 = vadd.f32 0.0, %v668
    %v670 = vpop.f32.mrf.mxu0
    %v671 = vpop.f32.mrf.mxu0
    %v672 = vadd.f32 0.0, %v671
    %v673 = vpop.f32.mrf.mxu0
    %674 = vmatprep.mubr.bf16.mxu0 0
    %675 = vmatmul.mubr.bf16.gmra.mxu0 %v189
    %v676 = vpop.f32.mrf.mxu0
    %v677 = vadd.f32 0.0, %v676
    %v678 = vpop.f32.mrf.mxu0
    %v679 = vpop.f32.mrf.mxu0
    %v680 = vadd.f32 0.0, %v679
    %v681 = vpop.f32.mrf.mxu0
    %682 = vmatprep.mubr.bf16.mxu0 0
    %683 = vmatmul.mubr.bf16.gmra.mxu0 %v192
    %v684 = vpop.f32.mrf.mxu0
    %v685 = vadd.f32 0.0, %v684
    %v686 = vpop.f32.mrf.mxu0
    %v687 = vpop.f32.mrf.mxu0
    %v688 = vadd.f32 0.0, %v687
    %v689 = vpop.f32.mrf.mxu0
    %690 = vmatprep.mubr.bf16.mxu0 0
    %691 = vmatmul.mubr.bf16.gmra.mxu0 %v195
    %v692 = vpop.f32.mrf.mxu0
    %v693 = vadd.f32 0.0, %v692
    %v694 = vpop.f32.mrf.mxu0
    %v695 = vpop.f32.mrf.mxu0
    %v696 = vadd.f32 0.0, %v695
    %v697 = vpop.f32.mrf.mxu0
    %698 = vmatprep.mubr.bf16.mxu0 0
    %699 = vmatmul.mubr.bf16.gmra.mxu0 %v198
    %v700 = vpop.f32.mrf.mxu0
    %v701 = vadd.f32 0.0, %v700
    %v702 = vpop.f32.mrf.mxu0
    %v703 = vpop.f32.mrf.mxu0
    %v704 = vadd.f32 0.0, %v703
    %v705 = vpop.f32.mrf.mxu0
    %706 = vmatprep.mubr.bf16.mxu0 0
    %707 = vmatmul.mubr.bf16.gmra.mxu0 %v201
    %v708 = vpop.f32.mrf.mxu0
    %v709 = vadd.f32 0.0, %v708
    %v710 = vpop.f32.mrf.mxu0
    %v711 = vpop.f32.mrf.mxu0
    %v712 = vadd.f32 0.0, %v711
    %v713 = vpop.f32.mrf.mxu0
    %714 = vdwg.mxu0
    %s715 = scalar_lea.vmem [#allocation2], 256
    %716 = vst [vmem:[%s715] sm:$0xff] %v653
    %717 = vst [vmem:[%s715 + $0x8] sm:$0xff] %v656
    %718 = vst [vmem:[%s715 + $0x10] sm:$0xff] %v661
    %719 = vst [vmem:[%s715 + $0x18] sm:$0xff] %v664
    %720 = vst [vmem:[%s715 + $0x20] sm:$0xff] %v669
    %721 = vst [vmem:[%s715 + $0x28] sm:$0xff] %v672
    %722 = vst [vmem:[%s715 + $0x30] sm:$0xff] %v677
    %723 = vst [vmem:[%s715 + $0x38] sm:$0xff] %v680
    %s724 = scalar_lea.vmem [#allocation2], 512
    %725 = vst [vmem:[%s724 + $0x40] sm:$0xff] %v685
    %726 = vst [vmem:[%s724 + $0x48] sm:$0xff] %v688
    %727 = vst [vmem:[%s724 + $0x50] sm:$0xff] %v693
    %728 = vst [vmem:[%s724 + $0x58] sm:$0xff] %v696
    %729 = vst [vmem:[%s724 + $0x60] sm:$0xff] %v701
    %730 = vst [vmem:[%s724 + $0x68] sm:$0xff] %v704
    %731 = vst [vmem:[%s724 + $0x70] sm:$0xff] %v709
    %732 = vst [vmem:[%s724 + $0x78] sm:$0xff] %v712
    %s733 = scalar_lea.vmem %s1, 192
    %v734 = vld [vmem:[%s733] sm:$0xf]
    %v735 = vld [vmem:[%s733 + $0x4] sm:$0xf]
    %v736 = vld [vmem:[%s733 + $0x8] sm:$0xf]
    %v737 = vld [vmem:[%s733 + $0xc] sm:$0xf]
    %v738 = vld [vmem:[%s733 + $0x10] sm:$0xf]
    %v739 = vld [vmem:[%s733 + $0x14] sm:$0xf]
    %v740 = vld [vmem:[%s733 + $0x18] sm:$0xf]
    %v741 = vld [vmem:[%s733 + $0x1c] sm:$0xf]
    %v742 = vld [vmem:[%s733 + $0x20] sm:$0xf]
    %v743 = vld [vmem:[%s733 + $0x24] sm:$0xf]
    %v744 = vld [vmem:[%s733 + $0x28] sm:$0xf]
    %v745 = vld [vmem:[%s733 + $0x2c] sm:$0xf]
    %v746 = vld [vmem:[%s733 + $0x30] sm:$0xf]
    %v747 = vld [vmem:[%s733 + $0x34] sm:$0xf]
    %v748 = vld [vmem:[%s733 + $0x38] sm:$0xf]
    %v749 = vld [vmem:[%s733 + $0x3c] sm:$0xf]
    %v766 = vunpack.c.l.b16 %v734
    %v767 = vunpack.c.l.b16 %v735
    %v768 = vunpack.c.l.b16 %v736
    %v769 = vunpack.c.l.b16 %v737
    %v770 = vunpack.c.l.b16 %v738
    %v771 = vunpack.c.l.b16 %v739
    %v772 = vunpack.c.l.b16 %v740
    %v773 = vunpack.c.l.b16 %v741
    %v774 = vunpack.c.l.b16 %v742
    %v775 = vunpack.c.l.b16 %v743
    %v776 = vunpack.c.l.b16 %v744
    %v777 = vunpack.c.l.b16 %v745
    %v778 = vunpack.c.l.b16 %v746
    %v779 = vunpack.c.l.b16 %v747
    %v780 = vunpack.c.l.b16 %v748
    %v781 = vunpack.c.l.b16 %v749
    %v782 = vpack.c.b16 %v767, %v766
    %v783 = vpack.c.b16 %v769, %v768
    %v784 = vpack.c.b16 %v771, %v770
    %v785 = vpack.c.b16 %v773, %v772
    %v786 = vpack.c.b16 %v775, %v774
    %v787 = vpack.c.b16 %v777, %v776
    %v788 = vpack.c.b16 %v779, %v778
    %v789 = vpack.c.b16 %v781, %v780
    %v791 = vsel %vm178, %v782, 0
    %v794 = vsel %vm178, %v783, 0
    %v797 = vsel %vm178, %v784, 0
    %v800 = vsel %vm178, %v785, 0
    %v803 = vsel %vm178, %v786, 0
    %v806 = vsel %vm178, %v787, 0
    %v809 = vsel %vm178, %v788, 0
    %v812 = vsel %vm178, %v789, 0
    %814 = vmatprep.subr.bf16.mxu0 0
    %815 = vmatpush1.bf16.xpose.msra.mxu0 %v812
    %816 = vmatprep.subr.bf16.mxu0 0
    %817 = vmatpush1.bf16.xpose.msra.mxu0 %v809
    %818 = vmatprep.subr.bf16.mxu0 0
    %819 = vmatpush1.bf16.xpose.msra.mxu0 %v806
    %820 = vmatprep.subr.bf16.mxu0 0
    %821 = vmatpush1.bf16.xpose.msra.mxu0 %v803
    %822 = vmatprep.subr.bf16.mxu0 0
    %823 = vmatpush1.bf16.xpose.msra.mxu0 %v800
    %824 = vmatprep.subr.bf16.mxu0 0
    %825 = vmatpush1.bf16.xpose.msra.mxu0 %v797
    %826 = vmatprep.subr.bf16.mxu0 0
    %827 = vmatpush1.bf16.xpose.msra.mxu0 %v794
    %828 = vmatprep.subr.bf16.mxu0 0
    %829 = vmatpush1.bf16.xpose.msra.mxu0 %v791
    %830 = vmatprep.subr.bf16.mxu0 0
    %831 = vmatpush2.bf16.xpose.msra.mxu0 0
    %832 = vmatprep.subr.bf16.mxu0 0
    %833 = vmatpush2.bf16.xpose.msra.mxu0 0
    %834 = vmatprep.subr.bf16.mxu0 0
    %835 = vmatpush2.bf16.xpose.msra.mxu0 0
    %836 = vmatprep.subr.bf16.mxu0 0
    %837 = vmatpush2.bf16.xpose.msra.mxu0 0
    %838 = vmatprep.subr.bf16.mxu0 0
    %839 = vmatpush2.bf16.xpose.msra.mxu0 0
    %840 = vmatprep.subr.bf16.mxu0 0
    %841 = vmatpush2.bf16.xpose.msra.mxu0 0
    %842 = vmatprep.subr.bf16.mxu0 0
    %843 = vmatpush2.bf16.xpose.msra.mxu0 0
    %844 = vmatprep.subr.bf16.mxu0 0
    %845 = vmatpush2.bf16.xpose.msra.mxu0 0
    %846 = vmatprep.mubr.bf16.mxu0 0
    %847 = vmatmul.mubr.bf16.gmra.mxu0 %v180
    %v848 = vpop.f32.mrf.mxu0
    %v849 = vadd.f32 0.0, %v848
    %v850 = vpop.f32.mrf.mxu0
    %v851 = vpop.f32.mrf.mxu0
    %v852 = vadd.f32 0.0, %v851
    %v853 = vpop.f32.mrf.mxu0
    %854 = vmatprep.mubr.bf16.mxu0 0
    %855 = vmatmul.mubr.bf16.gmra.mxu0 %v183
    %v856 = vpop.f32.mrf.mxu0
    %v857 = vadd.f32 0.0, %v856
    %v858 = vpop.f32.mrf.mxu0
    %v859 = vpop.f32.mrf.mxu0
    %v860 = vadd.f32 0.0, %v859
    %v861 = vpop.f32.mrf.mxu0
    %862 = vmatprep.mubr.bf16.mxu0 0
    %863 = vmatmul.mubr.bf16.gmra.mxu0 %v186
    %v864 = vpop.f32.mrf.mxu0
    %v865 = vadd.f32 0.0, %v864
    %v866 = vpop.f32.mrf.mxu0
    %v867 = vpop.f32.mrf.mxu0
    %v868 = vadd.f32 0.0, %v867
    %v869 = vpop.f32.mrf.mxu0
    %870 = vmatprep.mubr.bf16.mxu0 0
    %871 = vmatmul.mubr.bf16.gmra.mxu0 %v189
    %v872 = vpop.f32.mrf.mxu0
    %v873 = vadd.f32 0.0, %v872
    %v874 = vpop.f32.mrf.mxu0
    %v875 = vpop.f32.mrf.mxu0
    %v876 = vadd.f32 0.0, %v875
    %v877 = vpop.f32.mrf.mxu0
    %878 = vmatprep.mubr.bf16.mxu0 0
    %879 = vmatmul.mubr.bf16.gmra.mxu0 %v192
    %v880 = vpop.f32.mrf.mxu0
    %v881 = vadd.f32 0.0, %v880
    %v882 = vpop.f32.mrf.mxu0
    %v883 = vpop.f32.mrf.mxu0
    %v884 = vadd.f32 0.0, %v883
    %v885 = vpop.f32.mrf.mxu0
    %886 = vmatprep.mubr.bf16.mxu0 0
    %887 = vmatmul.mubr.bf16.gmra.mxu0 %v195
    %v888 = vpop.f32.mrf.mxu0
    %v889 = vadd.f32 0.0, %v888
    %v890 = vpop.f32.mrf.mxu0
    %v891 = vpop.f32.mrf.mxu0
    %v892 = vadd.f32 0.0, %v891
    %v893 = vpop.f32.mrf.mxu0
    %894 = vmatprep.mubr.bf16.mxu0 0
    %895 = vmatmul.mubr.bf16.gmra.mxu0 %v198
    %v896 = vpop.f32.mrf.mxu0
    %v897 = vadd.f32 0.0, %v896
    %v898 = vpop.f32.mrf.mxu0
    %v899 = vpop.f32.mrf.mxu0
    %v900 = vadd.f32 0.0, %v899
    %v901 = vpop.f32.mrf.mxu0
    %902 = vmatprep.mubr.bf16.mxu0 0
    %903 = vmatmul.mubr.bf16.gmra.mxu0 %v201
    %v904 = vpop.f32.mrf.mxu0
    %v905 = vadd.f32 0.0, %v904
    %v906 = vpop.f32.mrf.mxu0
    %v907 = vpop.f32.mrf.mxu0
    %v908 = vadd.f32 0.0, %v907
    %v909 = vpop.f32.mrf.mxu0
    %910 = vdwg.mxu0
    %s911 = scalar_lea.vmem [#allocation2], 384
    %912 = vst [vmem:[%s911] sm:$0xff] %v849
    %913 = vst [vmem:[%s911 + $0x8] sm:$0xff] %v852
    %914 = vst [vmem:[%s911 + $0x10] sm:$0xff] %v857
    %915 = vst [vmem:[%s911 + $0x18] sm:$0xff] %v860
    %916 = vst [vmem:[%s911 + $0x20] sm:$0xff] %v865
    %917 = vst [vmem:[%s911 + $0x28] sm:$0xff] %v868
    %918 = vst [vmem:[%s911 + $0x30] sm:$0xff] %v873
    %919 = vst [vmem:[%s911 + $0x38] sm:$0xff] %v876
    %920 = vst [vmem:[%s911 + $0x40] sm:$0xff] %v881
    %921 = vst [vmem:[%s911 + $0x48] sm:$0xff] %v884
    %922 = vst [vmem:[%s911 + $0x50] sm:$0xff] %v889
    %923 = vst [vmem:[%s911 + $0x58] sm:$0xff] %v892
    %924 = vst [vmem:[%s911 + $0x60] sm:$0xff] %v897
    %925 = vst [vmem:[%s911 + $0x68] sm:$0xff] %v900
    %926 = vst [vmem:[%s911 + $0x70] sm:$0xff] %v905
    %927 = vst [vmem:[%s911 + $0x78] sm:$0xff] %v908
    %s928 = scalar_lea.vmem %s1, 256
    %v929 = vld [vmem:[%s928] sm:$0xf]
    %v930 = vld [vmem:[%s928 + $0x4] sm:$0xf]
    %v931 = vld [vmem:[%s928 + $0x8] sm:$0xf]
    %v932 = vld [vmem:[%s928 + $0xc] sm:$0xf]
    %v933 = vld [vmem:[%s928 + $0x10] sm:$0xf]
    %v934 = vld [vmem:[%s928 + $0x14] sm:$0xf]
    %v935 = vld [vmem:[%s928 + $0x18] sm:$0xf]
    %v936 = vld [vmem:[%s928 + $0x1c] sm:$0xf]
    %v937 = vld [vmem:[%s928 + $0x20] sm:$0xf]
    %v938 = vld [vmem:[%s928 + $0x24] sm:$0xf]
    %v939 = vld [vmem:[%s928 + $0x28] sm:$0xf]
    %v940 = vld [vmem:[%s928 + $0x2c] sm:$0xf]
    %v941 = vld [vmem:[%s928 + $0x30] sm:$0xf]
    %v942 = vld [vmem:[%s928 + $0x34] sm:$0xf]
    %v943 = vld [vmem:[%s928 + $0x38] sm:$0xf]
    %v944 = vld [vmem:[%s928 + $0x3c] sm:$0xf]
    %v961 = vunpack.c.l.b16 %v929
    %v962 = vunpack.c.l.b16 %v930
    %v963 = vunpack.c.l.b16 %v931
    %v964 = vunpack.c.l.b16 %v932
    %v965 = vunpack.c.l.b16 %v933
    %v966 = vunpack.c.l.b16 %v934
    %v967 = vunpack.c.l.b16 %v935
    %v968 = vunpack.c.l.b16 %v936
    %v969 = vunpack.c.l.b16 %v937
    %v970 = vunpack.c.l.b16 %v938
    %v971 = vunpack.c.l.b16 %v939
    %v972 = vunpack.c.l.b16 %v940
    %v973 = vunpack.c.l.b16 %v941
    %v974 = vunpack.c.l.b16 %v942
    %v975 = vunpack.c.l.b16 %v943
    %v976 = vunpack.c.l.b16 %v944
    %v977 = vpack.c.b16 %v962, %v961
    %v978 = vpack.c.b16 %v964, %v963
    %v979 = vpack.c.b16 %v966, %v965
    %v980 = vpack.c.b16 %v968, %v967
    %v981 = vpack.c.b16 %v970, %v969
    %v982 = vpack.c.b16 %v972, %v971
    %v983 = vpack.c.b16 %v974, %v973
    %v984 = vpack.c.b16 %v976, %v975
    %v986 = vsel %vm178, %v977, 0
    %v989 = vsel %vm178, %v978, 0
    %v992 = vsel %vm178, %v979, 0
    %v995 = vsel %vm178, %v980, 0
    %v998 = vsel %vm178, %v981, 0
    %v1001 = vsel %vm178, %v982, 0
    %v1004 = vsel %vm178, %v983, 0
    %v1007 = vsel %vm178, %v984, 0
    %1009 = vmatprep.subr.bf16.mxu0 0
    %1010 = vmatpush1.bf16.xpose.msra.mxu0 %v1007
    %1011 = vmatprep.subr.bf16.mxu0 0
    %1012 = vmatpush1.bf16.xpose.msra.mxu0 %v1004
    %1013 = vmatprep.subr.bf16.mxu0 0
    %1014 = vmatpush1.bf16.xpose.msra.mxu0 %v1001
    %1015 = vmatprep.subr.bf16.mxu0 0
    %1016 = vmatpush1.bf16.xpose.msra.mxu0 %v998
    %1017 = vmatprep.subr.bf16.mxu0 0
    %1018 = vmatpush1.bf16.xpose.msra.mxu0 %v995
    %1019 = vmatprep.subr.bf16.mxu0 0
    %1020 = vmatpush1.bf16.xpose.msra.mxu0 %v992
    %1021 = vmatprep.subr.bf16.mxu0 0
    %1022 = vmatpush1.bf16.xpose.msra.mxu0 %v989
    %1023 = vmatprep.subr.bf16.mxu0 0
    %1024 = vmatpush1.bf16.xpose.msra.mxu0 %v986
    %1025 = vmatprep.subr.bf16.mxu0 0
    %1026 = vmatpush2.bf16.xpose.msra.mxu0 0
    %1027 = vmatprep.subr.bf16.mxu0 0
    %1028 = vmatpush2.bf16.xpose.msra.mxu0 0
    %1029 = vmatprep.subr.bf16.mxu0 0
    %1030 = vmatpush2.bf16.xpose.msra.mxu0 0
    %1031 = vmatprep.subr.bf16.mxu0 0
    %1032 = vmatpush2.bf16.xpose.msra.mxu0 0
    %1033 = vmatprep.subr.bf16.mxu0 0
    %1034 = vmatpush2.bf16.xpose.msra.mxu0 0
    %1035 = vmatprep.subr.bf16.mxu0 0
    %1036 = vmatpush2.bf16.xpose.msra.mxu0 0
    %1037 = vmatprep.subr.bf16.mxu0 0
    %1038 = vmatpush2.bf16.xpose.msra.mxu0 0
    %1039 = vmatprep.subr.bf16.mxu0 0
    %1040 = vmatpush2.bf16.xpose.msra.mxu0 0
    %1041 = vmatprep.mubr.bf16.mxu0 0
    %1042 = vmatmul.mubr.bf16.gmra.mxu0 %v180
    %v1043 = vpop.f32.mrf.mxu0
    %v1044 = vadd.f32 0.0, %v1043
    %v1045 = vpop.f32.mrf.mxu0
    %v1046 = vpop.f32.mrf.mxu0
    %v1047 = vadd.f32 0.0, %v1046
    %v1048 = vpop.f32.mrf.mxu0
    %1049 = vmatprep.mubr.bf16.mxu0 0
    %1050 = vmatmul.mubr.bf16.gmra.mxu0 %v183
    %v1051 = vpop.f32.mrf.mxu0
    %v1052 = vadd.f32 0.0, %v1051
    %v1053 = vpop.f32.mrf.mxu0
    %v1054 = vpop.f32.mrf.mxu0
    %v1055 = vadd.f32 0.0, %v1054
    %v1056 = vpop.f32.mrf.mxu0
    %1057 = vmatprep.mubr.bf16.mxu0 0
    %1058 = vmatmul.mubr.bf16.gmra.mxu0 %v186
    %v1059 = vpop.f32.mrf.mxu0
    %v1060 = vadd.f32 0.0, %v1059
    %v1061 = vpop.f32.mrf.mxu0
    %v1062 = vpop.f32.mrf.mxu0
    %v1063 = vadd.f32 0.0, %v1062
    %v1064 = vpop.f32.mrf.mxu0
    %1065 = vmatprep.mubr.bf16.mxu0 0
    %1066 = vmatmul.mubr.bf16.gmra.mxu0 %v189
    %v1067 = vpop.f32.mrf.mxu0
    %v1068 = vadd.f32 0.0, %v1067
    %v1069 = vpop.f32.mrf.mxu0
    %v1070 = vpop.f32.mrf.mxu0
    %v1071 = vadd.f32 0.0, %v1070
    %v1072 = vpop.f32.mrf.mxu0
    %1073 = vmatprep.mubr.bf16.mxu0 0
    %1074 = vmatmul.mubr.bf16.gmra.mxu0 %v192
    %v1075 = vpop.f32.mrf.mxu0
    %v1076 = vadd.f32 0.0, %v1075
    %v1077 = vpop.f32.mrf.mxu0
    %v1078 = vpop.f32.mrf.mxu0
    %v1079 = vadd.f32 0.0, %v1078
    %v1080 = vpop.f32.mrf.mxu0
    %1081 = vmatprep.mubr.bf16.mxu0 0
    %1082 = vmatmul.mubr.bf16.gmra.mxu0 %v195
    %v1083 = vpop.f32.mrf.mxu0
    %v1084 = vadd.f32 0.0, %v1083
    %v1085 = vpop.f32.mrf.mxu0
    %v1086 = vpop.f32.mrf.mxu0
    %v1087 = vadd.f32 0.0, %v1086
    %v1088 = vpop.f32.mrf.mxu0
    %1089 = vmatprep.mubr.bf16.mxu0 0
    %1090 = vmatmul.mubr.bf16.gmra.mxu0 %v198
    %v1091 = vpop.f32.mrf.mxu0
    %v1092 = vadd.f32 0.0, %v1091
    %v1093 = vpop.f32.mrf.mxu0
    %v1094 = vpop.f32.mrf.mxu0
    %v1095 = vadd.f32 0.0, %v1094
    %v1096 = vpop.f32.mrf.mxu0
    %1097 = vmatprep.mubr.bf16.mxu0 0
    %1098 = vmatmul.mubr.bf16.gmra.mxu0 %v201
    %v1099 = vpop.f32.mrf.mxu0
    %v1100 = vadd.f32 0.0, %v1099
    %v1101 = vpop.f32.mrf.mxu0
    %v1102 = vpop.f32.mrf.mxu0
    %v1103 = vadd.f32 0.0, %v1102
    %v1104 = vpop.f32.mrf.mxu0
    %1105 = vdwg.mxu0
    %1106 = vst [vmem:[%s724] sm:$0xff] %v1044
    %1107 = vst [vmem:[%s724 + $0x8] sm:$0xff] %v1047
    %1108 = vst [vmem:[%s724 + $0x10] sm:$0xff] %v1052
    %1109 = vst [vmem:[%s724 + $0x18] sm:$0xff] %v1055
    %1110 = vst [vmem:[%s724 + $0x20] sm:$0xff] %v1060
    %1111 = vst [vmem:[%s724 + $0x28] sm:$0xff] %v1063
    %1112 = vst [vmem:[%s724 + $0x30] sm:$0xff] %v1068
    %1113 = vst [vmem:[%s724 + $0x38] sm:$0xff] %v1071
    %1114 = vst [vmem:[%s715 + $0x40] sm:$0xff] %v1076
    %1115 = vst [vmem:[%s715 + $0x48] sm:$0xff] %v1079
    %1116 = vst [vmem:[%s715 + $0x50] sm:$0xff] %v1084
    %1117 = vst [vmem:[%s715 + $0x58] sm:$0xff] %v1087
    %1118 = vst [vmem:[%s715 + $0x60] sm:$0xff] %v1092
    %1119 = vst [vmem:[%s715 + $0x68] sm:$0xff] %v1095
    %1120 = vst [vmem:[%s715 + $0x70] sm:$0xff] %v1100
    %1121 = vst [vmem:[%s715 + $0x78] sm:$0xff] %v1103
    %s1122 = scalar_lea.vmem %s1, 320
    %v1123 = vld [vmem:[%s1122] sm:$0xf]
    %v1124 = vld [vmem:[%s1122 + $0x4] sm:$0xf]
    %v1125 = vld [vmem:[%s1122 + $0x8] sm:$0xf]
    %v1126 = vld [vmem:[%s1122 + $0xc] sm:$0xf]
    %v1127 = vld [vmem:[%s1122 + $0x10] sm:$0xf]
    %v1128 = vld [vmem:[%s1122 + $0x14] sm:$0xf]
    %v1129 = vld [vmem:[%s1122 + $0x18] sm:$0xf]
    %v1130 = vld [vmem:[%s1122 + $0x1c] sm:$0xf]
    %v1131 = vld [vmem:[%s1122 + $0x20] sm:$0xf]
    %v1132 = vld [vmem:[%s1122 + $0x24] sm:$0xf]
    %v1133 = vld [vmem:[%s1122 + $0x28] sm:$0xf]
    %v1134 = vld [vmem:[%s1122 + $0x2c] sm:$0xf]
    %v1135 = vld [vmem:[%s1122 + $0x30] sm:$0xf]
    %v1136 = vld [vmem:[%s1122 + $0x34] sm:$0xf]
    %v1137 = vld [vmem:[%s1122 + $0x38] sm:$0xf]
    %v1138 = vld [vmem:[%s1122 + $0x3c] sm:$0xf]
    %v1155 = vunpack.c.l.b16 %v1123
    %v1156 = vunpack.c.l.b16 %v1124
    %v1157 = vunpack.c.l.b16 %v1125
    %v1158 = vunpack.c.l.b16 %v1126
    %v1159 = vunpack.c.l.b16 %v1127
    %v1160 = vunpack.c.l.b16 %v1128
    %v1161 = vunpack.c.l.b16 %v1129
    %v1162 = vunpack.c.l.b16 %v1130
    %v1163 = vunpack.c.l.b16 %v1131
    %v1164 = vunpack.c.l.b16 %v1132
    %v1165 = vunpack.c.l.b16 %v1133
    %v1166 = vunpack.c.l.b16 %v1134
    %v1167 = vunpack.c.l.b16 %v1135
    %v1168 = vunpack.c.l.b16 %v1136
    %v1169 = vunpack.c.l.b16 %v1137
    %v1170 = vunpack.c.l.b16 %v1138
    %v1171 = vpack.c.b16 %v1156, %v1155
    %v1172 = vpack.c.b16 %v1158, %v1157
    %v1173 = vpack.c.b16 %v1160, %v1159
    %v1174 = vpack.c.b16 %v1162, %v1161
    %v1175 = vpack.c.b16 %v1164, %v1163
    %v1176 = vpack.c.b16 %v1166, %v1165
    %v1177 = vpack.c.b16 %v1168, %v1167
    %v1178 = vpack.c.b16 %v1170, %v1169
    %v1180 = vsel %vm178, %v1171, 0
    %v1183 = vsel %vm178, %v1172, 0
    %v1186 = vsel %vm178, %v1173, 0
    %v1189 = vsel %vm178, %v1174, 0
    %v1192 = vsel %vm178, %v1175, 0
    %v1195 = vsel %vm178, %v1176, 0
    %v1198 = vsel %vm178, %v1177, 0
    %v1201 = vsel %vm178, %v1178, 0
    %1203 = vmatprep.subr.bf16.mxu0 0
    %1204 = vmatpush1.bf16.xpose.msra.mxu0 %v1201
    %1205 = vmatprep.subr.bf16.mxu0 0
    %1206 = vmatpush1.bf16.xpose.msra.mxu0 %v1198
    %1207 = vmatprep.subr.bf16.mxu0 0
    %1208 = vmatpush1.bf16.xpose.msra.mxu0 %v1195
    %1209 = vmatprep.subr.bf16.mxu0 0
    %1210 = vmatpush1.bf16.xpose.msra.mxu0 %v1192
    %1211 = vmatprep.subr.bf16.mxu0 0
    %1212 = vmatpush1.bf16.xpose.msra.mxu0 %v1189
    %1213 = vmatprep.subr.bf16.mxu0 0
    %1214 = vmatpush1.bf16.xpose.msra.mxu0 %v1186
    %1215 = vmatprep.subr.bf16.mxu0 0
    %1216 = vmatpush1.bf16.xpose.msra.mxu0 %v1183
    %1217 = vmatprep.subr.bf16.mxu0 0
    %1218 = vmatpush1.bf16.xpose.msra.mxu0 %v1180
    %1219 = vmatprep.subr.bf16.mxu0 0
    %1220 = vmatpush2.bf16.xpose.msra.mxu0 0
    %1221 = vmatprep.subr.bf16.mxu0 0
    %1222 = vmatpush2.bf16.xpose.msra.mxu0 0
    %1223 = vmatprep.subr.bf16.mxu0 0
    %1224 = vmatpush2.bf16.xpose.msra.mxu0 0
    %1225 = vmatprep.subr.bf16.mxu0 0
    %1226 = vmatpush2.bf16.xpose.msra.mxu0 0
    %1227 = vmatprep.subr.bf16.mxu0 0
    %1228 = vmatpush2.bf16.xpose.msra.mxu0 0
    %1229 = vmatprep.subr.bf16.mxu0 0
    %1230 = vmatpush2.bf16.xpose.msra.mxu0 0
    %1231 = vmatprep.subr.bf16.mxu0 0
    %1232 = vmatpush2.bf16.xpose.msra.mxu0 0
    %1233 = vmatprep.subr.bf16.mxu0 0
    %1234 = vmatpush2.bf16.xpose.msra.mxu0 0
    %1235 = vmatprep.mubr.bf16.mxu0 0
    %1236 = vmatmul.mubr.bf16.gmra.mxu0 %v180
    %v1237 = vpop.f32.mrf.mxu0
    %v1238 = vadd.f32 0.0, %v1237
    %v1239 = vpop.f32.mrf.mxu0
    %v1240 = vpop.f32.mrf.mxu0
    %v1241 = vadd.f32 0.0, %v1240
    %v1242 = vpop.f32.mrf.mxu0
    %1243 = vmatprep.mubr.bf16.mxu0 0
    %1244 = vmatmul.mubr.bf16.gmra.mxu0 %v183
    %v1245 = vpop.f32.mrf.mxu0
    %v1246 = vadd.f32 0.0, %v1245
    %v1247 = vpop.f32.mrf.mxu0
    %v1248 = vpop.f32.mrf.mxu0
    %v1249 = vadd.f32 0.0, %v1248
    %v1250 = vpop.f32.mrf.mxu0
    %1251 = vmatprep.mubr.bf16.mxu0 0
    %1252 = vmatmul.mubr.bf16.gmra.mxu0 %v186
    %v1253 = vpop.f32.mrf.mxu0
    %v1254 = vadd.f32 0.0, %v1253
    %v1255 = vpop.f32.mrf.mxu0
    %v1256 = vpop.f32.mrf.mxu0
    %v1257 = vadd.f32 0.0, %v1256
    %v1258 = vpop.f32.mrf.mxu0
    %1259 = vmatprep.mubr.bf16.mxu0 0
    %1260 = vmatmul.mubr.bf16.gmra.mxu0 %v189
    %v1261 = vpop.f32.mrf.mxu0
    %v1262 = vadd.f32 0.0, %v1261
    %v1263 = vpop.f32.mrf.mxu0
    %v1264 = vpop.f32.mrf.mxu0
    %v1265 = vadd.f32 0.0, %v1264
    %v1266 = vpop.f32.mrf.mxu0
    %1267 = vmatprep.mubr.bf16.mxu0 0
    %1268 = vmatmul.mubr.bf16.gmra.mxu0 %v192
    %v1269 = vpop.f32.mrf.mxu0
    %v1270 = vadd.f32 0.0, %v1269
    %v1271 = vpop.f32.mrf.mxu0
    %v1272 = vpop.f32.mrf.mxu0
    %v1273 = vadd.f32 0.0, %v1272
    %v1274 = vpop.f32.mrf.mxu0
    %1275 = vmatprep.mubr.bf16.mxu0 0
    %1276 = vmatmul.mubr.bf16.gmra.mxu0 %v195
    %v1277 = vpop.f32.mrf.mxu0
    %v1278 = vadd.f32 0.0, %v1277
    %v1279 = vpop.f32.mrf.mxu0
    %v1280 = vpop.f32.mrf.mxu0
    %v1281 = vadd.f32 0.0, %v1280
    %v1282 = vpop.f32.mrf.mxu0
    %1283 = vmatprep.mubr.bf16.mxu0 0
    %1284 = vmatmul.mubr.bf16.gmra.mxu0 %v198
    %v1285 = vpop.f32.mrf.mxu0
    %v1286 = vadd.f32 0.0, %v1285
    %v1287 = vpop.f32.mrf.mxu0
    %v1288 = vpop.f32.mrf.mxu0
    %v1289 = vadd.f32 0.0, %v1288
    %v1290 = vpop.f32.mrf.mxu0
    %1291 = vmatprep.mubr.bf16.mxu0 0
    %1292 = vmatmul.mubr.bf16.gmra.mxu0 %v201
    %v1293 = vpop.f32.mrf.mxu0
    %v1294 = vadd.f32 0.0, %v1293
    %v1295 = vpop.f32.mrf.mxu0
    %v1296 = vpop.f32.mrf.mxu0
    %v1297 = vadd.f32 0.0, %v1296
    %v1298 = vpop.f32.mrf.mxu0
    %1299 = vdwg.mxu0
    %1300 = vst [vmem:[%s528] sm:$0xff] %v1238
    %1301 = vst [vmem:[%s528 + $0x8] sm:$0xff] %v1241
    %1302 = vst [vmem:[%s528 + $0x10] sm:$0xff] %v1246
    %1303 = vst [vmem:[%s528 + $0x18] sm:$0xff] %v1249
    %1304 = vst [vmem:[%s528 + $0x20] sm:$0xff] %v1254
    %1305 = vst [vmem:[%s528 + $0x28] sm:$0xff] %v1257
    %1306 = vst [vmem:[%s528 + $0x30] sm:$0xff] %v1262
    %1307 = vst [vmem:[%s528 + $0x38] sm:$0xff] %v1265
    %1308 = vst [vmem:[%s519 + $0x40] sm:$0xff] %v1270
    %1309 = vst [vmem:[%s519 + $0x48] sm:$0xff] %v1273
    %1310 = vst [vmem:[%s519 + $0x50] sm:$0xff] %v1278
    %1311 = vst [vmem:[%s519 + $0x58] sm:$0xff] %v1281
    %1312 = vst [vmem:[%s519 + $0x60] sm:$0xff] %v1286
    %1313 = vst [vmem:[%s519 + $0x68] sm:$0xff] %v1289
    %1314 = vst [vmem:[%s519 + $0x70] sm:$0xff] %v1294
    %1315 = vst [vmem:[%s519 + $0x78] sm:$0xff] %v1297
    %s1316 = scalar_lea.vmem %s1, 384
    %v1317 = vld [vmem:[%s1316] sm:$0xf]
    %v1318 = vld [vmem:[%s1316 + $0x4] sm:$0xf]
    %v1319 = vld [vmem:[%s1316 + $0x8] sm:$0xf]
    %v1320 = vld [vmem:[%s1316 + $0xc] sm:$0xf]
    %v1321 = vld [vmem:[%s1316 + $0x10] sm:$0xf]
    %v1322 = vld [vmem:[%s1316 + $0x14] sm:$0xf]
    %v1323 = vld [vmem:[%s1316 + $0x18] sm:$0xf]
    %v1324 = vld [vmem:[%s1316 + $0x1c] sm:$0xf]
    %v1325 = vld [vmem:[%s1316 + $0x20] sm:$0xf]
    %v1326 = vld [vmem:[%s1316 + $0x24] sm:$0xf]
    %v1327 = vld [vmem:[%s1316 + $0x28] sm:$0xf]
    %v1328 = vld [vmem:[%s1316 + $0x2c] sm:$0xf]
    %v1329 = vld [vmem:[%s1316 + $0x30] sm:$0xf]
    %v1330 = vld [vmem:[%s1316 + $0x34] sm:$0xf]
    %v1331 = vld [vmem:[%s1316 + $0x38] sm:$0xf]
    %v1332 = vld [vmem:[%s1316 + $0x3c] sm:$0xf]
    %v1349 = vunpack.c.l.b16 %v1317
    %v1350 = vunpack.c.l.b16 %v1318
    %v1351 = vunpack.c.l.b16 %v1319
    %v1352 = vunpack.c.l.b16 %v1320
    %v1353 = vunpack.c.l.b16 %v1321
    %v1354 = vunpack.c.l.b16 %v1322
    %v1355 = vunpack.c.l.b16 %v1323
    %v1356 = vunpack.c.l.b16 %v1324
    %v1357 = vunpack.c.l.b16 %v1325
    %v1358 = vunpack.c.l.b16 %v1326
    %v1359 = vunpack.c.l.b16 %v1327
    %v1360 = vunpack.c.l.b16 %v1328
    %v1361 = vunpack.c.l.b16 %v1329
    %v1362 = vunpack.c.l.b16 %v1330
    %v1363 = vunpack.c.l.b16 %v1331
    %v1364 = vunpack.c.l.b16 %v1332
    %v1365 = vpack.c.b16 %v1350, %v1349
    %v1366 = vpack.c.b16 %v1352, %v1351
    %v1367 = vpack.c.b16 %v1354, %v1353
    %v1368 = vpack.c.b16 %v1356, %v1355
    %v1369 = vpack.c.b16 %v1358, %v1357
    %v1370 = vpack.c.b16 %v1360, %v1359
    %v1371 = vpack.c.b16 %v1362, %v1361
    %v1372 = vpack.c.b16 %v1364, %v1363
    %v1374 = vsel %vm178, %v1365, 0
    %v1377 = vsel %vm178, %v1366, 0
    %v1380 = vsel %vm178, %v1367, 0
    %v1383 = vsel %vm178, %v1368, 0
    %v1386 = vsel %vm178, %v1369, 0
    %v1389 = vsel %vm178, %v1370, 0
    %v1392 = vsel %vm178, %v1371, 0
    %v1395 = vsel %vm178, %v1372, 0
    %1397 = vmatprep.subr.bf16.mxu0 0
    %1398 = vmatpush1.bf16.xpose.msra.mxu0 %v1395
    %1399 = vmatprep.subr.bf16.mxu0 0
    %1400 = vmatpush1.bf16.xpose.msra.mxu0 %v1392
    %1401 = vmatprep.subr.bf16.mxu0 0
    %1402 = vmatpush1.bf16.xpose.msra.mxu0 %v1389
    %1403 = vmatprep.subr.bf16.mxu0 0
    %1404 = vmatpush1.bf16.xpose.msra.mxu0 %v1386
    %1405 = vmatprep.subr.bf16.mxu0 0
    %1406 = vmatpush1.bf16.xpose.msra.mxu0 %v1383
    %1407 = vmatprep.subr.bf16.mxu0 0
    %1408 = vmatpush1.bf16.xpose.msra.mxu0 %v1380
    %1409 = vmatprep.subr.bf16.mxu0 0
    %1410 = vmatpush1.bf16.xpose.msra.mxu0 %v1377
    %1411 = vmatprep.subr.bf16.mxu0 0
    %1412 = vmatpush1.bf16.xpose.msra.mxu0 %v1374
    %1413 = vmatprep.subr.bf16.mxu0 0
    %1414 = vmatpush2.bf16.xpose.msra.mxu0 0
    %1415 = vmatprep.subr.bf16.mxu0 0
    %1416 = vmatpush2.bf16.xpose.msra.mxu0 0
    %1417 = vmatprep.subr.bf16.mxu0 0
    %1418 = vmatpush2.bf16.xpose.msra.mxu0 0
    %1419 = vmatprep.subr.bf16.mxu0 0
    %1420 = vmatpush2.bf16.xpose.msra.mxu0 0
    %1421 = vmatprep.subr.bf16.mxu0 0
    %1422 = vmatpush2.bf16.xpose.msra.mxu0 0
    %1423 = vmatprep.subr.bf16.mxu0 0
    %1424 = vmatpush2.bf16.xpose.msra.mxu0 0
    %1425 = vmatprep.subr.bf16.mxu0 0
    %1426 = vmatpush2.bf16.xpose.msra.mxu0 0
    %1427 = vmatprep.subr.bf16.mxu0 0
    %1428 = vmatpush2.bf16.xpose.msra.mxu0 0
    %1429 = vmatprep.mubr.bf16.mxu0 0
    %1430 = vmatmul.mubr.bf16.gmra.mxu0 %v180
    %v1431 = vpop.f32.mrf.mxu0
    %v1432 = vadd.f32 0.0, %v1431
    %v1433 = vpop.f32.mrf.mxu0
    %v1434 = vpop.f32.mrf.mxu0
    %v1435 = vadd.f32 0.0, %v1434
    %v1436 = vpop.f32.mrf.mxu0
    %1437 = vmatprep.mubr.bf16.mxu0 0
    %1438 = vmatmul.mubr.bf16.gmra.mxu0 %v183
    %v1439 = vpop.f32.mrf.mxu0
    %v1440 = vadd.f32 0.0, %v1439
    %v1441 = vpop.f32.mrf.mxu0
    %v1442 = vpop.f32.mrf.mxu0
    %v1443 = vadd.f32 0.0, %v1442
    %v1444 = vpop.f32.mrf.mxu0
    %1445 = vmatprep.mubr.bf16.mxu0 0
    %1446 = vmatmul.mubr.bf16.gmra.mxu0 %v186
    %v1447 = vpop.f32.mrf.mxu0
    %v1448 = vadd.f32 0.0, %v1447
    %v1449 = vpop.f32.mrf.mxu0
    %v1450 = vpop.f32.mrf.mxu0
    %v1451 = vadd.f32 0.0, %v1450
    %v1452 = vpop.f32.mrf.mxu0
    %1453 = vmatprep.mubr.bf16.mxu0 0
    %1454 = vmatmul.mubr.bf16.gmra.mxu0 %v189
    %v1455 = vpop.f32.mrf.mxu0
    %v1456 = vadd.f32 0.0, %v1455
    %v1457 = vpop.f32.mrf.mxu0
    %v1458 = vpop.f32.mrf.mxu0
    %v1459 = vadd.f32 0.0, %v1458
    %v1460 = vpop.f32.mrf.mxu0
    %1461 = vmatprep.mubr.bf16.mxu0 0
    %1462 = vmatmul.mubr.bf16.gmra.mxu0 %v192
    %v1463 = vpop.f32.mrf.mxu0
    %v1464 = vadd.f32 0.0, %v1463
    %v1465 = vpop.f32.mrf.mxu0
    %v1466 = vpop.f32.mrf.mxu0
    %v1467 = vadd.f32 0.0, %v1466
    %v1468 = vpop.f32.mrf.mxu0
    %1469 = vmatprep.mubr.bf16.mxu0 0
    %1470 = vmatmul.mubr.bf16.gmra.mxu0 %v195
    %v1471 = vpop.f32.mrf.mxu0
    %v1472 = vadd.f32 0.0, %v1471
    %v1473 = vpop.f32.mrf.mxu0
    %v1474 = vpop.f32.mrf.mxu0
    %v1475 = vadd.f32 0.0, %v1474
    %v1476 = vpop.f32.mrf.mxu0
    %1477 = vmatprep.mubr.bf16.mxu0 0
    %1478 = vmatmul.mubr.bf16.gmra.mxu0 %v198
    %v1479 = vpop.f32.mrf.mxu0
    %v1480 = vadd.f32 0.0, %v1479
    %v1481 = vpop.f32.mrf.mxu0
    %v1482 = vpop.f32.mrf.mxu0
    %v1483 = vadd.f32 0.0, %v1482
    %v1484 = vpop.f32.mrf.mxu0
    %1485 = vmatprep.mubr.bf16.mxu0 0
    %1486 = vmatmul.mubr.bf16.gmra.mxu0 %v201
    %v1487 = vpop.f32.mrf.mxu0
    %v1488 = vadd.f32 0.0, %v1487
    %v1489 = vpop.f32.mrf.mxu0
    %v1490 = vpop.f32.mrf.mxu0
    %v1491 = vadd.f32 0.0, %v1490
    %v1492 = vpop.f32.mrf.mxu0
    %1493 = vdwg.mxu0
    %1494 = vst [vmem:[%s332] sm:$0xff] %v1432
    %1495 = vst [vmem:[%s332 + $0x8] sm:$0xff] %v1435
    %1496 = vst [vmem:[%s332 + $0x10] sm:$0xff] %v1440
    %1497 = vst [vmem:[%s332 + $0x18] sm:$0xff] %v1443
    %1498 = vst [vmem:[%s332 + $0x20] sm:$0xff] %v1448
    %1499 = vst [vmem:[%s332 + $0x28] sm:$0xff] %v1451
    %1500 = vst [vmem:[%s332 + $0x30] sm:$0xff] %v1456
    %1501 = vst [vmem:[%s332 + $0x38] sm:$0xff] %v1459
    %1502 = vst [vmem:[#allocation2 + $0x40] sm:$0xff] %v1464
    %1503 = vst [vmem:[#allocation2 + $0x48] sm:$0xff] %v1467
    %1504 = vst [vmem:[#allocation2 + $0x50] sm:$0xff] %v1472
    %1505 = vst [vmem:[#allocation2 + $0x58] sm:$0xff] %v1475
    %1506 = vst [vmem:[#allocation2 + $0x60] sm:$0xff] %v1480
    %1507 = vst [vmem:[#allocation2 + $0x68] sm:$0xff] %v1483
    %1508 = vst [vmem:[#allocation2 + $0x70] sm:$0xff] %v1488
    %1509 = vst [vmem:[#allocation2 + $0x78] sm:$0xff] %v1491
    %v1510 = vld [vmem:[#allocation2] sm:$0xff]
    %v1511 = vld [vmem:[#allocation2 + $0x8] sm:$0xff]
    %v1512 = vld [vmem:[#allocation2 + $0x10] sm:$0xff]
    %v1513 = vld [vmem:[#allocation2 + $0x18] sm:$0xff]
    %v1514 = vld [vmem:[#allocation2 + $0x20] sm:$0xff]
    %v1515 = vld [vmem:[#allocation2 + $0x28] sm:$0xff]
    %v1516 = vld [vmem:[#allocation2 + $0x30] sm:$0xff]
    %v1517 = vld [vmem:[#allocation2 + $0x38] sm:$0xff]
    %v1518 = vld [vmem:[#allocation2 + $0x40] sm:$0xff]
    %v1519 = vld [vmem:[#allocation2 + $0x48] sm:$0xff]
    %v1520 = vld [vmem:[#allocation2 + $0x50] sm:$0xff]
    %v1521 = vld [vmem:[#allocation2 + $0x58] sm:$0xff]
    %v1522 = vld [vmem:[#allocation2 + $0x60] sm:$0xff]
    %v1523 = vld [vmem:[#allocation2 + $0x68] sm:$0xff]
    %v1524 = vld [vmem:[#allocation2 + $0x70] sm:$0xff]
    %v1525 = vld [vmem:[#allocation2 + $0x78] sm:$0xff]
    %v1542 = vunpack.c.l.b16 %v50
    %v1543 = vunpack.c.l.b16 %v51
    %v1544 = vunpack.c.l.b16 %v52
    %v1545 = vunpack.c.l.b16 %v53
    %v1546 = vunpack.c.l.b16 %v54
    %v1547 = vunpack.c.l.b16 %v55
    %v1548 = vunpack.c.l.b16 %v56
    %v1549 = vunpack.c.l.b16 %v57
    %v1550 = vunpack.c.l.b16 %v58
    %v1551 = vunpack.c.l.b16 %v59
    %v1552 = vunpack.c.l.b16 %v60
    %v1553 = vunpack.c.l.b16 %v61
    %v1554 = vunpack.c.l.b16 %v62
    %v1555 = vunpack.c.l.b16 %v63
    %v1556 = vunpack.c.l.b16 %v64
    %v1557 = vunpack.c.l.b16 %v65
    %v1558 = vpack.c.b16 %v1543, %v1542
    %v1559 = vpack.c.b16 %v1545, %v1544
    %v1560 = vpack.c.b16 %v1547, %v1546
    %v1561 = vpack.c.b16 %v1549, %v1548
    %v1562 = vpack.c.b16 %v1551, %v1550
    %v1563 = vpack.c.b16 %v1553, %v1552
    %v1564 = vpack.c.b16 %v1555, %v1554
    %v1565 = vpack.c.b16 %v1557, %v1556
    %vm1566 = vcmask 261120
    %v1568 = vsel %vm1566, %v1558, 0
    %v1571 = vsel %vm1566, %v1559, 0
    %v1574 = vsel %vm1566, %v1560, 0
    %v1577 = vsel %vm1566, %v1561, 0
    %v1580 = vsel %vm1566, %v1562, 0
    %v1583 = vsel %vm1566, %v1563, 0
    %v1586 = vsel %vm1566, %v1564, 0
    %v1589 = vsel %vm1566, %v1565, 0
    %1591 = vmatprep.subr.bf16.mxu0 0
    %1592 = vmatpush1.bf16.msra.mxu0 0
    %1593 = vmatprep.subr.bf16.mxu0 0
    %1594 = vmatpush1.bf16.msra.mxu0 0
    %1595 = vmatprep.subr.bf16.mxu0 0
    %1596 = vmatpush1.bf16.msra.mxu0 0
    %1597 = vmatprep.subr.bf16.mxu0 0
    %1598 = vmatpush1.bf16.msra.mxu0 0
    %1599 = vmatprep.subr.bf16.mxu0 0
    %1600 = vmatpush1.bf16.msra.mxu0 0
    %1601 = vmatprep.subr.bf16.mxu0 0
    %1602 = vmatpush1.bf16.msra.mxu0 0
    %1603 = vmatprep.subr.bf16.mxu0 0
    %1604 = vmatpush1.bf16.msra.mxu0 0
    %1605 = vmatprep.subr.bf16.mxu0 0
    %1606 = vmatpush1.bf16.msra.mxu0 0
    %1607 = vmatprep.subr.bf16.mxu0 0
    %1608 = vmatpush2.bf16.msra.mxu0 0
    %1609 = vmatprep.subr.bf16.mxu0 0
    %1610 = vmatpush2.bf16.msra.mxu0 0
    %1611 = vmatprep.subr.bf16.mxu0 0
    %1612 = vmatpush2.bf16.msra.mxu0 0
    %1613 = vmatprep.subr.bf16.mxu0 0
    %1614 = vmatpush2.bf16.msra.mxu0 0
    %1615 = vmatprep.subr.bf16.mxu0 0
    %1616 = vmatpush2.bf16.msra.mxu0 0
    %1617 = vmatprep.subr.bf16.mxu0 0
    %1618 = vmatpush2.bf16.msra.mxu0 0
    %1619 = vmatprep.subr.bf16.mxu0 0
    %1620 = vmatpush2.bf16.msra.mxu0 0
    %1621 = vmatprep.subr.bf16.mxu0 0
    %1622 = vmatpush2.bf16.msra.mxu0 0
    %1623 = vmatprep.mubr.bf16.mxu0 0
    %1624 = vmatmul.mubr.bf16.gmra.mxu0 %v1568
    %v1625 = vpop.f32.mrf.mxu0
    %v1626 = vadd.f32 0.0, %v1625
    %v1627 = vpop.f32.mrf.mxu0
    %v1628 = vpop.f32.mrf.mxu0
    %v1629 = vadd.f32 0.0, %v1628
    %v1630 = vpop.f32.mrf.mxu0
    %1631 = vmatprep.mubr.bf16.mxu0 0
    %1632 = vmatmul.mubr.bf16.gmra.mxu0 %v1571
    %v1633 = vpop.f32.mrf.mxu0
    %v1634 = vadd.f32 0.0, %v1633
    %v1635 = vpop.f32.mrf.mxu0
    %v1636 = vpop.f32.mrf.mxu0
    %v1637 = vadd.f32 0.0, %v1636
    %v1638 = vpop.f32.mrf.mxu0
    %1639 = vmatprep.mubr.bf16.mxu0 0
    %1640 = vmatmul.mubr.bf16.gmra.mxu0 %v1574
    %v1641 = vpop.f32.mrf.mxu0
    %v1642 = vadd.f32 0.0, %v1641
    %v1643 = vpop.f32.mrf.mxu0
    %v1644 = vpop.f32.mrf.mxu0
    %v1645 = vadd.f32 0.0, %v1644
    %v1646 = vpop.f32.mrf.mxu0
    %1647 = vmatprep.mubr.bf16.mxu0 0
    %1648 = vmatmul.mubr.bf16.gmra.mxu0 %v1577
    %v1649 = vpop.f32.mrf.mxu0
    %v1650 = vadd.f32 0.0, %v1649
    %v1651 = vpop.f32.mrf.mxu0
    %v1652 = vpop.f32.mrf.mxu0
    %v1653 = vadd.f32 0.0, %v1652
    %v1654 = vpop.f32.mrf.mxu0
    %1655 = vmatprep.mubr.bf16.mxu0 0
    %1656 = vmatmul.mubr.bf16.gmra.mxu0 %v1580
    %v1657 = vpop.f32.mrf.mxu0
    %v1658 = vadd.f32 0.0, %v1657
    %v1659 = vpop.f32.mrf.mxu0
    %v1660 = vpop.f32.mrf.mxu0
    %v1661 = vadd.f32 0.0, %v1660
    %v1662 = vpop.f32.mrf.mxu0
    %1663 = vmatprep.mubr.bf16.mxu0 0
    %1664 = vmatmul.mubr.bf16.gmra.mxu0 %v1583
    %v1665 = vpop.f32.mrf.mxu0
    %v1666 = vadd.f32 0.0, %v1665
    %v1667 = vpop.f32.mrf.mxu0
    %v1668 = vpop.f32.mrf.mxu0
    %v1669 = vadd.f32 0.0, %v1668
    %v1670 = vpop.f32.mrf.mxu0
    %1671 = vmatprep.mubr.bf16.mxu0 0
    %1672 = vmatmul.mubr.bf16.gmra.mxu0 %v1586
    %v1673 = vpop.f32.mrf.mxu0
    %v1674 = vadd.f32 0.0, %v1673
    %v1675 = vpop.f32.mrf.mxu0
    %v1676 = vpop.f32.mrf.mxu0
    %v1677 = vadd.f32 0.0, %v1676
    %v1678 = vpop.f32.mrf.mxu0
    %1679 = vmatprep.mubr.bf16.mxu0 0
    %1680 = vmatmul.mubr.bf16.gmra.mxu0 %v1589
    %v1681 = vpop.f32.mrf.mxu0
    %v1682 = vadd.f32 0.0, %v1681
    %v1683 = vpop.f32.mrf.mxu0
    %v1684 = vpop.f32.mrf.mxu0
    %v1685 = vadd.f32 0.0, %v1684
    %v1686 = vpop.f32.mrf.mxu0
    %1687 = vdwg.mxu0
    %v1688 = vadd.f32 %v1510, %v1626
    %v1689 = vadd.f32 %v1511, %v1629
    %v1690 = vadd.f32 %v1512, %v1634
    %v1691 = vadd.f32 %v1513, %v1637
    %v1692 = vadd.f32 %v1514, %v1642
    %v1693 = vadd.f32 %v1515, %v1645
    %v1694 = vadd.f32 %v1516, %v1650
    %v1695 = vadd.f32 %v1517, %v1653
    %v1696 = vadd.f32 %v1518, %v1658
    %v1697 = vadd.f32 %v1519, %v1661
    %v1698 = vadd.f32 %v1520, %v1666
    %v1699 = vadd.f32 %v1521, %v1669
    %v1700 = vadd.f32 %v1522, %v1674
    %v1701 = vadd.f32 %v1523, %v1677
    %v1702 = vadd.f32 %v1524, %v1682
    %v1703 = vadd.f32 %v1525, %v1685
    %1705 = vset.pattern.permute.xlu0 0
    %1706 = vperm.xlu0 %1705, %v66
    %v1707 = vpop.permute.xlu0 %1706
    %1710 = vset.pattern.permute.xlu0 0
    %1711 = vperm.xlu0 %1710, %v67
    %v1712 = vpop.permute.xlu0 %1711
    %1715 = vset.pattern.permute.xlu0 0
    %1716 = vperm.xlu0 %1715, %v68
    %v1717 = vpop.permute.xlu0 %1716
    %1720 = vset.pattern.permute.xlu0 0
    %1721 = vperm.xlu0 %1720, %v69
    %v1722 = vpop.permute.xlu0 %1721
    %1725 = vset.pattern.permute.xlu0 0
    %1726 = vperm.xlu0 %1725, %v70
    %v1727 = vpop.permute.xlu0 %1726
    %1730 = vset.pattern.permute.xlu0 0
    %1731 = vperm.xlu0 %1730, %v71
    %v1732 = vpop.permute.xlu0 %1731
    %1735 = vset.pattern.permute.xlu0 0
    %1736 = vperm.xlu0 %1735, %v72
    %v1737 = vpop.permute.xlu0 %1736
    %1740 = vset.pattern.permute.xlu0 0
    %1741 = vperm.xlu0 %1740, %v73
    %v1742 = vpop.permute.xlu0 %1741
    %1745 = vset.pattern.permute.xlu0 0
    %1746 = vperm.xlu0 %1745, %v74
    %v1747 = vpop.permute.xlu0 %1746
    %1750 = vset.pattern.permute.xlu0 0
    %1751 = vperm.xlu0 %1750, %v75
    %v1752 = vpop.permute.xlu0 %1751
    %1755 = vset.pattern.permute.xlu0 0
    %1756 = vperm.xlu0 %1755, %v76
    %v1757 = vpop.permute.xlu0 %1756
    %1760 = vset.pattern.permute.xlu0 0
    %1761 = vperm.xlu0 %1760, %v77
    %v1762 = vpop.permute.xlu0 %1761
    %1765 = vset.pattern.permute.xlu0 0
    %1766 = vperm.xlu0 %1765, %v78
    %v1767 = vpop.permute.xlu0 %1766
    %1770 = vset.pattern.permute.xlu0 0
    %1771 = vperm.xlu0 %1770, %v79
    %v1772 = vpop.permute.xlu0 %1771
    %1775 = vset.pattern.permute.xlu0 0
    %1776 = vperm.xlu0 %1775, %v80
    %v1777 = vpop.permute.xlu0 %1776
    %1780 = vset.pattern.permute.xlu0 0
    %1781 = vperm.xlu0 %1780, %v81
    %v1782 = vpop.permute.xlu0 %1781
    %v1784 = vadd.f32 %v1688, %v1707
    %v1785 = vadd.f32 %v1689, %v1712
    %v1786 = vadd.f32 %v1690, %v1717
    %v1787 = vadd.f32 %v1691, %v1722
    %v1788 = vadd.f32 %v1692, %v1727
    %v1789 = vadd.f32 %v1693, %v1732
    %v1790 = vadd.f32 %v1694, %v1737
    %v1791 = vadd.f32 %v1695, %v1742
    %v1792 = vadd.f32 %v1696, %v1747
    %v1793 = vadd.f32 %v1697, %v1752
    %v1794 = vadd.f32 %v1698, %v1757
    %v1795 = vadd.f32 %v1699, %v1762
    %v1796 = vadd.f32 %v1700, %v1767
    %v1797 = vadd.f32 %v1701, %v1772
    %v1798 = vadd.f32 %v1702, %v1777
    %v1799 = vadd.f32 %v1703, %v1782
    %v1800 = vxor.u32 %v1784, 2147483648
    %v1801 = vxor.u32 %v1785, 2147483648
    %v1802 = vmul.f32 %v1800, 1.442695
    %v1803 = vpow.pop %v1802
    %v1804 = vmul.f32 %v1801, 1.442695
    %v1805 = vpow.pop %v1804
    %v1806 = vadd.f32 %v1803, 1.0
    %v1807 = vadd.f32 %v1805, 1.0
    %v1808 = vrcp.pop %v1806
    %v1809 = vmul.f32 1.0, %v1808
    %v1810 = vrcp.pop %v1807
    %v1811 = vmul.f32 1.0, %v1810
    %v1812 = vxor.u32 %v1786, 2147483648
    %v1813 = vxor.u32 %v1787, 2147483648
    %v1814 = vmul.f32 %v1812, 1.442695
    %v1815 = vpow.pop %v1814
    %v1816 = vmul.f32 %v1813, 1.442695
    %v1817 = vpow.pop %v1816
    %v1818 = vadd.f32 %v1815, 1.0
    %v1819 = vadd.f32 %v1817, 1.0
    %v1820 = vrcp.pop %v1818
    %v1821 = vmul.f32 1.0, %v1820
    %v1822 = vrcp.pop %v1819
    %v1823 = vmul.f32 1.0, %v1822
    %v1824 = vtanh.pop %v1788
    %v1825 = vtanh.pop %v1789
    %v1826 = vxor.u32 %v1790, 2147483648
    %v1827 = vxor.u32 %v1791, 2147483648
    %v1828 = vmul.f32 %v1826, 1.442695
    %v1829 = vpow.pop %v1828
    %v1830 = vmul.f32 %v1827, 1.442695
    %v1831 = vpow.pop %v1830
    %v1832 = vadd.f32 %v1829, 1.0
    %v1833 = vadd.f32 %v1831, 1.0
    %v1834 = vrcp.pop %v1832
    %v1835 = vmul.f32 1.0, %v1834
    %v1836 = vrcp.pop %v1833
    %v1837 = vmul.f32 1.0, %v1836
    %v1838 = vxor.u32 %v1792, 2147483648
    %v1839 = vxor.u32 %v1793, 2147483648
    %v1840 = vmul.f32 %v1838, 1.442695
    %v1841 = vpow.pop %v1840
    %v1842 = vmul.f32 %v1839, 1.442695
    %v1843 = vpow.pop %v1842
    %v1844 = vadd.f32 %v1841, 1.0
    %v1845 = vadd.f32 %v1843, 1.0
    %v1846 = vrcp.pop %v1844
    %v1847 = vmul.f32 1.0, %v1846
    %v1848 = vrcp.pop %v1845
    %v1849 = vmul.f32 1.0, %v1848
    %v1850 = vxor.u32 %v1794, 2147483648
    %v1851 = vxor.u32 %v1795, 2147483648
    %v1852 = vmul.f32 %v1850, 1.442695
    %v1853 = vpow.pop %v1852
    %v1854 = vmul.f32 %v1851, 1.442695
    %v1855 = vpow.pop %v1854
    %v1856 = vadd.f32 %v1853, 1.0
    %v1857 = vadd.f32 %v1855, 1.0
    %v1858 = vrcp.pop %v1856
    %v1859 = vmul.f32 1.0, %v1858
    %v1860 = vrcp.pop %v1857
    %v1861 = vmul.f32 1.0, %v1860
    %v1862 = vtanh.pop %v1796
    %v1863 = vtanh.pop %v1797
    %v1864 = vxor.u32 %v1798, 2147483648
    %v1865 = vxor.u32 %v1799, 2147483648
    %v1866 = vmul.f32 %v1864, 1.442695
    %v1867 = vpow.pop %v1866
    %v1868 = vmul.f32 %v1865, 1.442695
    %v1869 = vpow.pop %v1868
    %v1870 = vadd.f32 %v1867, 1.0
    %v1871 = vadd.f32 %v1869, 1.0
    %v1872 = vrcp.pop %v1870
    %v1873 = vmul.f32 1.0, %v1872
    %v1874 = vrcp.pop %v1871
    %v1875 = vmul.f32 1.0, %v1874
    %v1876 = vmul.f32 %v1821, 0.0
    %v1877 = vmul.f32 %v1823, 0.0
    %v1878 = vmul.f32 %v1809, %v1824
    %v1879 = vmul.f32 %v1811, %v1825
    %v1880 = vadd.f32 %v1876, %v1878
    %v1881 = vadd.f32 %v1877, %v1879
    %v1882 = vmul.f32 %v1859, 0.0
    %v1883 = vmul.f32 %v1861, 0.0
    %v1884 = vmul.f32 %v1847, %v1862
    %v1885 = vmul.f32 %v1849, %v1863
    %v1886 = vadd.f32 %v1882, %v1884
    %v1887 = vadd.f32 %v1883, %v1885
    %v1888 = vtanh.pop %v1880
    %v1889 = vtanh.pop %v1881
    %v1890 = vmul.f32 %v1835, %v1888
    %v1891 = vmul.f32 %v1837, %v1889
    %v1892 = vtanh.pop %v1886
    %v1893 = vtanh.pop %v1887
    %v1894 = vmul.f32 %v1873, %v1892
    %v1895 = vmul.f32 %v1875, %v1893
    %v1896 = vld [vmem:[%s519] sm:$0xff]
    %v1897 = vld [vmem:[%s519 + $0x8] sm:$0xff]
    %v1898 = vld [vmem:[%s519 + $0x10] sm:$0xff]
    %v1899 = vld [vmem:[%s519 + $0x18] sm:$0xff]
    %v1900 = vld [vmem:[%s519 + $0x20] sm:$0xff]
    %v1901 = vld [vmem:[%s519 + $0x28] sm:$0xff]
    %v1902 = vld [vmem:[%s519 + $0x30] sm:$0xff]
    %v1903 = vld [vmem:[%s519 + $0x38] sm:$0xff]
    %v1904 = vld [vmem:[%s519 + $0x40] sm:$0xff]
    %v1905 = vld [vmem:[%s519 + $0x48] sm:$0xff]
    %v1906 = vld [vmem:[%s519 + $0x50] sm:$0xff]
    %v1907 = vld [vmem:[%s519 + $0x58] sm:$0xff]
    %v1908 = vld [vmem:[%s519 + $0x60] sm:$0xff]
    %v1909 = vld [vmem:[%s519 + $0x68] sm:$0xff]
    %v1910 = vld [vmem:[%s519 + $0x70] sm:$0xff]
    %v1911 = vld [vmem:[%s519 + $0x78] sm:$0xff]
    %v1912 = vpack.c.bf16 %v1891, %v1890
    %v1913 = vpack.c.bf16 %v1895, %v1894
    %1914 = vmatprep.subr.bf16.mxu0 0
    %1915 = vmatpush1.bf16.msra.mxu0 0
    %1916 = vmatprep.subr.bf16.mxu0 0
    %1917 = vmatpush1.bf16.msra.mxu0 0
    %1918 = vmatprep.subr.bf16.mxu0 0
    %1919 = vmatpush1.bf16.msra.mxu0 0
    %1920 = vmatprep.subr.bf16.mxu0 0
    %1921 = vmatpush1.bf16.msra.mxu0 0
    %1922 = vmatprep.subr.bf16.mxu0 0
    %1923 = vmatpush1.bf16.msra.mxu0 0
    %1924 = vmatprep.subr.bf16.mxu0 0
    %1925 = vmatpush1.bf16.msra.mxu0 0
    %1926 = vmatprep.subr.bf16.mxu0 0
    %1927 = vmatpush1.bf16.msra.mxu0 %v1913
    %1928 = vmatprep.subr.bf16.mxu0 0
    %1929 = vmatpush1.bf16.msra.mxu0 %v1912
    %1930 = vmatprep.subr.bf16.mxu0 0
    %1931 = vmatpush2.bf16.msra.mxu0 0
    %1932 = vmatprep.subr.bf16.mxu0 0
    %1933 = vmatpush2.bf16.msra.mxu0 0
    %1934 = vmatprep.subr.bf16.mxu0 0
    %1935 = vmatpush2.bf16.msra.mxu0 0
    %1936 = vmatprep.subr.bf16.mxu0 0
    %1937 = vmatpush2.bf16.msra.mxu0 0
    %1938 = vmatprep.subr.bf16.mxu0 0
    %1939 = vmatpush2.bf16.msra.mxu0 0
    %1940 = vmatprep.subr.bf16.mxu0 0
    %1941 = vmatpush2.bf16.msra.mxu0 0
    %1942 = vmatprep.subr.bf16.mxu0 0
    %1943 = vmatpush2.bf16.msra.mxu0 0
    %1944 = vmatprep.subr.bf16.mxu0 0
    %1945 = vmatpush2.bf16.msra.mxu0 0
    %1946 = vmatprep.mubr.bf16.mxu0 0
    %1947 = vmatmul.mubr.bf16.gmra.mxu0 %v1568
    %v1948 = vpop.f32.mrf.mxu0
    %v1949 = vadd.f32 0.0, %v1948
    %v1950 = vpop.f32.mrf.mxu0
    %v1951 = vpop.f32.mrf.mxu0
    %v1952 = vadd.f32 0.0, %v1951
    %v1953 = vpop.f32.mrf.mxu0
    %1954 = vmatprep.mubr.bf16.mxu0 0
    %1955 = vmatmul.mubr.bf16.gmra.mxu0 %v1571
    %v1956 = vpop.f32.mrf.mxu0
    %v1957 = vadd.f32 0.0, %v1956
    %v1958 = vpop.f32.mrf.mxu0
    %v1959 = vpop.f32.mrf.mxu0
    %v1960 = vadd.f32 0.0, %v1959
    %v1961 = vpop.f32.mrf.mxu0
    %1962 = vmatprep.mubr.bf16.mxu0 0
    %1963 = vmatmul.mubr.bf16.gmra.mxu0 %v1574
    %v1964 = vpop.f32.mrf.mxu0
    %v1965 = vadd.f32 0.0, %v1964
    %v1966 = vpop.f32.mrf.mxu0
    %v1967 = vpop.f32.mrf.mxu0
    %v1968 = vadd.f32 0.0, %v1967
    %v1969 = vpop.f32.mrf.mxu0
    %1970 = vmatprep.mubr.bf16.mxu0 0
    %1971 = vmatmul.mubr.bf16.gmra.mxu0 %v1577
    %v1972 = vpop.f32.mrf.mxu0
    %v1973 = vadd.f32 0.0, %v1972
    %v1974 = vpop.f32.mrf.mxu0
    %v1975 = vpop.f32.mrf.mxu0
    %v1976 = vadd.f32 0.0, %v1975
    %v1977 = vpop.f32.mrf.mxu0
    %1978 = vmatprep.mubr.bf16.mxu0 0
    %1979 = vmatmul.mubr.bf16.gmra.mxu0 %v1580
    %v1980 = vpop.f32.mrf.mxu0
    %v1981 = vadd.f32 0.0, %v1980
    %v1982 = vpop.f32.mrf.mxu0
    %v1983 = vpop.f32.mrf.mxu0
    %v1984 = vadd.f32 0.0, %v1983
    %v1985 = vpop.f32.mrf.mxu0
    %1986 = vmatprep.mubr.bf16.mxu0 0
    %1987 = vmatmul.mubr.bf16.gmra.mxu0 %v1583
    %v1988 = vpop.f32.mrf.mxu0
    %v1989 = vadd.f32 0.0, %v1988
    %v1990 = vpop.f32.mrf.mxu0
    %v1991 = vpop.f32.mrf.mxu0
    %v1992 = vadd.f32 0.0, %v1991
    %v1993 = vpop.f32.mrf.mxu0
    %1994 = vmatprep.mubr.bf16.mxu0 0
    %1995 = vmatmul.mubr.bf16.gmra.mxu0 %v1586
    %v1996 = vpop.f32.mrf.mxu0
    %v1997 = vadd.f32 0.0, %v1996
    %v1998 = vpop.f32.mrf.mxu0
    %v1999 = vpop.f32.mrf.mxu0
    %v2000 = vadd.f32 0.0, %v1999
    %v2001 = vpop.f32.mrf.mxu0
    %2002 = vmatprep.mubr.bf16.mxu0 0
    %2003 = vmatmul.mubr.bf16.gmra.mxu0 %v1589
    %v2004 = vpop.f32.mrf.mxu0
    %v2005 = vadd.f32 0.0, %v2004
    %v2006 = vpop.f32.mrf.mxu0
    %v2007 = vpop.f32.mrf.mxu0
    %v2008 = vadd.f32 0.0, %v2007
    %v2009 = vpop.f32.mrf.mxu0
    %2010 = vdwg.mxu0
    %v2011 = vadd.f32 %v1896, %v1949
    %v2012 = vadd.f32 %v1897, %v1952
    %v2013 = vadd.f32 %v1898, %v1957
    %v2014 = vadd.f32 %v1899, %v1960
    %v2015 = vadd.f32 %v1900, %v1965
    %v2016 = vadd.f32 %v1901, %v1968
    %v2017 = vadd.f32 %v1902, %v1973
    %v2018 = vadd.f32 %v1903, %v1976
    %v2019 = vadd.f32 %v1904, %v1981
    %v2020 = vadd.f32 %v1905, %v1984
    %v2021 = vadd.f32 %v1906, %v1989
    %v2022 = vadd.f32 %v1907, %v1992
    %v2023 = vadd.f32 %v1908, %v1997
    %v2024 = vadd.f32 %v1909, %v2000
    %v2025 = vadd.f32 %v1910, %v2005
    %v2026 = vadd.f32 %v1911, %v2008
    %v2027 = vadd.f32 %v2011, %v1707
    %v2028 = vadd.f32 %v2012, %v1712
    %v2029 = vadd.f32 %v2013, %v1717
    %v2030 = vadd.f32 %v2014, %v1722
    %v2031 = vadd.f32 %v2015, %v1727
    %v2032 = vadd.f32 %v2016, %v1732
    %v2033 = vadd.f32 %v2017, %v1737
    %v2034 = vadd.f32 %v2018, %v1742
    %v2035 = vadd.f32 %v2019, %v1747
    %v2036 = vadd.f32 %v2020, %v1752
    %v2037 = vadd.f32 %v2021, %v1757
    %v2038 = vadd.f32 %v2022, %v1762
    %v2039 = vadd.f32 %v2023, %v1767
    %v2040 = vadd.f32 %v2024, %v1772
    %v2041 = vadd.f32 %v2025, %v1777
    %v2042 = vadd.f32 %v2026, %v1782
    %v2043 = vxor.u32 %v2027, 2147483648
    %v2044 = vxor.u32 %v2028, 2147483648
    %v2045 = vmul.f32 %v2043, 1.442695
    %v2046 = vpow.pop %v2045
    %v2047 = vmul.f32 %v2044, 1.442695
    %v2048 = vpow.pop %v2047
    %v2049 = vadd.f32 %v2046, 1.0
    %v2050 = vadd.f32 %v2048, 1.0
    %v2051 = vrcp.pop %v2049
    %v2052 = vmul.f32 1.0, %v2051
    %v2053 = vrcp.pop %v2050
    %v2054 = vmul.f32 1.0, %v2053
    %v2055 = vxor.u32 %v2029, 2147483648
    %v2056 = vxor.u32 %v2030, 2147483648
    %v2057 = vmul.f32 %v2055, 1.442695
    %v2058 = vpow.pop %v2057
    %v2059 = vmul.f32 %v2056, 1.442695
    %v2060 = vpow.pop %v2059
    %v2061 = vadd.f32 %v2058, 1.0
    %v2062 = vadd.f32 %v2060, 1.0
    %v2063 = vrcp.pop %v2061
    %v2064 = vmul.f32 1.0, %v2063
    %v2065 = vrcp.pop %v2062
    %v2066 = vmul.f32 1.0, %v2065
    %v2067 = vtanh.pop %v2031
    %v2068 = vtanh.pop %v2032
    %v2069 = vxor.u32 %v2033, 2147483648
    %v2070 = vxor.u32 %v2034, 2147483648
    %v2071 = vmul.f32 %v2069, 1.442695
    %v2072 = vpow.pop %v2071
    %v2073 = vmul.f32 %v2070, 1.442695
    %v2074 = vpow.pop %v2073
    %v2075 = vadd.f32 %v2072, 1.0
    %v2076 = vadd.f32 %v2074, 1.0
    %v2077 = vrcp.pop %v2075
    %v2078 = vmul.f32 1.0, %v2077
    %v2079 = vrcp.pop %v2076
    %v2080 = vmul.f32 1.0, %v2079
    %v2081 = vxor.u32 %v2035, 2147483648
    %v2082 = vxor.u32 %v2036, 2147483648
    %v2083 = vmul.f32 %v2081, 1.442695
    %v2084 = vpow.pop %v2083
    %v2085 = vmul.f32 %v2082, 1.442695
    %v2086 = vpow.pop %v2085
    %v2087 = vadd.f32 %v2084, 1.0
    %v2088 = vadd.f32 %v2086, 1.0
    %v2089 = vrcp.pop %v2087
    %v2090 = vmul.f32 1.0, %v2089
    %v2091 = vrcp.pop %v2088
    %v2092 = vmul.f32 1.0, %v2091
    %v2093 = vxor.u32 %v2037, 2147483648
    %v2094 = vxor.u32 %v2038, 2147483648
    %v2095 = vmul.f32 %v2093, 1.442695
    %v2096 = vpow.pop %v2095
    %v2097 = vmul.f32 %v2094, 1.442695
    %v2098 = vpow.pop %v2097
    %v2099 = vadd.f32 %v2096, 1.0
    %v2100 = vadd.f32 %v2098, 1.0
    %v2101 = vrcp.pop %v2099
    %v2102 = vmul.f32 1.0, %v2101
    %v2103 = vrcp.pop %v2100
    %v2104 = vmul.f32 1.0, %v2103
    %v2105 = vtanh.pop %v2039
    %v2106 = vtanh.pop %v2040
    %v2107 = vxor.u32 %v2041, 2147483648
    %v2108 = vxor.u32 %v2042, 2147483648
    %v2109 = vmul.f32 %v2107, 1.442695
    %v2110 = vpow.pop %v2109
    %v2111 = vmul.f32 %v2108, 1.442695
    %v2112 = vpow.pop %v2111
    %v2113 = vadd.f32 %v2110, 1.0
    %v2114 = vadd.f32 %v2112, 1.0
    %v2115 = vrcp.pop %v2113
    %v2116 = vmul.f32 1.0, %v2115
    %v2117 = vrcp.pop %v2114
    %v2118 = vmul.f32 1.0, %v2117
    %v2119 = vmul.f32 %v2064, %v1880
    %v2120 = vmul.f32 %v2066, %v1881
    %v2121 = vmul.f32 %v2052, %v2067
    %v2122 = vmul.f32 %v2054, %v2068
    %v2123 = vadd.f32 %v2119, %v2121
    %v2124 = vadd.f32 %v2120, %v2122
    %v2125 = vmul.f32 %v2102, %v1886
    %v2126 = vmul.f32 %v2104, %v1887
    %v2127 = vmul.f32 %v2090, %v2105
    %v2128 = vmul.f32 %v2092, %v2106
    %v2129 = vadd.f32 %v2125, %v2127
    %v2130 = vadd.f32 %v2126, %v2128
    %v2131 = vtanh.pop %v2123
    %v2132 = vtanh.pop %v2124
    %v2133 = vmul.f32 %v2078, %v2131
    %v2134 = vmul.f32 %v2080, %v2132
    %v2135 = vtanh.pop %v2129
    %v2136 = vtanh.pop %v2130
    %v2137 = vmul.f32 %v2116, %v2135
    %v2138 = vmul.f32 %v2118, %v2136
    %v2139 = vld [vmem:[%s715] sm:$0xff]
    %v2140 = vld [vmem:[%s715 + $0x8] sm:$0xff]
    %v2141 = vld [vmem:[%s715 + $0x10] sm:$0xff]
    %v2142 = vld [vmem:[%s715 + $0x18] sm:$0xff]
    %v2143 = vld [vmem:[%s715 + $0x20] sm:$0xff]
    %v2144 = vld [vmem:[%s715 + $0x28] sm:$0xff]
    %v2145 = vld [vmem:[%s715 + $0x30] sm:$0xff]
    %v2146 = vld [vmem:[%s715 + $0x38] sm:$0xff]
    %v2147 = vld [vmem:[%s715 + $0x40] sm:$0xff]
    %v2148 = vld [vmem:[%s715 + $0x48] sm:$0xff]
    %v2149 = vld [vmem:[%s715 + $0x50] sm:$0xff]
    %v2150 = vld [vmem:[%s715 + $0x58] sm:$0xff]
    %v2151 = vld [vmem:[%s715 + $0x60] sm:$0xff]
    %v2152 = vld [vmem:[%s715 + $0x68] sm:$0xff]
    %v2153 = vld [vmem:[%s715 + $0x70] sm:$0xff]
    %v2154 = vld [vmem:[%s715 + $0x78] sm:$0xff]
    %v2155 = vpack.c.bf16 %v2134, %v2133
    %v2156 = vpack.c.bf16 %v2138, %v2137
    %2157 = vmatprep.subr.bf16.mxu0 0
    %2158 = vmatpush1.bf16.msra.mxu0 0
    %2159 = vmatprep.subr.bf16.mxu0 0
    %2160 = vmatpush1.bf16.msra.mxu0 0
    %2161 = vmatprep.subr.bf16.mxu0 0
    %2162 = vmatpush1.bf16.msra.mxu0 0
    %2163 = vmatprep.subr.bf16.mxu0 0
    %2164 = vmatpush1.bf16.msra.mxu0 0
    %2165 = vmatprep.subr.bf16.mxu0 0
    %2166 = vmatpush1.bf16.msra.mxu0 0
    %2167 = vmatprep.subr.bf16.mxu0 0
    %2168 = vmatpush1.bf16.msra.mxu0 0
    %2169 = vmatprep.subr.bf16.mxu0 0
    %2170 = vmatpush1.bf16.msra.mxu0 %v2156
    %2171 = vmatprep.subr.bf16.mxu0 0
    %2172 = vmatpush1.bf16.msra.mxu0 %v2155
    %2173 = vmatprep.subr.bf16.mxu0 0
    %2174 = vmatpush2.bf16.msra.mxu0 0
    %2175 = vmatprep.subr.bf16.mxu0 0
    %2176 = vmatpush2.bf16.msra.mxu0 0
    %2177 = vmatprep.subr.bf16.mxu0 0
    %2178 = vmatpush2.bf16.msra.mxu0 0
    %2179 = vmatprep.subr.bf16.mxu0 0
    %2180 = vmatpush2.bf16.msra.mxu0 0
    %2181 = vmatprep.subr.bf16.mxu0 0
    %2182 = vmatpush2.bf16.msra.mxu0 0
    %2183 = vmatprep.subr.bf16.mxu0 0
    %2184 = vmatpush2.bf16.msra.mxu0 0
    %2185 = vmatprep.subr.bf16.mxu0 0
    %2186 = vmatpush2.bf16.msra.mxu0 0
    %2187 = vmatprep.subr.bf16.mxu0 0
    %2188 = vmatpush2.bf16.msra.mxu0 0
    %2189 = vmatprep.mubr.bf16.mxu0 0
    %2190 = vmatmul.mubr.bf16.gmra.mxu0 %v1568
    %v2191 = vpop.f32.mrf.mxu0
    %v2192 = vadd.f32 0.0, %v2191
    %v2193 = vpop.f32.mrf.mxu0
    %v2194 = vpop.f32.mrf.mxu0
    %v2195 = vadd.f32 0.0, %v2194
    %v2196 = vpop.f32.mrf.mxu0
    %2197 = vmatprep.mubr.bf16.mxu0 0
    %2198 = vmatmul.mubr.bf16.gmra.mxu0 %v1571
    %v2199 = vpop.f32.mrf.mxu0
    %v2200 = vadd.f32 0.0, %v2199
    %v2201 = vpop.f32.mrf.mxu0
    %v2202 = vpop.f32.mrf.mxu0
    %v2203 = vadd.f32 0.0, %v2202
    %v2204 = vpop.f32.mrf.mxu0
    %2205 = vmatprep.mubr.bf16.mxu0 0
    %2206 = vmatmul.mubr.bf16.gmra.mxu0 %v1574
    %v2207 = vpop.f32.mrf.mxu0
    %v2208 = vadd.f32 0.0, %v2207
    %v2209 = vpop.f32.mrf.mxu0
    %v2210 = vpop.f32.mrf.mxu0
    %v2211 = vadd.f32 0.0, %v2210
    %v2212 = vpop.f32.mrf.mxu0
    %2213 = vmatprep.mubr.bf16.mxu0 0
    %2214 = vmatmul.mubr.bf16.gmra.mxu0 %v1577
    %v2215 = vpop.f32.mrf.mxu0
    %v2216 = vadd.f32 0.0, %v2215
    %v2217 = vpop.f32.mrf.mxu0
    %v2218 = vpop.f32.mrf.mxu0
    %v2219 = vadd.f32 0.0, %v2218
    %v2220 = vpop.f32.mrf.mxu0
    %2221 = vmatprep.mubr.bf16.mxu0 0
    %2222 = vmatmul.mubr.bf16.gmra.mxu0 %v1580
    %v2223 = vpop.f32.mrf.mxu0
    %v2224 = vadd.f32 0.0, %v2223
    %v2225 = vpop.f32.mrf.mxu0
    %v2226 = vpop.f32.mrf.mxu0
    %v2227 = vadd.f32 0.0, %v2226
    %v2228 = vpop.f32.mrf.mxu0
    %2229 = vmatprep.mubr.bf16.mxu0 0
    %2230 = vmatmul.mubr.bf16.gmra.mxu0 %v1583
    %v2231 = vpop.f32.mrf.mxu0
    %v2232 = vadd.f32 0.0, %v2231
    %v2233 = vpop.f32.mrf.mxu0
    %v2234 = vpop.f32.mrf.mxu0
    %v2235 = vadd.f32 0.0, %v2234
    %v2236 = vpop.f32.mrf.mxu0
    %2237 = vmatprep.mubr.bf16.mxu0 0
    %2238 = vmatmul.mubr.bf16.gmra.mxu0 %v1586
    %v2239 = vpop.f32.mrf.mxu0
    %v2240 = vadd.f32 0.0, %v2239
    %v2241 = vpop.f32.mrf.mxu0
    %v2242 = vpop.f32.mrf.mxu0
    %v2243 = vadd.f32 0.0, %v2242
    %v2244 = vpop.f32.mrf.mxu0
    %2245 = vmatprep.mubr.bf16.mxu0 0
    %2246 = vmatmul.mubr.bf16.gmra.mxu0 %v1589
    %v2247 = vpop.f32.mrf.mxu0
    %v2248 = vadd.f32 0.0, %v2247
    %v2249 = vpop.f32.mrf.mxu0
    %v2250 = vpop.f32.mrf.mxu0
    %v2251 = vadd.f32 0.0, %v2250
    %v2252 = vpop.f32.mrf.mxu0
    %2253 = vdwg.mxu0
    %v2254 = vadd.f32 %v2139, %v2192
    %v2255 = vadd.f32 %v2140, %v2195
    %v2256 = vadd.f32 %v2141, %v2200
    %v2257 = vadd.f32 %v2142, %v2203
    %v2258 = vadd.f32 %v2143, %v2208
    %v2259 = vadd.f32 %v2144, %v2211
    %v2260 = vadd.f32 %v2145, %v2216
    %v2261 = vadd.f32 %v2146, %v2219
    %v2262 = vadd.f32 %v2147, %v2224
    %v2263 = vadd.f32 %v2148, %v2227
    %v2264 = vadd.f32 %v2149, %v2232
    %v2265 = vadd.f32 %v2150, %v2235
    %v2266 = vadd.f32 %v2151, %v2240
    %v2267 = vadd.f32 %v2152, %v2243
    %v2268 = vadd.f32 %v2153, %v2248
    %v2269 = vadd.f32 %v2154, %v2251
    %v2270 = vadd.f32 %v2254, %v1707
    %v2271 = vadd.f32 %v2255, %v1712
    %v2272 = vadd.f32 %v2256, %v1717
    %v2273 = vadd.f32 %v2257, %v1722
    %v2274 = vadd.f32 %v2258, %v1727
    %v2275 = vadd.f32 %v2259, %v1732
    %v2276 = vadd.f32 %v2260, %v1737
    %v2277 = vadd.f32 %v2261, %v1742
    %v2278 = vadd.f32 %v2262, %v1747
    %v2279 = vadd.f32 %v2263, %v1752
    %v2280 = vadd.f32 %v2264, %v1757
    %v2281 = vadd.f32 %v2265, %v1762
    %v2282 = vadd.f32 %v2266, %v1767
    %v2283 = vadd.f32 %v2267, %v1772
    %v2284 = vadd.f32 %v2268, %v1777
    %v2285 = vadd.f32 %v2269, %v1782
    %v2286 = vxor.u32 %v2270, 2147483648
    %v2287 = vxor.u32 %v2271, 2147483648
    %v2288 = vmul.f32 %v2286, 1.442695
    %v2289 = vpow.pop %v2288
    %v2290 = vmul.f32 %v2287, 1.442695
    %v2291 = vpow.pop %v2290
    %v2292 = vadd.f32 %v2289, 1.0
    %v2293 = vadd.f32 %v2291, 1.0
    %v2294 = vrcp.pop %v2292
    %v2295 = vmul.f32 1.0, %v2294
    %v2296 = vrcp.pop %v2293
    %v2297 = vmul.f32 1.0, %v2296
    %v2298 = vxor.u32 %v2272, 2147483648
    %v2299 = vxor.u32 %v2273, 2147483648
    %v2300 = vmul.f32 %v2298, 1.442695
    %v2301 = vpow.pop %v2300
    %v2302 = vmul.f32 %v2299, 1.442695
    %v2303 = vpow.pop %v2302
    %v2304 = vadd.f32 %v2301, 1.0
    %v2305 = vadd.f32 %v2303, 1.0
    %v2306 = vrcp.pop %v2304
    %v2307 = vmul.f32 1.0, %v2306
    %v2308 = vrcp.pop %v2305
    %v2309 = vmul.f32 1.0, %v2308
    %v2310 = vtanh.pop %v2274
    %v2311 = vtanh.pop %v2275
    %v2312 = vxor.u32 %v2276, 2147483648
    %v2313 = vxor.u32 %v2277, 2147483648
    %v2314 = vmul.f32 %v2312, 1.442695
    %v2315 = vpow.pop %v2314
    %v2316 = vmul.f32 %v2313, 1.442695
    %v2317 = vpow.pop %v2316
    %v2318 = vadd.f32 %v2315, 1.0
    %v2319 = vadd.f32 %v2317, 1.0
    %v2320 = vrcp.pop %v2318
    %v2321 = vmul.f32 1.0, %v2320
    %v2322 = vrcp.pop %v2319
    %v2323 = vmul.f32 1.0, %v2322
    %v2324 = vxor.u32 %v2278, 2147483648
    %v2325 = vxor.u32 %v2279, 2147483648
    %v2326 = vmul.f32 %v2324, 1.442695
    %v2327 = vpow.pop %v2326
    %v2328 = vmul.f32 %v2325, 1.442695
    %v2329 = vpow.pop %v2328
    %v2330 = vadd.f32 %v2327, 1.0
    %v2331 = vadd.f32 %v2329, 1.0
    %v2332 = vrcp.pop %v2330
    %v2333 = vmul.f32 1.0, %v2332
    %v2334 = vrcp.pop %v2331
    %v2335 = vmul.f32 1.0, %v2334
    %v2336 = vxor.u32 %v2280, 2147483648
    %v2337 = vxor.u32 %v2281, 2147483648
    %v2338 = vmul.f32 %v2336, 1.442695
    %v2339 = vpow.pop %v2338
    %v2340 = vmul.f32 %v2337, 1.442695
    %v2341 = vpow.pop %v2340
    %v2342 = vadd.f32 %v2339, 1.0
    %v2343 = vadd.f32 %v2341, 1.0
    %v2344 = vrcp.pop %v2342
    %v2345 = vmul.f32 1.0, %v2344
    %v2346 = vrcp.pop %v2343
    %v2347 = vmul.f32 1.0, %v2346
    %v2348 = vtanh.pop %v2282
    %v2349 = vtanh.pop %v2283
    %v2350 = vxor.u32 %v2284, 2147483648
    %v2351 = vxor.u32 %v2285, 2147483648
    %v2352 = vmul.f32 %v2350, 1.442695
    %v2353 = vpow.pop %v2352
    %v2354 = vmul.f32 %v2351, 1.442695
    %v2355 = vpow.pop %v2354
    %v2356 = vadd.f32 %v2353, 1.0
    %v2357 = vadd.f32 %v2355, 1.0
    %v2358 = vrcp.pop %v2356
    %v2359 = vmul.f32 1.0, %v2358
    %v2360 = vrcp.pop %v2357
    %v2361 = vmul.f32 1.0, %v2360
    %v2362 = vmul.f32 %v2307, %v2123
    %v2363 = vmul.f32 %v2309, %v2124
    %v2364 = vmul.f32 %v2295, %v2310
    %v2365 = vmul.f32 %v2297, %v2311
    %v2366 = vadd.f32 %v2362, %v2364
    %v2367 = vadd.f32 %v2363, %v2365
    %v2368 = vmul.f32 %v2345, %v2129
    %v2369 = vmul.f32 %v2347, %v2130
    %v2370 = vmul.f32 %v2333, %v2348
    %v2371 = vmul.f32 %v2335, %v2349
    %v2372 = vadd.f32 %v2368, %v2370
    %v2373 = vadd.f32 %v2369, %v2371
    %v2374 = vtanh.pop %v2366
    %v2375 = vtanh.pop %v2367
    %v2376 = vmul.f32 %v2321, %v2374
    %v2377 = vmul.f32 %v2323, %v2375
    %v2378 = vtanh.pop %v2372
    %v2379 = vtanh.pop %v2373
    %v2380 = vmul.f32 %v2359, %v2378
    %v2381 = vmul.f32 %v2361, %v2379
    %v2382 = vld [vmem:[%s911] sm:$0xff]
    %v2383 = vld [vmem:[%s911 + $0x8] sm:$0xff]
    %v2384 = vld [vmem:[%s911 + $0x10] sm:$0xff]
    %v2385 = vld [vmem:[%s911 + $0x18] sm:$0xff]
    %v2386 = vld [vmem:[%s911 + $0x20] sm:$0xff]
    %v2387 = vld [vmem:[%s911 + $0x28] sm:$0xff]
    %v2388 = vld [vmem:[%s911 + $0x30] sm:$0xff]
    %v2389 = vld [vmem:[%s911 + $0x38] sm:$0xff]
    %v2390 = vld [vmem:[%s911 + $0x40] sm:$0xff]
    %v2391 = vld [vmem:[%s911 + $0x48] sm:$0xff]
    %v2392 = vld [vmem:[%s911 + $0x50] sm:$0xff]
    %v2393 = vld [vmem:[%s911 + $0x58] sm:$0xff]
    %v2394 = vld [vmem:[%s911 + $0x60] sm:$0xff]
    %v2395 = vld [vmem:[%s911 + $0x68] sm:$0xff]
    %v2396 = vld [vmem:[%s911 + $0x70] sm:$0xff]
    %v2397 = vld [vmem:[%s911 + $0x78] sm:$0xff]
    %v2398 = vpack.c.bf16 %v2377, %v2376
    %v2399 = vpack.c.bf16 %v2381, %v2380
    %2400 = vmatprep.subr.bf16.mxu0 0
    %2401 = vmatpush1.bf16.msra.mxu0 0
    %2402 = vmatprep.subr.bf16.mxu0 0
    %2403 = vmatpush1.bf16.msra.mxu0 0
    %2404 = vmatprep.subr.bf16.mxu0 0
    %2405 = vmatpush1.bf16.msra.mxu0 0
    %2406 = vmatprep.subr.bf16.mxu0 0
    %2407 = vmatpush1.bf16.msra.mxu0 0
    %2408 = vmatprep.subr.bf16.mxu0 0
    %2409 = vmatpush1.bf16.msra.mxu0 0
    %2410 = vmatprep.subr.bf16.mxu0 0
    %2411 = vmatpush1.bf16.msra.mxu0 0
    %2412 = vmatprep.subr.bf16.mxu0 0
    %2413 = vmatpush1.bf16.msra.mxu0 %v2399
    %2414 = vmatprep.subr.bf16.mxu0 0
    %2415 = vmatpush1.bf16.msra.mxu0 %v2398
    %2416 = vmatprep.subr.bf16.mxu0 0
    %2417 = vmatpush2.bf16.msra.mxu0 0
    %2418 = vmatprep.subr.bf16.mxu0 0
    %2419 = vmatpush2.bf16.msra.mxu0 0
    %2420 = vmatprep.subr.bf16.mxu0 0
    %2421 = vmatpush2.bf16.msra.mxu0 0
    %2422 = vmatprep.subr.bf16.mxu0 0
    %2423 = vmatpush2.bf16.msra.mxu0 0
    %2424 = vmatprep.subr.bf16.mxu0 0
    %2425 = vmatpush2.bf16.msra.mxu0 0
    %2426 = vmatprep.subr.bf16.mxu0 0
    %2427 = vmatpush2.bf16.msra.mxu0 0
    %2428 = vmatprep.subr.bf16.mxu0 0
    %2429 = vmatpush2.bf16.msra.mxu0 0
    %2430 = vmatprep.subr.bf16.mxu0 0
    %2431 = vmatpush2.bf16.msra.mxu0 0
    %2432 = vmatprep.mubr.bf16.mxu0 0
    %2433 = vmatmul.mubr.bf16.gmra.mxu0 %v1568
    %v2434 = vpop.f32.mrf.mxu0
    %v2435 = vadd.f32 0.0, %v2434
    %v2436 = vpop.f32.mrf.mxu0
    %v2437 = vpop.f32.mrf.mxu0
    %v2438 = vadd.f32 0.0, %v2437
    %v2439 = vpop.f32.mrf.mxu0
    %2440 = vmatprep.mubr.bf16.mxu0 0
    %2441 = vmatmul.mubr.bf16.gmra.mxu0 %v1571
    %v2442 = vpop.f32.mrf.mxu0
    %v2443 = vadd.f32 0.0, %v2442
    %v2444 = vpop.f32.mrf.mxu0
    %v2445 = vpop.f32.mrf.mxu0
    %v2446 = vadd.f32 0.0, %v2445
    %v2447 = vpop.f32.mrf.mxu0
    %2448 = vmatprep.mubr.bf16.mxu0 0
    %2449 = vmatmul.mubr.bf16.gmra.mxu0 %v1574
    %v2450 = vpop.f32.mrf.mxu0
    %v2451 = vadd.f32 0.0, %v2450
    %v2452 = vpop.f32.mrf.mxu0
    %v2453 = vpop.f32.mrf.mxu0
    %v2454 = vadd.f32 0.0, %v2453
    %v2455 = vpop.f32.mrf.mxu0
    %2456 = vmatprep.mubr.bf16.mxu0 0
    %2457 = vmatmul.mubr.bf16.gmra.mxu0 %v1577
    %v2458 = vpop.f32.mrf.mxu0
    %v2459 = vadd.f32 0.0, %v2458
    %v2460 = vpop.f32.mrf.mxu0
    %v2461 = vpop.f32.mrf.mxu0
    %v2462 = vadd.f32 0.0, %v2461
    %v2463 = vpop.f32.mrf.mxu0
    %2464 = vmatprep.mubr.bf16.mxu0 0
    %2465 = vmatmul.mubr.bf16.gmra.mxu0 %v1580
    %v2466 = vpop.f32.mrf.mxu0
    %v2467 = vadd.f32 0.0, %v2466
    %v2468 = vpop.f32.mrf.mxu0
    %v2469 = vpop.f32.mrf.mxu0
    %v2470 = vadd.f32 0.0, %v2469
    %v2471 = vpop.f32.mrf.mxu0
    %2472 = vmatprep.mubr.bf16.mxu0 0
    %2473 = vmatmul.mubr.bf16.gmra.mxu0 %v1583
    %v2474 = vpop.f32.mrf.mxu0
    %v2475 = vadd.f32 0.0, %v2474
    %v2476 = vpop.f32.mrf.mxu0
    %v2477 = vpop.f32.mrf.mxu0
    %v2478 = vadd.f32 0.0, %v2477
    %v2479 = vpop.f32.mrf.mxu0
    %2480 = vmatprep.mubr.bf16.mxu0 0
    %2481 = vmatmul.mubr.bf16.gmra.mxu0 %v1586
    %v2482 = vpop.f32.mrf.mxu0
    %v2483 = vadd.f32 0.0, %v2482
    %v2484 = vpop.f32.mrf.mxu0
    %v2485 = vpop.f32.mrf.mxu0
    %v2486 = vadd.f32 0.0, %v2485
    %v2487 = vpop.f32.mrf.mxu0
    %2488 = vmatprep.mubr.bf16.mxu0 0
    %2489 = vmatmul.mubr.bf16.gmra.mxu0 %v1589
    %v2490 = vpop.f32.mrf.mxu0
    %v2491 = vadd.f32 0.0, %v2490
    %v2492 = vpop.f32.mrf.mxu0
    %v2493 = vpop.f32.mrf.mxu0
    %v2494 = vadd.f32 0.0, %v2493
    %v2495 = vpop.f32.mrf.mxu0
    %2496 = vdwg.mxu0
    %v2497 = vadd.f32 %v2382, %v2435
    %v2498 = vadd.f32 %v2383, %v2438
    %v2499 = vadd.f32 %v2384, %v2443
    %v2500 = vadd.f32 %v2385, %v2446
    %v2501 = vadd.f32 %v2386, %v2451
    %v2502 = vadd.f32 %v2387, %v2454
    %v2503 = vadd.f32 %v2388, %v2459
    %v2504 = vadd.f32 %v2389, %v2462
    %v2505 = vadd.f32 %v2390, %v2467
    %v2506 = vadd.f32 %v2391, %v2470
    %v2507 = vadd.f32 %v2392, %v2475
    %v2508 = vadd.f32 %v2393, %v2478
    %v2509 = vadd.f32 %v2394, %v2483
    %v2510 = vadd.f32 %v2395, %v2486
    %v2511 = vadd.f32 %v2396, %v2491
    %v2512 = vadd.f32 %v2397, %v2494
    %v2513 = vadd.f32 %v2497, %v1707
    %v2514 = vadd.f32 %v2498, %v1712
    %v2515 = vadd.f32 %v2499, %v1717
    %v2516 = vadd.f32 %v2500, %v1722
    %v2517 = vadd.f32 %v2501, %v1727
    %v2518 = vadd.f32 %v2502, %v1732
    %v2519 = vadd.f32 %v2503, %v1737
    %v2520 = vadd.f32 %v2504, %v1742
    %v2521 = vadd.f32 %v2505, %v1747
    %v2522 = vadd.f32 %v2506, %v1752
    %v2523 = vadd.f32 %v2507, %v1757
    %v2524 = vadd.f32 %v2508, %v1762
    %v2525 = vadd.f32 %v2509, %v1767
    %v2526 = vadd.f32 %v2510, %v1772
    %v2527 = vadd.f32 %v2511, %v1777
    %v2528 = vadd.f32 %v2512, %v1782
    %v2529 = vxor.u32 %v2513, 2147483648
    %v2530 = vxor.u32 %v2514, 2147483648
    %v2531 = vmul.f32 %v2529, 1.442695
    %v2532 = vpow.pop %v2531
    %v2533 = vmul.f32 %v2530, 1.442695
    %v2534 = vpow.pop %v2533
    %v2535 = vadd.f32 %v2532, 1.0
    %v2536 = vadd.f32 %v2534, 1.0
    %v2537 = vrcp.pop %v2535
    %v2538 = vmul.f32 1.0, %v2537
    %v2539 = vrcp.pop %v2536
    %v2540 = vmul.f32 1.0, %v2539
    %v2541 = vxor.u32 %v2515, 2147483648
    %v2542 = vxor.u32 %v2516, 2147483648
    %v2543 = vmul.f32 %v2541, 1.442695
    %v2544 = vpow.pop %v2543
    %v2545 = vmul.f32 %v2542, 1.442695
    %v2546 = vpow.pop %v2545
    %v2547 = vadd.f32 %v2544, 1.0
    %v2548 = vadd.f32 %v2546, 1.0
    %v2549 = vrcp.pop %v2547
    %v2550 = vmul.f32 1.0, %v2549
    %v2551 = vrcp.pop %v2548
    %v2552 = vmul.f32 1.0, %v2551
    %v2553 = vtanh.pop %v2517
    %v2554 = vtanh.pop %v2518
    %v2555 = vxor.u32 %v2519, 2147483648
    %v2556 = vxor.u32 %v2520, 2147483648
    %v2557 = vmul.f32 %v2555, 1.442695
    %v2558 = vpow.pop %v2557
    %v2559 = vmul.f32 %v2556, 1.442695
    %v2560 = vpow.pop %v2559
    %v2561 = vadd.f32 %v2558, 1.0
    %v2562 = vadd.f32 %v2560, 1.0
    %v2563 = vrcp.pop %v2561
    %v2564 = vmul.f32 1.0, %v2563
    %v2565 = vrcp.pop %v2562
    %v2566 = vmul.f32 1.0, %v2565
    %v2567 = vxor.u32 %v2521, 2147483648
    %v2568 = vxor.u32 %v2522, 2147483648
    %v2569 = vmul.f32 %v2567, 1.442695
    %v2570 = vpow.pop %v2569
    %v2571 = vmul.f32 %v2568, 1.442695
    %v2572 = vpow.pop %v2571
    %v2573 = vadd.f32 %v2570, 1.0
    %v2574 = vadd.f32 %v2572, 1.0
    %v2575 = vrcp.pop %v2573
    %v2576 = vmul.f32 1.0, %v2575
    %v2577 = vrcp.pop %v2574
    %v2578 = vmul.f32 1.0, %v2577
    %v2579 = vxor.u32 %v2523, 2147483648
    %v2580 = vxor.u32 %v2524, 2147483648
    %v2581 = vmul.f32 %v2579, 1.442695
    %v2582 = vpow.pop %v2581
    %v2583 = vmul.f32 %v2580, 1.442695
    %v2584 = vpow.pop %v2583
    %v2585 = vadd.f32 %v2582, 1.0
    %v2586 = vadd.f32 %v2584, 1.0
    %v2587 = vrcp.pop %v2585
    %v2588 = vmul.f32 1.0, %v2587
    %v2589 = vrcp.pop %v2586
    %v2590 = vmul.f32 1.0, %v2589
    %v2591 = vtanh.pop %v2525
    %v2592 = vtanh.pop %v2526
    %v2593 = vxor.u32 %v2527, 2147483648
    %v2594 = vxor.u32 %v2528, 2147483648
    %v2595 = vmul.f32 %v2593, 1.442695
    %v2596 = vpow.pop %v2595
    %v2597 = vmul.f32 %v2594, 1.442695
    %v2598 = vpow.pop %v2597
    %v2599 = vadd.f32 %v2596, 1.0
    %v2600 = vadd.f32 %v2598, 1.0
    %v2601 = vrcp.pop %v2599
    %v2602 = vmul.f32 1.0, %v2601
    %v2603 = vrcp.pop %v2600
    %v2604 = vmul.f32 1.0, %v2603
    %v2605 = vmul.f32 %v2550, %v2366
    %v2606 = vmul.f32 %v2552, %v2367
    %v2607 = vmul.f32 %v2538, %v2553
    %v2608 = vmul.f32 %v2540, %v2554
    %v2609 = vadd.f32 %v2605, %v2607
    %v2610 = vadd.f32 %v2606, %v2608
    %v2611 = vmul.f32 %v2588, %v2372
    %v2612 = vmul.f32 %v2590, %v2373
    %v2613 = vmul.f32 %v2576, %v2591
    %v2614 = vmul.f32 %v2578, %v2592
    %v2615 = vadd.f32 %v2611, %v2613
    %v2616 = vadd.f32 %v2612, %v2614
    %v2617 = vtanh.pop %v2609
    %v2618 = vtanh.pop %v2610
    %v2619 = vmul.f32 %v2564, %v2617
    %v2620 = vmul.f32 %v2566, %v2618
    %v2621 = vtanh.pop %v2615
    %v2622 = vtanh.pop %v2616
    %v2623 = vmul.f32 %v2602, %v2621
    %v2624 = vmul.f32 %v2604, %v2622
    %v2625 = vld [vmem:[%s724] sm:$0xff]
    %v2626 = vld [vmem:[%s724 + $0x8] sm:$0xff]
    %v2627 = vld [vmem:[%s724 + $0x10] sm:$0xff]
    %v2628 = vld [vmem:[%s724 + $0x18] sm:$0xff]
    %v2629 = vld [vmem:[%s724 + $0x20] sm:$0xff]
    %v2630 = vld [vmem:[%s724 + $0x28] sm:$0xff]
    %v2631 = vld [vmem:[%s724 + $0x30] sm:$0xff]
    %v2632 = vld [vmem:[%s724 + $0x38] sm:$0xff]
    %v2633 = vld [vmem:[%s724 + $0x40] sm:$0xff]
    %v2634 = vld [vmem:[%s724 + $0x48] sm:$0xff]
    %v2635 = vld [vmem:[%s724 + $0x50] sm:$0xff]
    %v2636 = vld [vmem:[%s724 + $0x58] sm:$0xff]
    %v2637 = vld [vmem:[%s724 + $0x60] sm:$0xff]
    %v2638 = vld [vmem:[%s724 + $0x68] sm:$0xff]
    %v2639 = vld [vmem:[%s724 + $0x70] sm:$0xff]
    %v2640 = vld [vmem:[%s724 + $0x78] sm:$0xff]
    %v2641 = vpack.c.bf16 %v2620, %v2619
    %v2642 = vpack.c.bf16 %v2624, %v2623
    %2643 = vmatprep.subr.bf16.mxu0 0
    %2644 = vmatpush1.bf16.msra.mxu0 0
    %2645 = vmatprep.subr.bf16.mxu0 0
    %2646 = vmatpush1.bf16.msra.mxu0 0
    %2647 = vmatprep.subr.bf16.mxu0 0
    %2648 = vmatpush1.bf16.msra.mxu0 0
    %2649 = vmatprep.subr.bf16.mxu0 0
    %2650 = vmatpush1.bf16.msra.mxu0 0
    %2651 = vmatprep.subr.bf16.mxu0 0
    %2652 = vmatpush1.bf16.msra.mxu0 0
    %2653 = vmatprep.subr.bf16.mxu0 0
    %2654 = vmatpush1.bf16.msra.mxu0 0
    %2655 = vmatprep.subr.bf16.mxu0 0
    %2656 = vmatpush1.bf16.msra.mxu0 %v2642
    %2657 = vmatprep.subr.bf16.mxu0 0
    %2658 = vmatpush1.bf16.msra.mxu0 %v2641
    %2659 = vmatprep.subr.bf16.mxu0 0
    %2660 = vmatpush2.bf16.msra.mxu0 0
    %2661 = vmatprep.subr.bf16.mxu0 0
    %2662 = vmatpush2.bf16.msra.mxu0 0
    %2663 = vmatprep.subr.bf16.mxu0 0
    %2664 = vmatpush2.bf16.msra.mxu0 0
    %2665 = vmatprep.subr.bf16.mxu0 0
    %2666 = vmatpush2.bf16.msra.mxu0 0
    %2667 = vmatprep.subr.bf16.mxu0 0
    %2668 = vmatpush2.bf16.msra.mxu0 0
    %2669 = vmatprep.subr.bf16.mxu0 0
    %2670 = vmatpush2.bf16.msra.mxu0 0
    %2671 = vmatprep.subr.bf16.mxu0 0
    %2672 = vmatpush2.bf16.msra.mxu0 0
    %2673 = vmatprep.subr.bf16.mxu0 0
    %2674 = vmatpush2.bf16.msra.mxu0 0
    %2675 = vmatprep.mubr.bf16.mxu0 0
    %2676 = vmatmul.mubr.bf16.gmra.mxu0 %v1568
    %v2677 = vpop.f32.mrf.mxu0
    %v2678 = vadd.f32 0.0, %v2677
    %v2679 = vpop.f32.mrf.mxu0
    %v2680 = vpop.f32.mrf.mxu0
    %v2681 = vadd.f32 0.0, %v2680
    %v2682 = vpop.f32.mrf.mxu0
    %2683 = vmatprep.mubr.bf16.mxu0 0
    %2684 = vmatmul.mubr.bf16.gmra.mxu0 %v1571
    %v2685 = vpop.f32.mrf.mxu0
    %v2686 = vadd.f32 0.0, %v2685
    %v2687 = vpop.f32.mrf.mxu0
    %v2688 = vpop.f32.mrf.mxu0
    %v2689 = vadd.f32 0.0, %v2688
    %v2690 = vpop.f32.mrf.mxu0
    %2691 = vmatprep.mubr.bf16.mxu0 0
    %2692 = vmatmul.mubr.bf16.gmra.mxu0 %v1574
    %v2693 = vpop.f32.mrf.mxu0
    %v2694 = vadd.f32 0.0, %v2693
    %v2695 = vpop.f32.mrf.mxu0
    %v2696 = vpop.f32.mrf.mxu0
    %v2697 = vadd.f32 0.0, %v2696
    %v2698 = vpop.f32.mrf.mxu0
    %2699 = vmatprep.mubr.bf16.mxu0 0
    %2700 = vmatmul.mubr.bf16.gmra.mxu0 %v1577
    %v2701 = vpop.f32.mrf.mxu0
    %v2702 = vadd.f32 0.0, %v2701
    %v2703 = vpop.f32.mrf.mxu0
    %v2704 = vpop.f32.mrf.mxu0
    %v2705 = vadd.f32 0.0, %v2704
    %v2706 = vpop.f32.mrf.mxu0
    %2707 = vmatprep.mubr.bf16.mxu0 0
    %2708 = vmatmul.mubr.bf16.gmra.mxu0 %v1580
    %v2709 = vpop.f32.mrf.mxu0
    %v2710 = vadd.f32 0.0, %v2709
    %v2711 = vpop.f32.mrf.mxu0
    %v2712 = vpop.f32.mrf.mxu0
    %v2713 = vadd.f32 0.0, %v2712
    %v2714 = vpop.f32.mrf.mxu0
    %2715 = vmatprep.mubr.bf16.mxu0 0
    %2716 = vmatmul.mubr.bf16.gmra.mxu0 %v1583
    %v2717 = vpop.f32.mrf.mxu0
    %v2718 = vadd.f32 0.0, %v2717
    %v2719 = vpop.f32.mrf.mxu0
    %v2720 = vpop.f32.mrf.mxu0
    %v2721 = vadd.f32 0.0, %v2720
    %v2722 = vpop.f32.mrf.mxu0
    %2723 = vmatprep.mubr.bf16.mxu0 0
    %2724 = vmatmul.mubr.bf16.gmra.mxu0 %v1586
    %v2725 = vpop.f32.mrf.mxu0
    %v2726 = vadd.f32 0.0, %v2725
    %v2727 = vpop.f32.mrf.mxu0
    %v2728 = vpop.f32.mrf.mxu0
    %v2729 = vadd.f32 0.0, %v2728
    %v2730 = vpop.f32.mrf.mxu0
    %2731 = vmatprep.mubr.bf16.mxu0 0
    %2732 = vmatmul.mubr.bf16.gmra.mxu0 %v1589
    %v2733 = vpop.f32.mrf.mxu0
    %v2734 = vadd.f32 0.0, %v2733
    %v2735 = vpop.f32.mrf.mxu0
    %v2736 = vpop.f32.mrf.mxu0
    %v2737 = vadd.f32 0.0, %v2736
    %v2738 = vpop.f32.mrf.mxu0
    %2739 = vdwg.mxu0
    %v2740 = vadd.f32 %v2625, %v2678
    %v2741 = vadd.f32 %v2626, %v2681
    %v2742 = vadd.f32 %v2627, %v2686
    %v2743 = vadd.f32 %v2628, %v2689
    %v2744 = vadd.f32 %v2629, %v2694
    %v2745 = vadd.f32 %v2630, %v2697
    %v2746 = vadd.f32 %v2631, %v2702
    %v2747 = vadd.f32 %v2632, %v2705
    %v2748 = vadd.f32 %v2633, %v2710
    %v2749 = vadd.f32 %v2634, %v2713
    %v2750 = vadd.f32 %v2635, %v2718
    %v2751 = vadd.f32 %v2636, %v2721
    %v2752 = vadd.f32 %v2637, %v2726
    %v2753 = vadd.f32 %v2638, %v2729
    %v2754 = vadd.f32 %v2639, %v2734
    %v2755 = vadd.f32 %v2640, %v2737
    %v2756 = vadd.f32 %v2740, %v1707
    %v2757 = vadd.f32 %v2741, %v1712
    %v2758 = vadd.f32 %v2742, %v1717
    %v2759 = vadd.f32 %v2743, %v1722
    %v2760 = vadd.f32 %v2744, %v1727
    %v2761 = vadd.f32 %v2745, %v1732
    %v2762 = vadd.f32 %v2746, %v1737
    %v2763 = vadd.f32 %v2747, %v1742
    %v2764 = vadd.f32 %v2748, %v1747
    %v2765 = vadd.f32 %v2749, %v1752
    %v2766 = vadd.f32 %v2750, %v1757
    %v2767 = vadd.f32 %v2751, %v1762
    %v2768 = vadd.f32 %v2752, %v1767
    %v2769 = vadd.f32 %v2753, %v1772
    %v2770 = vadd.f32 %v2754, %v1777
    %v2771 = vadd.f32 %v2755, %v1782
    %v2772 = vxor.u32 %v2756, 2147483648
    %v2773 = vxor.u32 %v2757, 2147483648
    %v2774 = vmul.f32 %v2772, 1.442695
    %v2775 = vpow.pop %v2774
    %v2776 = vmul.f32 %v2773, 1.442695
    %v2777 = vpow.pop %v2776
    %v2778 = vadd.f32 %v2775, 1.0
    %v2779 = vadd.f32 %v2777, 1.0
    %v2780 = vrcp.pop %v2778
    %v2781 = vmul.f32 1.0, %v2780
    %v2782 = vrcp.pop %v2779
    %v2783 = vmul.f32 1.0, %v2782
    %v2784 = vxor.u32 %v2758, 2147483648
    %v2785 = vxor.u32 %v2759, 2147483648
    %v2786 = vmul.f32 %v2784, 1.442695
    %v2787 = vpow.pop %v2786
    %v2788 = vmul.f32 %v2785, 1.442695
    %v2789 = vpow.pop %v2788
    %v2790 = vadd.f32 %v2787, 1.0
    %v2791 = vadd.f32 %v2789, 1.0
    %v2792 = vrcp.pop %v2790
    %v2793 = vmul.f32 1.0, %v2792
    %v2794 = vrcp.pop %v2791
    %v2795 = vmul.f32 1.0, %v2794
    %v2796 = vtanh.pop %v2760
    %v2797 = vtanh.pop %v2761
    %v2798 = vxor.u32 %v2762, 2147483648
    %v2799 = vxor.u32 %v2763, 2147483648
    %v2800 = vmul.f32 %v2798, 1.442695
    %v2801 = vpow.pop %v2800
    %v2802 = vmul.f32 %v2799, 1.442695
    %v2803 = vpow.pop %v2802
    %v2804 = vadd.f32 %v2801, 1.0
    %v2805 = vadd.f32 %v2803, 1.0
    %v2806 = vrcp.pop %v2804
    %v2807 = vmul.f32 1.0, %v2806
    %v2808 = vrcp.pop %v2805
    %v2809 = vmul.f32 1.0, %v2808
    %v2810 = vxor.u32 %v2764, 2147483648
    %v2811 = vxor.u32 %v2765, 2147483648
    %v2812 = vmul.f32 %v2810, 1.442695
    %v2813 = vpow.pop %v2812
    %v2814 = vmul.f32 %v2811, 1.442695
    %v2815 = vpow.pop %v2814
    %v2816 = vadd.f32 %v2813, 1.0
    %v2817 = vadd.f32 %v2815, 1.0
    %v2818 = vrcp.pop %v2816
    %v2819 = vmul.f32 1.0, %v2818
    %v2820 = vrcp.pop %v2817
    %v2821 = vmul.f32 1.0, %v2820
    %v2822 = vxor.u32 %v2766, 2147483648
    %v2823 = vxor.u32 %v2767, 2147483648
    %v2824 = vmul.f32 %v2822, 1.442695
    %v2825 = vpow.pop %v2824
    %v2826 = vmul.f32 %v2823, 1.442695
    %v2827 = vpow.pop %v2826
    %v2828 = vadd.f32 %v2825, 1.0
    %v2829 = vadd.f32 %v2827, 1.0
    %v2830 = vrcp.pop %v2828
    %v2831 = vmul.f32 1.0, %v2830
    %v2832 = vrcp.pop %v2829
    %v2833 = vmul.f32 1.0, %v2832
    %v2834 = vtanh.pop %v2768
    %v2835 = vtanh.pop %v2769
    %v2836 = vxor.u32 %v2770, 2147483648
    %v2837 = vxor.u32 %v2771, 2147483648
    %v2838 = vmul.f32 %v2836, 1.442695
    %v2839 = vpow.pop %v2838
    %v2840 = vmul.f32 %v2837, 1.442695
    %v2841 = vpow.pop %v2840
    %v2842 = vadd.f32 %v2839, 1.0
    %v2843 = vadd.f32 %v2841, 1.0
    %v2844 = vrcp.pop %v2842
    %v2845 = vmul.f32 1.0, %v2844
    %v2846 = vrcp.pop %v2843
    %v2847 = vmul.f32 1.0, %v2846
    %v2848 = vmul.f32 %v2793, %v2609
    %v2849 = vmul.f32 %v2795, %v2610
    %v2850 = vmul.f32 %v2781, %v2796
    %v2851 = vmul.f32 %v2783, %v2797
    %v2852 = vadd.f32 %v2848, %v2850
    %v2853 = vadd.f32 %v2849, %v2851
    %v2854 = vmul.f32 %v2831, %v2615
    %v2855 = vmul.f32 %v2833, %v2616
    %v2856 = vmul.f32 %v2819, %v2834
    %v2857 = vmul.f32 %v2821, %v2835
    %v2858 = vadd.f32 %v2854, %v2856
    %v2859 = vadd.f32 %v2855, %v2857
    %v2860 = vtanh.pop %v2852
    %v2861 = vtanh.pop %v2853
    %v2862 = vmul.f32 %v2807, %v2860
    %v2863 = vmul.f32 %v2809, %v2861
    %v2864 = vtanh.pop %v2858
    %v2865 = vtanh.pop %v2859
    %v2866 = vmul.f32 %v2845, %v2864
    %v2867 = vmul.f32 %v2847, %v2865
    %v2868 = vld [vmem:[%s528] sm:$0xff]
    %v2869 = vld [vmem:[%s528 + $0x8] sm:$0xff]
    %v2870 = vld [vmem:[%s528 + $0x10] sm:$0xff]
    %v2871 = vld [vmem:[%s528 + $0x18] sm:$0xff]
    %v2872 = vld [vmem:[%s528 + $0x20] sm:$0xff]
    %v2873 = vld [vmem:[%s528 + $0x28] sm:$0xff]
    %v2874 = vld [vmem:[%s528 + $0x30] sm:$0xff]
    %v2875 = vld [vmem:[%s528 + $0x38] sm:$0xff]
    %v2876 = vld [vmem:[%s528 + $0x40] sm:$0xff]
    %v2877 = vld [vmem:[%s528 + $0x48] sm:$0xff]
    %v2878 = vld [vmem:[%s528 + $0x50] sm:$0xff]
    %v2879 = vld [vmem:[%s528 + $0x58] sm:$0xff]
    %v2880 = vld [vmem:[%s528 + $0x60] sm:$0xff]
    %v2881 = vld [vmem:[%s528 + $0x68] sm:$0xff]
    %v2882 = vld [vmem:[%s528 + $0x70] sm:$0xff]
    %v2883 = vld [vmem:[%s528 + $0x78] sm:$0xff]
    %v2884 = vpack.c.bf16 %v2863, %v2862
    %v2885 = vpack.c.bf16 %v2867, %v2866
    %2886 = vmatprep.subr.bf16.mxu0 0
    %2887 = vmatpush1.bf16.msra.mxu0 0
    %2888 = vmatprep.subr.bf16.mxu0 0
    %2889 = vmatpush1.bf16.msra.mxu0 0
    %2890 = vmatprep.subr.bf16.mxu0 0
    %2891 = vmatpush1.bf16.msra.mxu0 0
    %2892 = vmatprep.subr.bf16.mxu0 0
    %2893 = vmatpush1.bf16.msra.mxu0 0
    %2894 = vmatprep.subr.bf16.mxu0 0
    %2895 = vmatpush1.bf16.msra.mxu0 0
    %2896 = vmatprep.subr.bf16.mxu0 0
    %2897 = vmatpush1.bf16.msra.mxu0 0
    %2898 = vmatprep.subr.bf16.mxu0 0
    %2899 = vmatpush1.bf16.msra.mxu0 %v2885
    %2900 = vmatprep.subr.bf16.mxu0 0
    %2901 = vmatpush1.bf16.msra.mxu0 %v2884
    %2902 = vmatprep.subr.bf16.mxu0 0
    %2903 = vmatpush2.bf16.msra.mxu0 0
    %2904 = vmatprep.subr.bf16.mxu0 0
    %2905 = vmatpush2.bf16.msra.mxu0 0
    %2906 = vmatprep.subr.bf16.mxu0 0
    %2907 = vmatpush2.bf16.msra.mxu0 0
    %2908 = vmatprep.subr.bf16.mxu0 0
    %2909 = vmatpush2.bf16.msra.mxu0 0
    %2910 = vmatprep.subr.bf16.mxu0 0
    %2911 = vmatpush2.bf16.msra.mxu0 0
    %2912 = vmatprep.subr.bf16.mxu0 0
    %2913 = vmatpush2.bf16.msra.mxu0 0
    %2914 = vmatprep.subr.bf16.mxu0 0
    %2915 = vmatpush2.bf16.msra.mxu0 0
    %2916 = vmatprep.subr.bf16.mxu0 0
    %2917 = vmatpush2.bf16.msra.mxu0 0
    %2918 = vmatprep.mubr.bf16.mxu0 0
    %2919 = vmatmul.mubr.bf16.gmra.mxu0 %v1568
    %v2920 = vpop.f32.mrf.mxu0
    %v2921 = vadd.f32 0.0, %v2920
    %v2922 = vpop.f32.mrf.mxu0
    %v2923 = vpop.f32.mrf.mxu0
    %v2924 = vadd.f32 0.0, %v2923
    %v2925 = vpop.f32.mrf.mxu0
    %2926 = vmatprep.mubr.bf16.mxu0 0
    %2927 = vmatmul.mubr.bf16.gmra.mxu0 %v1571
    %v2928 = vpop.f32.mrf.mxu0
    %v2929 = vadd.f32 0.0, %v2928
    %v2930 = vpop.f32.mrf.mxu0
    %v2931 = vpop.f32.mrf.mxu0
    %v2932 = vadd.f32 0.0, %v2931
    %v2933 = vpop.f32.mrf.mxu0
    %2934 = vmatprep.mubr.bf16.mxu0 0
    %2935 = vmatmul.mubr.bf16.gmra.mxu0 %v1574
    %v2936 = vpop.f32.mrf.mxu0
    %v2937 = vadd.f32 0.0, %v2936
    %v2938 = vpop.f32.mrf.mxu0
    %v2939 = vpop.f32.mrf.mxu0
    %v2940 = vadd.f32 0.0, %v2939
    %v2941 = vpop.f32.mrf.mxu0
    %2942 = vmatprep.mubr.bf16.mxu0 0
    %2943 = vmatmul.mubr.bf16.gmra.mxu0 %v1577
    %v2944 = vpop.f32.mrf.mxu0
    %v2945 = vadd.f32 0.0, %v2944
    %v2946 = vpop.f32.mrf.mxu0
    %v2947 = vpop.f32.mrf.mxu0
    %v2948 = vadd.f32 0.0, %v2947
    %v2949 = vpop.f32.mrf.mxu0
    %2950 = vmatprep.mubr.bf16.mxu0 0
    %2951 = vmatmul.mubr.bf16.gmra.mxu0 %v1580
    %v2952 = vpop.f32.mrf.mxu0
    %v2953 = vadd.f32 0.0, %v2952
    %v2954 = vpop.f32.mrf.mxu0
    %v2955 = vpop.f32.mrf.mxu0
    %v2956 = vadd.f32 0.0, %v2955
    %v2957 = vpop.f32.mrf.mxu0
    %2958 = vmatprep.mubr.bf16.mxu0 0
    %2959 = vmatmul.mubr.bf16.gmra.mxu0 %v1583
    %v2960 = vpop.f32.mrf.mxu0
    %v2961 = vadd.f32 0.0, %v2960
    %v2962 = vpop.f32.mrf.mxu0
    %v2963 = vpop.f32.mrf.mxu0
    %v2964 = vadd.f32 0.0, %v2963
    %v2965 = vpop.f32.mrf.mxu0
    %2966 = vmatprep.mubr.bf16.mxu0 0
    %2967 = vmatmul.mubr.bf16.gmra.mxu0 %v1586
    %v2968 = vpop.f32.mrf.mxu0
    %v2969 = vadd.f32 0.0, %v2968
    %v2970 = vpop.f32.mrf.mxu0
    %v2971 = vpop.f32.mrf.mxu0
    %v2972 = vadd.f32 0.0, %v2971
    %v2973 = vpop.f32.mrf.mxu0
    %2974 = vmatprep.mubr.bf16.mxu0 0
    %2975 = vmatmul.mubr.bf16.gmra.mxu0 %v1589
    %v2976 = vpop.f32.mrf.mxu0
    %v2977 = vadd.f32 0.0, %v2976
    %v2978 = vpop.f32.mrf.mxu0
    %v2979 = vpop.f32.mrf.mxu0
    %v2980 = vadd.f32 0.0, %v2979
    %v2981 = vpop.f32.mrf.mxu0
    %2982 = vdwg.mxu0
    %v2983 = vadd.f32 %v2868, %v2921
    %v2984 = vadd.f32 %v2869, %v2924
    %v2985 = vadd.f32 %v2870, %v2929
    %v2986 = vadd.f32 %v2871, %v2932
    %v2987 = vadd.f32 %v2872, %v2937
    %v2988 = vadd.f32 %v2873, %v2940
    %v2989 = vadd.f32 %v2874, %v2945
    %v2990 = vadd.f32 %v2875, %v2948
    %v2991 = vadd.f32 %v2876, %v2953
    %v2992 = vadd.f32 %v2877, %v2956
    %v2993 = vadd.f32 %v2878, %v2961
    %v2994 = vadd.f32 %v2879, %v2964
    %v2995 = vadd.f32 %v2880, %v2969
    %v2996 = vadd.f32 %v2881, %v2972
    %v2997 = vadd.f32 %v2882, %v2977
    %v2998 = vadd.f32 %v2883, %v2980
    %v2999 = vadd.f32 %v2983, %v1707
    %v3000 = vadd.f32 %v2984, %v1712
    %v3001 = vadd.f32 %v2985, %v1717
    %v3002 = vadd.f32 %v2986, %v1722
    %v3003 = vadd.f32 %v2987, %v1727
    %v3004 = vadd.f32 %v2988, %v1732
    %v3005 = vadd.f32 %v2989, %v1737
    %v3006 = vadd.f32 %v2990, %v1742
    %v3007 = vadd.f32 %v2991, %v1747
    %v3008 = vadd.f32 %v2992, %v1752
    %v3009 = vadd.f32 %v2993, %v1757
    %v3010 = vadd.f32 %v2994, %v1762
    %v3011 = vadd.f32 %v2995, %v1767
    %v3012 = vadd.f32 %v2996, %v1772
    %v3013 = vadd.f32 %v2997, %v1777
    %v3014 = vadd.f32 %v2998, %v1782
    %v3015 = vxor.u32 %v2999, 2147483648
    %v3016 = vxor.u32 %v3000, 2147483648
    %v3017 = vmul.f32 %v3015, 1.442695
    %v3018 = vpow.pop %v3017
    %v3019 = vmul.f32 %v3016, 1.442695
    %v3020 = vpow.pop %v3019
    %v3021 = vadd.f32 %v3018, 1.0
    %v3022 = vadd.f32 %v3020, 1.0
    %v3023 = vrcp.pop %v3021
    %v3024 = vmul.f32 1.0, %v3023
    %v3025 = vrcp.pop %v3022
    %v3026 = vmul.f32 1.0, %v3025
    %v3027 = vxor.u32 %v3001, 2147483648
    %v3028 = vxor.u32 %v3002, 2147483648
    %v3029 = vmul.f32 %v3027, 1.442695
    %v3030 = vpow.pop %v3029
    %v3031 = vmul.f32 %v3028, 1.442695
    %v3032 = vpow.pop %v3031
    %v3033 = vadd.f32 %v3030, 1.0
    %v3034 = vadd.f32 %v3032, 1.0
    %v3035 = vrcp.pop %v3033
    %v3036 = vmul.f32 1.0, %v3035
    %v3037 = vrcp.pop %v3034
    %v3038 = vmul.f32 1.0, %v3037
    %v3039 = vtanh.pop %v3003
    %v3040 = vtanh.pop %v3004
    %v3041 = vxor.u32 %v3005, 2147483648
    %v3042 = vxor.u32 %v3006, 2147483648
    %v3043 = vmul.f32 %v3041, 1.442695
    %v3044 = vpow.pop %v3043
    %v3045 = vmul.f32 %v3042, 1.442695
    %v3046 = vpow.pop %v3045
    %v3047 = vadd.f32 %v3044, 1.0
    %v3048 = vadd.f32 %v3046, 1.0
    %v3049 = vrcp.pop %v3047
    %v3050 = vmul.f32 1.0, %v3049
    %v3051 = vrcp.pop %v3048
    %v3052 = vmul.f32 1.0, %v3051
    %v3053 = vxor.u32 %v3007, 2147483648
    %v3054 = vxor.u32 %v3008, 2147483648
    %v3055 = vmul.f32 %v3053, 1.442695
    %v3056 = vpow.pop %v3055
    %v3057 = vmul.f32 %v3054, 1.442695
    %v3058 = vpow.pop %v3057
    %v3059 = vadd.f32 %v3056, 1.0
    %v3060 = vadd.f32 %v3058, 1.0
    %v3061 = vrcp.pop %v3059
    %v3062 = vmul.f32 1.0, %v3061
    %v3063 = vrcp.pop %v3060
    %v3064 = vmul.f32 1.0, %v3063
    %v3065 = vxor.u32 %v3009, 2147483648
    %v3066 = vxor.u32 %v3010, 2147483648
    %v3067 = vmul.f32 %v3065, 1.442695
    %v3068 = vpow.pop %v3067
    %v3069 = vmul.f32 %v3066, 1.442695
    %v3070 = vpow.pop %v3069
    %v3071 = vadd.f32 %v3068, 1.0
    %v3072 = vadd.f32 %v3070, 1.0
    %v3073 = vrcp.pop %v3071
    %v3074 = vmul.f32 1.0, %v3073
    %v3075 = vrcp.pop %v3072
    %v3076 = vmul.f32 1.0, %v3075
    %v3077 = vtanh.pop %v3011
    %v3078 = vtanh.pop %v3012
    %v3079 = vxor.u32 %v3013, 2147483648
    %v3080 = vxor.u32 %v3014, 2147483648
    %v3081 = vmul.f32 %v3079, 1.442695
    %v3082 = vpow.pop %v3081
    %v3083 = vmul.f32 %v3080, 1.442695
    %v3084 = vpow.pop %v3083
    %v3085 = vadd.f32 %v3082, 1.0
    %v3086 = vadd.f32 %v3084, 1.0
    %v3087 = vrcp.pop %v3085
    %v3088 = vmul.f32 1.0, %v3087
    %v3089 = vrcp.pop %v3086
    %v3090 = vmul.f32 1.0, %v3089
    %v3091 = vmul.f32 %v3036, %v2852
    %v3092 = vmul.f32 %v3038, %v2853
    %v3093 = vmul.f32 %v3024, %v3039
    %v3094 = vmul.f32 %v3026, %v3040
    %v3095 = vadd.f32 %v3091, %v3093
    %v3096 = vadd.f32 %v3092, %v3094
    %v3097 = vmul.f32 %v3074, %v2858
    %v3098 = vmul.f32 %v3076, %v2859
    %v3099 = vmul.f32 %v3062, %v3077
    %v3100 = vmul.f32 %v3064, %v3078
    %v3101 = vadd.f32 %v3097, %v3099
    %v3102 = vadd.f32 %v3098, %v3100
    %v3103 = vtanh.pop %v3095
    %v3104 = vtanh.pop %v3096
    %v3105 = vmul.f32 %v3050, %v3103
    %v3106 = vmul.f32 %v3052, %v3104
    %v3107 = vtanh.pop %v3101
    %v3108 = vtanh.pop %v3102
    %v3109 = vmul.f32 %v3088, %v3107
    %v3110 = vmul.f32 %v3090, %v3108
    %v3111 = vld [vmem:[%s332] sm:$0xff]
    %v3112 = vld [vmem:[%s332 + $0x8] sm:$0xff]
    %v3113 = vld [vmem:[%s332 + $0x10] sm:$0xff]
    %v3114 = vld [vmem:[%s332 + $0x18] sm:$0xff]
    %v3115 = vld [vmem:[%s332 + $0x20] sm:$0xff]
    %v3116 = vld [vmem:[%s332 + $0x28] sm:$0xff]
    %v3117 = vld [vmem:[%s332 + $0x30] sm:$0xff]
    %v3118 = vld [vmem:[%s332 + $0x38] sm:$0xff]
    %v3119 = vld [vmem:[%s332 + $0x40] sm:$0xff]
    %v3120 = vld [vmem:[%s332 + $0x48] sm:$0xff]
    %v3121 = vld [vmem:[%s332 + $0x50] sm:$0xff]
    %v3122 = vld [vmem:[%s332 + $0x58] sm:$0xff]
    %v3123 = vld [vmem:[%s332 + $0x60] sm:$0xff]
    %v3124 = vld [vmem:[%s332 + $0x68] sm:$0xff]
    %v3125 = vld [vmem:[%s332 + $0x70] sm:$0xff]
    %v3126 = vld [vmem:[%s332 + $0x78] sm:$0xff]
    %v3127 = vpack.c.bf16 %v3106, %v3105
    %v3128 = vpack.c.bf16 %v3110, %v3109
    %3129 = vmatprep.subr.bf16.mxu0 0
    %3130 = vmatpush1.bf16.msra.mxu0 0
    %3131 = vmatprep.subr.bf16.mxu0 0
    %3132 = vmatpush1.bf16.msra.mxu0 0
    %3133 = vmatprep.subr.bf16.mxu0 0
    %3134 = vmatpush1.bf16.msra.mxu0 0
    %3135 = vmatprep.subr.bf16.mxu0 0
    %3136 = vmatpush1.bf16.msra.mxu0 0
    %3137 = vmatprep.subr.bf16.mxu0 0
    %3138 = vmatpush1.bf16.msra.mxu0 0
    %3139 = vmatprep.subr.bf16.mxu0 0
    %3140 = vmatpush1.bf16.msra.mxu0 0
    %3141 = vmatprep.subr.bf16.mxu0 0
    %3142 = vmatpush1.bf16.msra.mxu0 %v3128
    %3143 = vmatprep.subr.bf16.mxu0 0
    %3144 = vmatpush1.bf16.msra.mxu0 %v3127
    %3145 = vmatprep.subr.bf16.mxu0 0
    %3146 = vmatpush2.bf16.msra.mxu0 0
    %3147 = vmatprep.subr.bf16.mxu0 0
    %3148 = vmatpush2.bf16.msra.mxu0 0
    %3149 = vmatprep.subr.bf16.mxu0 0
    %3150 = vmatpush2.bf16.msra.mxu0 0
    %3151 = vmatprep.subr.bf16.mxu0 0
    %3152 = vmatpush2.bf16.msra.mxu0 0
    %3153 = vmatprep.subr.bf16.mxu0 0
    %3154 = vmatpush2.bf16.msra.mxu0 0
    %3155 = vmatprep.subr.bf16.mxu0 0
    %3156 = vmatpush2.bf16.msra.mxu0 0
    %3157 = vmatprep.subr.bf16.mxu0 0
    %3158 = vmatpush2.bf16.msra.mxu0 0
    %3159 = vmatprep.subr.bf16.mxu0 0
    %3160 = vmatpush2.bf16.msra.mxu0 0
    %3161 = vmatprep.mubr.bf16.mxu0 0
    %3162 = vmatmul.mubr.bf16.gmra.mxu0 %v1568
    %v3163 = vpop.f32.mrf.mxu0
    %v3164 = vadd.f32 0.0, %v3163
    %v3165 = vpop.f32.mrf.mxu0
    %v3166 = vpop.f32.mrf.mxu0
    %v3167 = vadd.f32 0.0, %v3166
    %v3168 = vpop.f32.mrf.mxu0
    %3169 = vmatprep.mubr.bf16.mxu0 0
    %3170 = vmatmul.mubr.bf16.gmra.mxu0 %v1571
    %v3171 = vpop.f32.mrf.mxu0
    %v3172 = vadd.f32 0.0, %v3171
    %v3173 = vpop.f32.mrf.mxu0
    %v3174 = vpop.f32.mrf.mxu0
    %v3175 = vadd.f32 0.0, %v3174
    %v3176 = vpop.f32.mrf.mxu0
    %3177 = vmatprep.mubr.bf16.mxu0 0
    %3178 = vmatmul.mubr.bf16.gmra.mxu0 %v1574
    %v3179 = vpop.f32.mrf.mxu0
    %v3180 = vadd.f32 0.0, %v3179
    %v3181 = vpop.f32.mrf.mxu0
    %v3182 = vpop.f32.mrf.mxu0
    %v3183 = vadd.f32 0.0, %v3182
    %v3184 = vpop.f32.mrf.mxu0
    %3185 = vmatprep.mubr.bf16.mxu0 0
    %3186 = vmatmul.mubr.bf16.gmra.mxu0 %v1577
    %v3187 = vpop.f32.mrf.mxu0
    %v3188 = vadd.f32 0.0, %v3187
    %v3189 = vpop.f32.mrf.mxu0
    %v3190 = vpop.f32.mrf.mxu0
    %v3191 = vadd.f32 0.0, %v3190
    %v3192 = vpop.f32.mrf.mxu0
    %3193 = vmatprep.mubr.bf16.mxu0 0
    %3194 = vmatmul.mubr.bf16.gmra.mxu0 %v1580
    %v3195 = vpop.f32.mrf.mxu0
    %v3196 = vadd.f32 0.0, %v3195
    %v3197 = vpop.f32.mrf.mxu0
    %v3198 = vpop.f32.mrf.mxu0
    %v3199 = vadd.f32 0.0, %v3198
    %v3200 = vpop.f32.mrf.mxu0
    %3201 = vmatprep.mubr.bf16.mxu0 0
    %3202 = vmatmul.mubr.bf16.gmra.mxu0 %v1583
    %v3203 = vpop.f32.mrf.mxu0
    %v3204 = vadd.f32 0.0, %v3203
    %v3205 = vpop.f32.mrf.mxu0
    %v3206 = vpop.f32.mrf.mxu0
    %v3207 = vadd.f32 0.0, %v3206
    %v3208 = vpop.f32.mrf.mxu0
    %3209 = vmatprep.mubr.bf16.mxu0 0
    %3210 = vmatmul.mubr.bf16.gmra.mxu0 %v1586
    %v3211 = vpop.f32.mrf.mxu0
    %v3212 = vadd.f32 0.0, %v3211
    %v3213 = vpop.f32.mrf.mxu0
    %v3214 = vpop.f32.mrf.mxu0
    %v3215 = vadd.f32 0.0, %v3214
    %v3216 = vpop.f32.mrf.mxu0
    %3217 = vmatprep.mubr.bf16.mxu0 0
    %3218 = vmatmul.mubr.bf16.gmra.mxu0 %v1589
    %v3219 = vpop.f32.mrf.mxu0
    %v3220 = vadd.f32 0.0, %v3219
    %v3221 = vpop.f32.mrf.mxu0
    %v3222 = vpop.f32.mrf.mxu0
    %v3223 = vadd.f32 0.0, %v3222
    %v3224 = vpop.f32.mrf.mxu0
    %3225 = vdwg.mxu0
    %v3226 = vadd.f32 %v3111, %v3164
    %v3227 = vadd.f32 %v3112, %v3167
    %v3228 = vadd.f32 %v3113, %v3172
    %v3229 = vadd.f32 %v3114, %v3175
    %v3230 = vadd.f32 %v3115, %v3180
    %v3231 = vadd.f32 %v3116, %v3183
    %v3232 = vadd.f32 %v3117, %v3188
    %v3233 = vadd.f32 %v3118, %v3191
    %v3234 = vadd.f32 %v3119, %v3196
    %v3235 = vadd.f32 %v3120, %v3199
    %v3236 = vadd.f32 %v3121, %v3204
    %v3237 = vadd.f32 %v3122, %v3207
    %v3238 = vadd.f32 %v3123, %v3212
    %v3239 = vadd.f32 %v3124, %v3215
    %v3240 = vadd.f32 %v3125, %v3220
    %v3241 = vadd.f32 %v3126, %v3223
    %v3242 = vadd.f32 %v3226, %v1707
    %v3243 = vadd.f32 %v3227, %v1712
    %v3244 = vadd.f32 %v3228, %v1717
    %v3245 = vadd.f32 %v3229, %v1722
    %v3246 = vadd.f32 %v3230, %v1727
    %v3247 = vadd.f32 %v3231, %v1732
    %v3248 = vadd.f32 %v3232, %v1737
    %v3249 = vadd.f32 %v3233, %v1742
    %v3250 = vadd.f32 %v3234, %v1747
    %v3251 = vadd.f32 %v3235, %v1752
    %v3252 = vadd.f32 %v3236, %v1757
    %v3253 = vadd.f32 %v3237, %v1762
    %v3254 = vadd.f32 %v3238, %v1767
    %v3255 = vadd.f32 %v3239, %v1772
    %v3256 = vadd.f32 %v3240, %v1777
    %v3257 = vadd.f32 %v3241, %v1782
    %v3258 = vxor.u32 %v3242, 2147483648
    %v3259 = vxor.u32 %v3243, 2147483648
    %v3260 = vmul.f32 %v3258, 1.442695
    %v3261 = vpow.pop %v3260
    %v3262 = vmul.f32 %v3259, 1.442695
    %v3263 = vpow.pop %v3262
    %v3264 = vadd.f32 %v3261, 1.0
    %v3265 = vadd.f32 %v3263, 1.0
    %v3266 = vrcp.pop %v3264
    %v3267 = vmul.f32 1.0, %v3266
    %v3268 = vrcp.pop %v3265
    %v3269 = vmul.f32 1.0, %v3268
    %v3270 = vxor.u32 %v3244, 2147483648
    %v3271 = vxor.u32 %v3245, 2147483648
    %v3272 = vmul.f32 %v3270, 1.442695
    %v3273 = vpow.pop %v3272
    %v3274 = vmul.f32 %v3271, 1.442695
    %v3275 = vpow.pop %v3274
    %v3276 = vadd.f32 %v3273, 1.0
    %v3277 = vadd.f32 %v3275, 1.0
    %v3278 = vrcp.pop %v3276
    %v3279 = vmul.f32 1.0, %v3278
    %v3280 = vrcp.pop %v3277
    %v3281 = vmul.f32 1.0, %v3280
    %v3282 = vtanh.pop %v3246
    %v3283 = vtanh.pop %v3247
    %v3284 = vxor.u32 %v3248, 2147483648
    %v3285 = vxor.u32 %v3249, 2147483648
    %v3286 = vmul.f32 %v3284, 1.442695
    %v3287 = vpow.pop %v3286
    %v3288 = vmul.f32 %v3285, 1.442695
    %v3289 = vpow.pop %v3288
    %v3290 = vadd.f32 %v3287, 1.0
    %v3291 = vadd.f32 %v3289, 1.0
    %v3292 = vrcp.pop %v3290
    %v3293 = vmul.f32 1.0, %v3292
    %v3294 = vrcp.pop %v3291
    %v3295 = vmul.f32 1.0, %v3294
    %v3296 = vxor.u32 %v3250, 2147483648
    %v3297 = vxor.u32 %v3251, 2147483648
    %v3298 = vmul.f32 %v3296, 1.442695
    %v3299 = vpow.pop %v3298
    %v3300 = vmul.f32 %v3297, 1.442695
    %v3301 = vpow.pop %v3300
    %v3302 = vadd.f32 %v3299, 1.0
    %v3303 = vadd.f32 %v3301, 1.0
    %v3304 = vrcp.pop %v3302
    %v3305 = vmul.f32 1.0, %v3304
    %v3306 = vrcp.pop %v3303
    %v3307 = vmul.f32 1.0, %v3306
    %v3308 = vxor.u32 %v3252, 2147483648
    %v3309 = vxor.u32 %v3253, 2147483648
    %v3310 = vmul.f32 %v3308, 1.442695
    %v3311 = vpow.pop %v3310
    %v3312 = vmul.f32 %v3309, 1.442695
    %v3313 = vpow.pop %v3312
    %v3314 = vadd.f32 %v3311, 1.0
    %v3315 = vadd.f32 %v3313, 1.0
    %v3316 = vrcp.pop %v3314
    %v3317 = vmul.f32 1.0, %v3316
    %v3318 = vrcp.pop %v3315
    %v3319 = vmul.f32 1.0, %v3318
    %v3320 = vtanh.pop %v3254
    %v3321 = vtanh.pop %v3255
    %v3322 = vxor.u32 %v3256, 2147483648
    %v3323 = vxor.u32 %v3257, 2147483648
    %v3324 = vmul.f32 %v3322, 1.442695
    %v3325 = vpow.pop %v3324
    %v3326 = vmul.f32 %v3323, 1.442695
    %v3327 = vpow.pop %v3326
    %v3328 = vadd.f32 %v3325, 1.0
    %v3329 = vadd.f32 %v3327, 1.0
    %v3330 = vrcp.pop %v3328
    %v3331 = vmul.f32 1.0, %v3330
    %v3332 = vrcp.pop %v3329
    %v3333 = vmul.f32 1.0, %v3332
    %v3334 = vmul.f32 %v3279, %v3095
    %v3335 = vmul.f32 %v3281, %v3096
    %v3336 = vmul.f32 %v3267, %v3282
    %v3337 = vmul.f32 %v3269, %v3283
    %v3338 = vadd.f32 %v3334, %v3336
    %v3339 = vadd.f32 %v3335, %v3337
    %v3340 = vmul.f32 %v3317, %v3101
    %v3341 = vmul.f32 %v3319, %v3102
    %v3342 = vmul.f32 %v3305, %v3320
    %v3343 = vmul.f32 %v3307, %v3321
    %v3344 = vadd.f32 %v3340, %v3342
    %v3345 = vadd.f32 %v3341, %v3343
    %v3346 = vtanh.pop %v3338
    %v3347 = vtanh.pop %v3339
    %v3348 = vmul.f32 %v3293, %v3346
    %v3349 = vmul.f32 %v3295, %v3347
    %v3350 = vtanh.pop %v3344
    %v3351 = vtanh.pop %v3345
    %v3352 = vmul.f32 %v3331, %v3350
    %v3353 = vmul.f32 %v3333, %v3351
    %v3354 = vld [vmem:[%s5] sm:$0xf]
    %v3355 = vld [vmem:[%s5 + $0x4] sm:$0xf]
    %v3356 = vld [vmem:[%s5 + $0x8] sm:$0xf]
    %v3357 = vld [vmem:[%s5 + $0xc] sm:$0xf]
    %v3358 = vld [vmem:[%s0] sm:$0xf]
    %v3359 = vld [vmem:[%s0 + $0x4] sm:$0xf]
    %v3360 = vld [vmem:[%s0 + $0x8] sm:$0xf]
    %v3361 = vld [vmem:[%s0 + $0xc] sm:$0xf]
    %v3362 = vld [vmem:[%s0 + $0x10] sm:$0xf]
    %v3363 = vld [vmem:[%s0 + $0x14] sm:$0xf]
    %v3364 = vld [vmem:[%s0 + $0x18] sm:$0xf]
    %v3365 = vld [vmem:[%s0 + $0x1c] sm:$0xf]
    %v3366 = vld [vmem:[%s0 + $0x20] sm:$0xf]
    %v3367 = vld [vmem:[%s0 + $0x24] sm:$0xf]
    %v3368 = vld [vmem:[%s0 + $0x28] sm:$0xf]
    %v3369 = vld [vmem:[%s0 + $0x2c] sm:$0xf]
    %v3370 = vld [vmem:[%s0 + $0x30] sm:$0xf]
    %v3371 = vld [vmem:[%s0 + $0x34] sm:$0xf]
    %v3372 = vld [vmem:[%s0 + $0x38] sm:$0xf]
    %v3373 = vld [vmem:[%s0 + $0x3c] sm:$0xf]
    %v3374 = vld [vmem:[%s6] sm:$0xf]
    %v3375 = vld [vmem:[%s6 + $0x4] sm:$0xf]
    %v3376 = vld [vmem:[%s6 + $0x8] sm:$0xf]
    %v3377 = vld [vmem:[%s6 + $0xc] sm:$0xf]
    %v3378 = vpack.c.bf16 %v3349, %v3348
    %v3383 = vunpack.c.l.b16 %v3374
    %v3384 = vunpack.c.l.b16 %v3375
    %v3385 = vunpack.c.l.b16 %v3376
    %v3386 = vunpack.c.l.b16 %v3377
    %v3387 = vpack.c.b16 %v3384, %v3383
    %v3388 = vpack.c.b16 %v3386, %v3385
    %v3390 = vsel %vm178, %v3387, 0
    %v3393 = vsel %vm178, %v3388, 0
    %3395 = vmatprep.subr.bf16.mxu0 0
    %3396 = vmatpush1.bf16.msra.mxu0 0
    %3397 = vmatprep.subr.bf16.mxu0 0
    %3398 = vmatpush1.bf16.msra.mxu0 0
    %3399 = vmatprep.subr.bf16.mxu0 0
    %3400 = vmatpush1.bf16.msra.mxu0 0
    %3401 = vmatprep.subr.bf16.mxu0 0
    %3402 = vmatpush1.bf16.msra.mxu0 0
    %3403 = vmatprep.subr.bf16.mxu0 0
    %3404 = vmatpush1.bf16.msra.mxu0 0
    %3405 = vmatprep.subr.bf16.mxu0 0
    %3406 = vmatpush1.bf16.msra.mxu0 0
    %3407 = vmatprep.subr.bf16.mxu0 0
    %3408 = vmatpush1.bf16.msra.mxu0 0
    %3409 = vmatprep.subr.bf16.mxu0 0
    %3410 = vmatpush1.bf16.msra.mxu0 %v3378
    %3411 = vmatprep.subr.bf16.mxu0 0
    %3412 = vmatpush2.bf16.msra.mxu0 0
    %3413 = vmatprep.subr.bf16.mxu0 0
    %3414 = vmatpush2.bf16.msra.mxu0 0
    %3415 = vmatprep.subr.bf16.mxu0 0
    %3416 = vmatpush2.bf16.msra.mxu0 0
    %3417 = vmatprep.subr.bf16.mxu0 0
    %3418 = vmatpush2.bf16.msra.mxu0 0
    %3419 = vmatprep.subr.bf16.mxu0 0
    %3420 = vmatpush2.bf16.msra.mxu0 0
    %3421 = vmatprep.subr.bf16.mxu0 0
    %3422 = vmatpush2.bf16.msra.mxu0 0
    %3423 = vmatprep.subr.bf16.mxu0 0
    %3424 = vmatpush2.bf16.msra.mxu0 0
    %3425 = vmatprep.subr.bf16.mxu0 0
    %3426 = vmatpush2.bf16.msra.mxu0 0
    %3427 = vmatprep.mubr.bf16.mxu0 0
    %3428 = vmatmul.mubr.bf16.gmra.mxu0 %v3390
    %v3429 = vpop.f32.mrf.mxu0
    %v3430 = vadd.f32 0.0, %v3429
    %v3431 = vpop.f32.mrf.mxu0
    %v3432 = vpop.f32.mrf.mxu0
    %v3433 = vadd.f32 0.0, %v3432
    %v3434 = vpop.f32.mrf.mxu0
    %3435 = vmatprep.mubr.bf16.mxu0 0
    %3436 = vmatmul.mubr.bf16.gmra.mxu0 %v3393
    %v3437 = vpop.f32.mrf.mxu0
    %v3438 = vadd.f32 0.0, %v3437
    %v3439 = vpop.f32.mrf.mxu0
    %v3440 = vpop.f32.mrf.mxu0
    %v3441 = vadd.f32 0.0, %v3440
    %v3442 = vpop.f32.mrf.mxu0
    %3443 = vdwg.mxu0
    %v3448 = vunpack.c.l.b16 %v3354
    %v3449 = vunpack.c.l.b16 %v3355
    %v3450 = vunpack.c.l.b16 %v3356
    %v3451 = vunpack.c.l.b16 %v3357
    %v3452 = vpack.c.b16 %v3449, %v3448
    %v3453 = vpack.c.b16 %v3451, %v3450
    %v3470 = vunpack.c.l.b16 %v3358
    %v3471 = vunpack.c.l.b16 %v3359
    %v3472 = vunpack.c.l.b16 %v3360
    %v3473 = vunpack.c.l.b16 %v3361
    %v3474 = vunpack.c.l.b16 %v3362
    %v3475 = vunpack.c.l.b16 %v3363
    %v3476 = vunpack.c.l.b16 %v3364
    %v3477 = vunpack.c.l.b16 %v3365
    %v3478 = vunpack.c.l.b16 %v3366
    %v3479 = vunpack.c.l.b16 %v3367
    %v3480 = vunpack.c.l.b16 %v3368
    %v3481 = vunpack.c.l.b16 %v3369
    %v3482 = vunpack.c.l.b16 %v3370
    %v3483 = vunpack.c.l.b16 %v3371
    %v3484 = vunpack.c.l.b16 %v3372
    %v3485 = vunpack.c.l.b16 %v3373
    %v3486 = vpack.c.b16 %v3471, %v3470
    %v3487 = vpack.c.b16 %v3473, %v3472
    %v3488 = vpack.c.b16 %v3475, %v3474
    %v3489 = vpack.c.b16 %v3477, %v3476
    %v3490 = vpack.c.b16 %v3479, %v3478
    %v3491 = vpack.c.b16 %v3481, %v3480
    %v3492 = vpack.c.b16 %v3483, %v3482
    %v3493 = vpack.c.b16 %v3485, %v3484
    %v3495 = vsel %vm178, %v3452, 0
    %v3498 = vsel %vm178, %v3453, 0
    %v3501 = vsel %vm178, %v3486, 0
    %v3504 = vsel %vm178, %v3487, 0
    %v3507 = vsel %vm178, %v3488, 0
    %v3510 = vsel %vm178, %v3489, 0
    %v3513 = vsel %vm178, %v3490, 0
    %v3516 = vsel %vm178, %v3491, 0
    %v3519 = vsel %vm178, %v3492, 0
    %v3522 = vsel %vm178, %v3493, 0
    %3524 = vmatprep.subr.bf16.mxu0 0
    %3525 = vmatpush1.bf16.xpose.msra.mxu0 %v3522
    %3526 = vmatprep.subr.bf16.mxu0 0
    %3527 = vmatpush1.bf16.xpose.msra.mxu0 %v3519
    %3528 = vmatprep.subr.bf16.mxu0 0
    %3529 = vmatpush1.bf16.xpose.msra.mxu0 %v3516
    %3530 = vmatprep.subr.bf16.mxu0 0
    %3531 = vmatpush1.bf16.xpose.msra.mxu0 %v3513
    %3532 = vmatprep.subr.bf16.mxu0 0
    %3533 = vmatpush1.bf16.xpose.msra.mxu0 %v3510
    %3534 = vmatprep.subr.bf16.mxu0 0
    %3535 = vmatpush1.bf16.xpose.msra.mxu0 %v3507
    %3536 = vmatprep.subr.bf16.mxu0 0
    %3537 = vmatpush1.bf16.xpose.msra.mxu0 %v3504
    %3538 = vmatprep.subr.bf16.mxu0 0
    %3539 = vmatpush1.bf16.xpose.msra.mxu0 %v3501
    %3540 = vmatprep.subr.bf16.mxu0 0
    %3541 = vmatpush2.bf16.xpose.msra.mxu0 0
    %3542 = vmatprep.subr.bf16.mxu0 0
    %3543 = vmatpush2.bf16.xpose.msra.mxu0 0
    %3544 = vmatprep.subr.bf16.mxu0 0
    %3545 = vmatpush2.bf16.xpose.msra.mxu0 0
    %3546 = vmatprep.subr.bf16.mxu0 0
    %3547 = vmatpush2.bf16.xpose.msra.mxu0 0
    %3548 = vmatprep.subr.bf16.mxu0 0
    %3549 = vmatpush2.bf16.xpose.msra.mxu0 0
    %3550 = vmatprep.subr.bf16.mxu0 0
    %3551 = vmatpush2.bf16.xpose.msra.mxu0 0
    %3552 = vmatprep.subr.bf16.mxu0 0
    %3553 = vmatpush2.bf16.xpose.msra.mxu0 0
    %3554 = vmatprep.subr.bf16.mxu0 0
    %3555 = vmatpush2.bf16.xpose.msra.mxu0 0
    %3556 = vmatprep.mubr.bf16.mxu0 0
    %3557 = vmatmul.mubr.bf16.gmra.mxu0 %v3495
    %v3558 = vpop.f32.mrf.mxu0
    %v3559 = vadd.f32 %v3430, %v3558
    %v3560 = vpop.f32.mrf.mxu0
    %v3561 = vpop.f32.mrf.mxu0
    %v3562 = vadd.f32 %v3433, %v3561
    %v3563 = vpop.f32.mrf.mxu0
    %3564 = vmatprep.mubr.bf16.mxu0 0
    %3565 = vmatmul.mubr.bf16.gmra.mxu0 %v3498
    %v3566 = vpop.f32.mrf.mxu0
    %v3567 = vadd.f32 %v3438, %v3566
    %v3568 = vpop.f32.mrf.mxu0
    %v3569 = vpop.f32.mrf.mxu0
    %v3570 = vadd.f32 %v3441, %v3569
    %v3571 = vpop.f32.mrf.mxu0
    %3572 = vdwg.mxu0
    %v3573 = vld [vmem:[%s7] sm:$0xf]
    %v3574 = vld [vmem:[%s7 + $0x4] sm:$0xf]
    %v3575 = vld [vmem:[%s7 + $0x8] sm:$0xf]
    %v3576 = vld [vmem:[%s7 + $0xc] sm:$0xf]
    %v3577 = vpack.c.bf16 %v3353, %v3352
    %v3582 = vunpack.c.l.b16 %v3573
    %v3583 = vunpack.c.l.b16 %v3574
    %v3584 = vunpack.c.l.b16 %v3575
    %v3585 = vunpack.c.l.b16 %v3576
    %v3586 = vpack.c.b16 %v3583, %v3582
    %v3587 = vpack.c.b16 %v3585, %v3584
    %v3589 = vsel %vm178, %v3586, 0
    %v3592 = vsel %vm178, %v3587, 0
    %3594 = vmatprep.subr.bf16.mxu0 0
    %3595 = vmatpush1.bf16.msra.mxu0 0
    %3596 = vmatprep.subr.bf16.mxu0 0
    %3597 = vmatpush1.bf16.msra.mxu0 0
    %3598 = vmatprep.subr.bf16.mxu0 0
    %3599 = vmatpush1.bf16.msra.mxu0 0
    %3600 = vmatprep.subr.bf16.mxu0 0
    %3601 = vmatpush1.bf16.msra.mxu0 0
    %3602 = vmatprep.subr.bf16.mxu0 0
    %3603 = vmatpush1.bf16.msra.mxu0 0
    %3604 = vmatprep.subr.bf16.mxu0 0
    %3605 = vmatpush1.bf16.msra.mxu0 0
    %3606 = vmatprep.subr.bf16.mxu0 0
    %3607 = vmatpush1.bf16.msra.mxu0 0
    %3608 = vmatprep.subr.bf16.mxu0 0
    %3609 = vmatpush1.bf16.msra.mxu0 %v3577
    %3610 = vmatprep.subr.bf16.mxu0 0
    %3611 = vmatpush2.bf16.msra.mxu0 0
    %3612 = vmatprep.subr.bf16.mxu0 0
    %3613 = vmatpush2.bf16.msra.mxu0 0
    %3614 = vmatprep.subr.bf16.mxu0 0
    %3615 = vmatpush2.bf16.msra.mxu0 0
    %3616 = vmatprep.subr.bf16.mxu0 0
    %3617 = vmatpush2.bf16.msra.mxu0 0
    %3618 = vmatprep.subr.bf16.mxu0 0
    %3619 = vmatpush2.bf16.msra.mxu0 0
    %3620 = vmatprep.subr.bf16.mxu0 0
    %3621 = vmatpush2.bf16.msra.mxu0 0
    %3622 = vmatprep.subr.bf16.mxu0 0
    %3623 = vmatpush2.bf16.msra.mxu0 0
    %3624 = vmatprep.subr.bf16.mxu0 0
    %3625 = vmatpush2.bf16.msra.mxu0 0
    %3626 = vmatprep.mubr.bf16.mxu0 0
    %3627 = vmatmul.mubr.bf16.gmra.mxu0 %v3589
    %v3628 = vpop.f32.mrf.mxu0
    %v3629 = vadd.f32 0.0, %v3628
    %v3630 = vpop.f32.mrf.mxu0
    %v3631 = vpop.f32.mrf.mxu0
    %v3632 = vadd.f32 0.0, %v3631
    %v3633 = vpop.f32.mrf.mxu0
    %3634 = vmatprep.mubr.bf16.mxu0 0
    %3635 = vmatmul.mubr.bf16.gmra.mxu0 %v3592
    %v3636 = vpop.f32.mrf.mxu0
    %v3637 = vadd.f32 0.0, %v3636
    %v3638 = vpop.f32.mrf.mxu0
    %v3639 = vpop.f32.mrf.mxu0
    %v3640 = vadd.f32 0.0, %v3639
    %v3641 = vpop.f32.mrf.mxu0
    %3642 = vdwg.mxu0
    %v3643 = vadd.f32 %v3559, %v3629
    %v3644 = vadd.f32 %v3562, %v3632
    %v3645 = vadd.f32 %v3567, %v3637
    %v3646 = vadd.f32 %v3570, %v3640
    %v3647 = vld [vmem:[%s8] sm:$0xff]
    %v3648 = vld [vmem:[%s8 + $0x8] sm:$0xff]
    %v3649 = vld [vmem:[%s8 + $0x10] sm:$0xff]
    %v3650 = vld [vmem:[%s8 + $0x18] sm:$0xff]
    %3652 = vset.pattern.permute.xlu0 0
    %3653 = vperm.xlu0 %3652, %v3647
    %v3654 = vpop.permute.xlu0 %3653
    %3657 = vset.pattern.permute.xlu0 0
    %3658 = vperm.xlu0 %3657, %v3648
    %v3659 = vpop.permute.xlu0 %3658
    %3662 = vset.pattern.permute.xlu0 0
    %3663 = vperm.xlu0 %3662, %v3649
    %v3664 = vpop.permute.xlu0 %3663
    %3667 = vset.pattern.permute.xlu0 0
    %3668 = vperm.xlu0 %3667, %v3650
    %v3669 = vpop.permute.xlu0 %3668
    %v3671 = vadd.f32 %v3643, %v3654
    %v3672 = vadd.f32 %v3644, %v3659
    %v3673 = vadd.f32 %v3645, %v3664
    %v3674 = vadd.f32 %v3646, %v3669
    %3675 = vst [vmem:[#allocation3] sm:$0xff] %v3671
    %3676 = vst [vmem:[#allocation3 + $0x8] sm:$0xff] %v3672
    %3677 = vst [vmem:[#allocation3 + $0x10] sm:$0xff] %v3673
    %3678 = vst [vmem:[#allocation3 + $0x18] sm:$0xff] %v3674
    // Predicated region
    $region38: #{tpu_custom_call.1} parent=1 // pred_check
      _
    $region39: #{tpu_custom_call.1} parent=1 // pred_check_branch
      %3680 = sbr.rel (0) target = $region41
    $region40: #{tpu_custom_call.1} parent=1 // pred_region
      %s3682 = ssub.s32 512, 512
      %3683 = vsyncadd [#allocation4], %s3682
      %s3684 = sshll.u32 [#allocation3], 4
      %s3685 = int_to_ptr.vmem [resolvable:$true] %s3684
      %3690 = dma.vmem_to_hbm [thread:$0]  %s3685, 512, %s9, [#allocation4], 128, 128, 8
    $region41: #{tpu_custom_call.1} parent=1 // pred_fallthru
      _
    // Predicated region
    $region42: #{tpu_custom_call.1} parent=1 // pred_check
      _
    $region43: #{tpu_custom_call.1} parent=1 // pred_check_branch
      %3692 = sbr.rel (0) target = $region45
    $region44: #{tpu_custom_call.1} parent=1 // pred_region
      %3693 = dma.done [#allocation4], 512
    $region45: #{tpu_custom_call.1} parent=1 // pred_fallthru
      _
    %3694 = vsyncpa [#allocation4], 1

</llo_original>
